<compile_context>
chip_gen: v6e
topology: v6e:2x2x1
jax: 0.10.0
libtpu: 0.0.40
codegen_flags: <defaults>
</compile_context>

<pallas_src>
import functools
import math

import jax
import jax.numpy as jnp
from jax.experimental import pallas as pl
from jax.experimental.pallas import tpu as pltpu

_VMEM_LIMIT = 32 * 1024 * 1024


# ----------------------------------------------------------------------------
# Small helpers
# ----------------------------------------------------------------------------
def _round_up(x, m):
    return (x + m - 1) // m * m


def _fold_bn(bn, eps=1e-5):
    scale = bn["gamma"] / jnp.sqrt(bn["var"] + eps)
    bias = bn["beta"] - bn["mean"] * scale
    return scale.astype(jnp.float32), bias.astype(jnp.float32)


def _pick_m_tiling(m, max_tile=512):
    """Pick an M tile (multiple of 8); prefer >=2 grid blocks (v7x megacore)."""
    tm = min(max_tile, _round_up(m, 8))
    m_pad = _round_up(m, tm)
    if m_pad // tm < 2 and m_pad > 8:
        tm = _round_up(m_pad // 2, 8)
        m_pad = _round_up(m, tm)
    return tm, m_pad


# ----------------------------------------------------------------------------
# Pallas kernels
# ----------------------------------------------------------------------------
def _pw_kernel(x_ref, w_ref, s_ref, b_ref, o_ref, *, relu6):
    """1x1 conv (single-pass matmul, whole weight resident) + folded BN (+ReLU6)."""
    out = jnp.dot(x_ref[...], w_ref[...], preferred_element_type=jnp.float32)
    out = out * s_ref[...] + b_ref[...]
    if relu6:
        out = jnp.minimum(jnp.maximum(out, 0.0), 6.0)
    o_ref[...] = out.astype(o_ref.dtype)


def _pw_res_kernel(x_ref, w_ref, s_ref, b_ref, r_ref, o_ref, *, relu6):
    """1x1 conv + folded BN + residual add (residual streamed as bf16, added f32)."""
    out = jnp.dot(x_ref[...], w_ref[...], preferred_element_type=jnp.float32)
    out = out * s_ref[...] + b_ref[...] + r_ref[...].astype(jnp.float32)
    if relu6:
        out = jnp.minimum(jnp.maximum(out, 0.0), 6.0)
    o_ref[...] = out.astype(o_ref.dtype)


def _dw_kernel(x_ref, w_ref, s_ref, b_ref, o_ref, *, hout, wout, roffs, coffs):
    """Depthwise 3x3 conv + folded BN + ReLU6.

    Stride is already folded into the static tap offsets (roffs/coffs), so every
    tap is a contiguous slice.  The three column-shifted views are hoisted and
    each reused for three row taps; the MAC is bf16*bf16 accumulated in f32.

    x_ref: (1, H_in, W_in, tc) zero-padded (and phase-reordered for stride 2)
    w_ref: (9, tc) per-channel taps (bf16)
    o_ref: (1, hout, wout, tc)
    """
    xv = x_ref[0]                      # (H_in, W_in, C) bf16
    wv = w_ref[...]                    # (9, C) bf16
    cols = [xv[:, co:co + wout, :] for co in coffs]
    acc = jnp.zeros((hout, wout, xv.shape[-1]), jnp.float32)
    for i in range(3):
        ro = roffs[i]
        for j in range(3):
            tap = cols[j][ro:ro + hout]
            acc = acc + (tap * wv[3 * i + j]).astype(jnp.float32)
    out = acc * s_ref[0] + b_ref[0]
    out = jnp.minimum(jnp.maximum(out, 0.0), 6.0)
    o_ref[0] = out.astype(o_ref.dtype)


# ----------------------------------------------------------------------------
# Kernel wrappers (all take / return channel-padded bf16 NHWC)
# ----------------------------------------------------------------------------
def _pointwise_conv_bn(x_nhwc, w, bn, *, relu6, residual=None,
                       out_dtype=jnp.bfloat16, tile_m=512):
    """1x1 conv (PyTorch weight (Cout,Cin,1,1)) + BN (+res, +ReLU6).

    x_nhwc: (N,H,W,Kpad) bf16 with Kpad a multiple of 128 and channels >= Cin zero.
    Returns (N,H,W,Npad), Npad = round_up(Cout,128); padded channels are zero.
    """
    n, h, wd, k_pad = x_nhwc.shape
    cout, cin = w.shape[0], w.shape[1]
    n_pad = _round_up(cout, 128)
    m = n * h * wd
    tm, m_pad = _pick_m_tiling(m, tile_m)

    x2 = x_nhwc.reshape(m, k_pad).astype(jnp.bfloat16)
    if m_pad > m:
        x2 = jnp.pad(x2, ((0, m_pad - m), (0, 0)))

    wmat = jnp.transpose(w.reshape(cout, cin), (1, 0)).astype(jnp.bfloat16)
    wmat = jnp.pad(wmat, ((0, k_pad - cin), (0, n_pad - cout)))

    scale, bias = _fold_bn(bn)
    scale2 = jnp.pad(scale.reshape(1, cout), ((0, 0), (0, n_pad - cout)))
    bias2 = jnp.pad(bias.reshape(1, cout), ((0, 0), (0, n_pad - cout)))

    grid = (m_pad // tm,)
    in_specs = [
        pl.BlockSpec((tm, k_pad), lambda i: (i, 0)),
        pl.BlockSpec((k_pad, n_pad), lambda i: (0, 0)),   # whole weight resident
        pl.BlockSpec((1, n_pad), lambda i: (0, 0)),
        pl.BlockSpec((1, n_pad), lambda i: (0, 0)),
    ]
    args = [x2, wmat, scale2, bias2]
    res_bytes = 0
    if residual is not None:
        assert residual.shape[:3] == (n, h, wd) and residual.shape[-1] == n_pad
        r2 = residual.reshape(m, n_pad).astype(jnp.bfloat16)
        if m_pad > m:
            r2 = jnp.pad(r2, ((0, m_pad - m), (0, 0)))
        in_specs.append(pl.BlockSpec((tm, n_pad), lambda i: (i, 0)))
        args.append(r2)
        res_bytes = m_pad * n_pad * 2
        kernel = functools.partial(_pw_res_kernel, relu6=relu6)
    else:
        kernel = functools.partial(_pw_kernel, relu6=relu6)

    out_itemsize = jnp.dtype(out_dtype).itemsize
    cost = pl.CostEstimate(
        flops=2 * m_pad * n_pad * k_pad,
        transcendentals=0,
        bytes_accessed=(m_pad * k_pad * 2 + k_pad * n_pad * 2 + 2 * n_pad * 4
                        + res_bytes + m_pad * n_pad * out_itemsize),
    )

    out = pl.pallas_call(
        kernel,
        out_shape=jax.ShapeDtypeStruct((m_pad, n_pad), out_dtype),
        grid=grid,
        in_specs=in_specs,
        out_specs=pl.BlockSpec((tm, n_pad), lambda i: (i, 0)),
        compiler_params=pltpu.CompilerParams(
            dimension_semantics=("parallel",),
            vmem_limit_bytes=_VMEM_LIMIT),
        cost_estimate=cost,
    )(*args)

    if m_pad > m:
        out = out[:m]
    return out.reshape(n, h, wd, n_pad)


def _depthwise_conv_bn(x_nhwc, w, bn, *, stride, tile_c=128):
    """Depthwise 3x3 conv (PyTorch weight (C,1,3,3), pad=1, stride in {1,2})
    + BN + ReLU6 on channel-padded bf16 NHWC input.  Stride-2 is folded into the
    kernel via an even/odd row+column phase reorder of the padded input."""
    n, h, wd, c_pad = x_nhwc.shape
    c = w.shape[0]
    hout = (h - 1) // stride + 1
    wout = (wd - 1) // stride + 1

    xp = jnp.pad(x_nhwc.astype(jnp.bfloat16), ((0, 0), (1, 1), (1, 1), (0, 0)))
    if stride == 2:
        # Reorder rows/cols as [even | odd] so each stride-2 tap becomes a
        # contiguous slice inside the kernel (no strided in-kernel loads).
        xp = jnp.concatenate([xp[:, 0::2], xp[:, 1::2]], axis=1)
        xp = jnp.concatenate([xp[:, :, 0::2], xp[:, :, 1::2]], axis=2)
        roffs = (0, (h + 3) // 2, 1)   # (h+3)//2 even rows in padded input
        coffs = (0, (wd + 3) // 2, 1)
    else:
        roffs = (0, 1, 2)
        coffs = (0, 1, 2)

    wt = jnp.transpose(w.reshape(c, 3, 3), (1, 2, 0)).reshape(9, c)
    wt = jnp.pad(wt.astype(jnp.bfloat16), ((0, 0), (0, c_pad - c)))
    scale, bias = _fold_bn(bn)
    scale2 = jnp.pad(scale.reshape(1, c), ((0, 0), (0, c_pad - c)))
    bias2 = jnp.pad(bias.reshape(1, c), ((0, 0), (0, c_pad - c)))

    grid = (n, c_pad // tile_c)
    kernel = functools.partial(_dw_kernel, hout=hout, wout=wout,
                               roffs=roffs, coffs=coffs)
    cost = pl.CostEstimate(
        flops=2 * 9 * n * hout * wout * c_pad,
        transcendentals=0,
        bytes_accessed=(n * (h + 2) * (wd + 2) * c_pad * 2
                        + n * hout * wout * c_pad * 2
                        + 9 * c_pad * 2 + 2 * c_pad * 4),
    )

    return pl.pallas_call(
        kernel,
        out_shape=jax.ShapeDtypeStruct((n, hout, wout, c_pad), jnp.bfloat16),
        grid=grid,
        in_specs=[
            pl.BlockSpec((1, h + 2, wd + 2, tile_c), lambda b, cb: (b, 0, 0, cb)),
            pl.BlockSpec((9, tile_c), lambda b, cb: (0, cb)),
            pl.BlockSpec((1, tile_c), lambda b, cb: (0, cb)),
            pl.BlockSpec((1, tile_c), lambda b, cb: (0, cb)),
        ],
        out_specs=pl.BlockSpec((1, hout, wout, tile_c), lambda b, cb: (b, 0, 0, cb)),
        compiler_params=pltpu.CompilerParams(
            dimension_semantics=("parallel", "parallel"),
            vmem_limit_bytes=_VMEM_LIMIT),
        cost_estimate=cost,
    )(xp, wt, scale2, bias2)


# ----------------------------------------------------------------------------
# InvertedResidual forward (NCHW public interface, padded bf16 NHWC internally)
# ----------------------------------------------------------------------------
def inverted_residual_forward(x_nchw, p):
    n, cin, h, wd = x_nchw.shape
    cin_pad = _round_up(cin, 128)
    # Single entry-side transpose + channel pad; activations stay channel-padded
    # bf16 NHWC until the single exit-side slice + transpose.
    x = jnp.transpose(x_nchw, (0, 2, 3, 1)).astype(jnp.bfloat16)
    x = jnp.pad(x, ((0, 0), (0, 0), (0, 0), (0, cin_pad - cin)))

    hdn = x
    if p["expand_ratio"] != 1:
        hdn = _pointwise_conv_bn(hdn, p["w_expand"], p["bn_expand"],
                                 relu6=True, out_dtype=jnp.bfloat16)
    hdn = _depthwise_conv_bn(hdn, p["w_dw"], p["bn_dw"], stride=p["stride"])
    residual = x if p["use_res"] else None
    out = _pointwise_conv_bn(hdn, p["w_proj"], p["bn_proj"], relu6=False,
                             residual=residual, out_dtype=jnp.float32)
    out = out[..., :p["oup"]]
    return jnp.transpose(out, (0, 3, 1, 2))


# ----------------------------------------------------------------------------
# Pure-JAX reference (f32) for validation
# ----------------------------------------------------------------------------
def _ref_inverted_residual(x, p):
    def conv(z, w, stride=1, padding=0, groups=1):
        return jax.lax.conv_general_dilated(
            z, w, window_strides=(stride, stride),
            padding=((padding, padding), (padding, padding)),
            dimension_numbers=("NCHW", "OIHW", "NCHW"),
            feature_group_count=groups)

    def bn(z, b):
        s = b["gamma"] / jnp.sqrt(b["var"] + 1e-5)
        t = b["beta"] - b["mean"] * s
        return z * s[None, :, None, None] + t[None, :, None, None]

    def relu6(z):
        return jnp.clip(z, 0.0, 6.0)

    h = x
    if p["expand_ratio"] != 1:
        h = relu6(bn(conv(h, p["w_expand"]), p["bn_expand"]))
    h = relu6(bn(conv(h, p["w_dw"], stride=p["stride"], padding=1,
                      groups=p["hidden"]), p["bn_dw"]))
    h = bn(conv(h, p["w_proj"]), p["bn_proj"])
    if p["use_res"]:
        h = x + h
    return h


# ----------------------------------------------------------------------------
# Deterministic parameter construction (mirrors InvertedResidual.__init__)
# ----------------------------------------------------------------------------
def build_params(key, inp, oup, stride, expand_ratio):
    assert stride in (1, 2)
    hidden = int(inp * expand_ratio)
    keys = iter(jax.random.split(key, 64))

    def conv_w(cout, cin, k):
        fan_in = cin * k * k
        return (jax.random.normal(next(keys), (cout, cin, k, k), jnp.float32)
                * math.sqrt(2.0 / fan_in))

    def bn_p(cdim):
        return {
            "gamma": 1.0 + 0.1 * jax.random.normal(next(keys), (cdim,), jnp.float32),
            "beta": 0.1 * jax.random.normal(next(keys), (cdim,), jnp.float32),
            "mean": 0.1 * jax.random.normal(next(keys), (cdim,), jnp.float32),
            "var": jax.random.uniform(next(keys), (cdim,), jnp.float32,
                                      minval=0.5, maxval=1.5),
        }

    p = {
        "inp": inp, "oup": oup, "stride": stride, "expand_ratio": expand_ratio,
        "hidden": hidden, "use_res": (stride == 1 and inp == oup),
    }
    if expand_ratio != 1:
        p["w_expand"] = conv_w(hidden, inp, 1)
        p["bn_expand"] = bn_p(hidden)
    p["w_dw"] = (jax.random.normal(next(keys), (hidden, 1, 3, 3), jnp.float32)
                 * math.sqrt(2.0 / 9.0))
    p["bn_dw"] = bn_p(hidden)
    p["w_proj"] = conv_w(oup, hidden, 1)
    p["bn_proj"] = bn_p(oup)
    return p


# ----------------------------------------------------------------------------
# Demo
# ----------------------------------------------------------------------------
if __name__ == "__main__":
    key = jax.random.PRNGKey(0)
    configs = [
        dict(inp=32, oup=32, stride=1, expand_ratio=6),   # residual path
        dict(inp=32, oup=64, stride=2, expand_ratio=6),   # stride-2, no residual
        dict(inp=32, oup=32, stride=1, expand_ratio=1),   # no expansion conv
    ]
    for cfg in configs:
        key, kp, kx = jax.random.split(key, 3)
        params = build_params(kp, **cfg)
        x = jax.random.normal(kx, (2, cfg["inp"], 16, 16), jnp.float32)

        fwd = jax.jit(lambda xx, p=params: inverted_residual_forward(xx, p))
        out = jax.block_until_ready(fwd(x))

        ho = 16 if cfg["stride"] == 1 else 8
        assert out.shape == (2, cfg["oup"], ho, ho), out.shape
        assert bool(jnp.all(jnp.isfinite(out)))

        ref = _ref_inverted_residual(x, params)
        err = float(jnp.max(jnp.abs(out - ref)))
        scale = float(jnp.max(jnp.abs(ref))) + 1e-6
        assert err / scale < 0.08, (cfg, err, scale)

    print("KERNEL_OK")
</pallas_src>

<mosaic_0001>
module attributes {stable_mosaic.version = 11 : i64} {
  func.func @_pw_kernel(%arg0: i32, %arg1: memref<256x128xbf16, #tpu.memory_space<vmem>>, %arg2: memref<128x256xbf16, #tpu.memory_space<vmem>>, %arg3: memref<1x256xf32, #tpu.memory_space<vmem>>, %arg4: memref<1x256xf32, #tpu.memory_space<vmem>>, %arg5: memref<256x256xbf16, #tpu.memory_space<vmem>>) attributes {dimension_semantics = [#tpu.dimension_semantics<parallel>], iteration_bounds = array<i64: 2>, scalar_prefetch = 0 : i64, scratch_operands = 0 : i64, tpu.core_type = #tpu.core_type<tc>, window_params = [{transform_indices = @transform_0, window_bounds = array<i64: 256, 128>}, {pipeline_mode = #tpu.pipeline_mode<synchronous>, transform_indices = @transform_1, window_bounds = array<i64: 128, 256>}, {pipeline_mode = #tpu.pipeline_mode<synchronous>, transform_indices = @transform_2, window_bounds = array<i64: 1, 256>}, {pipeline_mode = #tpu.pipeline_mode<synchronous>, transform_indices = @transform_3, window_bounds = array<i64: 1, 256>}, {transform_indices = @transform_4, window_bounds = array<i64: 256, 256>}]} {
    %c0 = arith.constant 0 : index
    %c0_0 = arith.constant 0 : index
    %0 = vector.load %arg1[%c0, %c0_0] : memref<256x128xbf16, #tpu.memory_space<vmem>>, vector<256x128xbf16>
    %c0_1 = arith.constant 0 : index
    %c0_2 = arith.constant 0 : index
    %1 = vector.load %arg2[%c0_1, %c0_2] : memref<128x256xbf16, #tpu.memory_space<vmem>>, vector<128x256xbf16>
    %cst = arith.constant dense<0.000000e+00> : vector<256x256xf32>
    %2 = tpu.matmul %0, %1, %cst {dimension_numbers = #tpu.dot_dimension_numbers<[1], [0], [0], [1], [0, 0, 1, 1], [], []>} : vector<256x128xbf16>, vector<128x256xbf16>, vector<256x256xf32> -> vector<256x256xf32>
    %c0_3 = arith.constant 0 : index
    %c0_4 = arith.constant 0 : index
    %3 = vector.load %arg3[%c0_3, %c0_4] : memref<1x256xf32, #tpu.memory_space<vmem>>, vector<1x256xf32>
    %4 = vector.broadcast %3 : vector<1x256xf32> to vector<256x256xf32>
    %5 = arith.mulf %2, %4 : vector<256x256xf32>
    %c0_5 = arith.constant 0 : index
    %c0_6 = arith.constant 0 : index
    %6 = vector.load %arg4[%c0_5, %c0_6] : memref<1x256xf32, #tpu.memory_space<vmem>>, vector<1x256xf32>
    %7 = vector.broadcast %6 : vector<1x256xf32> to vector<256x256xf32>
    %8 = arith.addf %5, %7 : vector<256x256xf32>
    %cst_7 = arith.constant 0.000000e+00 : f32
    %9 = vector.broadcast %cst_7 : f32 to vector<256x256xf32>
    %10 = arith.maximumf %8, %9 : vector<256x256xf32>
    %cst_8 = arith.constant 6.000000e+00 : f32
    %11 = vector.broadcast %cst_8 : f32 to vector<256x256xf32>
    %12 = arith.minimumf %10, %11 : vector<256x256xf32>
    %13 = arith.truncf %12 : vector<256x256xf32> to vector<256x256xbf16>
    %c0_9 = arith.constant 0 : index
    %c0_10 = arith.constant 0 : index
    %14 = vector.load %arg5[%c0_9, %c0_10] : memref<256x256xbf16, #tpu.memory_space<vmem>>, vector<256x256xbf16>
    tpu.vector_store %arg5[%c0_9, %c0_10], %13 {strides = array<i32>} : memref<256x256xbf16, #tpu.memory_space<vmem>>, vector<256x256xbf16>,
    return
  }
  func.func @transform_0(%arg0: i32) -> (i32, i32) {
    %c0_i32 = arith.constant 0 : i32
    %c0_i32_0 = arith.constant 0 : i32
    return %arg0, %c0_i32 : i32, i32
  }
  func.func @transform_1(%arg0: i32) -> (i32, i32) {
    %c0_i32 = arith.constant 0 : i32
    %c0_i32_0 = arith.constant 0 : i32
    %c0_i32_1 = arith.constant 0 : i32
    return %c0_i32, %c0_i32_0 : i32, i32
  }
  func.func @transform_2(%arg0: i32) -> (i32, i32) {
    %c0_i32 = arith.constant 0 : i32
    %c0_i32_0 = arith.constant 0 : i32
    %c0_i32_1 = arith.constant 0 : i32
    return %c0_i32, %c0_i32_0 : i32, i32
  }
  func.func @transform_3(%arg0: i32) -> (i32, i32) {
    %c0_i32 = arith.constant 0 : i32
    %c0_i32_0 = arith.constant 0 : i32
    %c0_i32_1 = arith.constant 0 : i32
    return %c0_i32, %c0_i32_0 : i32, i32
  }
  func.func @transform_4(%arg0: i32) -> (i32, i32) {
    %c0_i32 = arith.constant 0 : i32
    %c0_i32_0 = arith.constant 0 : i32
    return %arg0, %c0_i32 : i32, i32
  }
}

module attributes {stable_mosaic.version = 11 : i64} {
  func.func @_dw_kernel(%arg0: i32, %arg1: i32, %arg2: memref<1x18x18x128xbf16, #tpu.memory_space<vmem>>, %arg3: memref<9x128xbf16, #tpu.memory_space<vmem>>, %arg4: memref<1x128xf32, #tpu.memory_space<vmem>>, %arg5: memref<1x128xf32, #tpu.memory_space<vmem>>, %arg6: memref<1x16x16x128xbf16, #tpu.memory_space<vmem>>) attributes {dimension_semantics = [#tpu.dimension_semantics<parallel>, #tpu.dimension_semantics<parallel>], iteration_bounds = array<i64: 2, 2>, scalar_prefetch = 0 : i64, scratch_operands = 0 : i64, tpu.core_type = #tpu.core_type<tc>, window_params = [{transform_indices = @transform_0, window_bounds = array<i64: 1, 18, 18, 128>}, {transform_indices = @transform_1, window_bounds = array<i64: 9, 128>}, {transform_indices = @transform_2, window_bounds = array<i64: 1, 128>}, {transform_indices = @transform_3, window_bounds = array<i64: 1, 128>}, {transform_indices = @transform_4, window_bounds = array<i64: 1, 16, 16, 128>}]} {
    %c0 = arith.constant 0 : index
    %c0_0 = arith.constant 0 : index
    %c0_1 = arith.constant 0 : index
    %c0_2 = arith.constant 0 : index
    %0 = vector.load %arg2[%c0, %c0_0, %c0_1, %c0_2] : memref<1x18x18x128xbf16, #tpu.memory_space<vmem>>, vector<1x18x18x128xbf16>
    %1 = vector.shape_cast %0 : vector<1x18x18x128xbf16> to vector<18x18x128xbf16>
    %c0_3 = arith.constant 0 : index
    %c0_4 = arith.constant 0 : index
    %2 = vector.load %arg3[%c0_3, %c0_4] : memref<9x128xbf16, #tpu.memory_space<vmem>>, vector<9x128xbf16>
    %3 = vector.extract_strided_slice %1 {offsets = [0, 0, 0], sizes = [18, 16, 128], strides = [1, 1, 1]} : vector<18x18x128xbf16> to vector<18x16x128xbf16>
    %4 = vector.extract_strided_slice %1 {offsets = [0, 1, 0], sizes = [18, 16, 128], strides = [1, 1, 1]} : vector<18x18x128xbf16> to vector<18x16x128xbf16>
    %5 = vector.extract_strided_slice %1 {offsets = [0, 2, 0], sizes = [18, 16, 128], strides = [1, 1, 1]} : vector<18x18x128xbf16> to vector<18x16x128xbf16>
    %cst = arith.constant 0.000000e+00 : f32
    %6 = vector.broadcast %cst : f32 to vector<16x16x128xf32>
    %7 = vector.extract_strided_slice %3 {offsets = [0, 0, 0], sizes = [16, 16, 128], strides = [1, 1, 1]} : vector<18x16x128xbf16> to vector<16x16x128xbf16>
    %8 = vector.extract_strided_slice %2 {offsets = [0, 0], sizes = [1, 128], strides = [1, 1]} : vector<9x128xbf16> to vector<1x128xbf16>
    %9 = vector.shape_cast %8 : vector<1x128xbf16> to vector<128xbf16>
    %10 = vector.shape_cast %9 : vector<128xbf16> to vector<1x1x128xbf16>
    %11 = vector.broadcast %10 : vector<1x1x128xbf16> to vector<16x16x128xbf16>
    %12 = arith.mulf %7, %11 : vector<16x16x128xbf16>
    %13 = arith.extf %12 : vector<16x16x128xbf16> to vector<16x16x128xf32>
    %14 = arith.addf %6, %13 : vector<16x16x128xf32>
    %15 = vector.extract_strided_slice %4 {offsets = [0, 0, 0], sizes = [16, 16, 128], strides = [1, 1, 1]} : vector<18x16x128xbf16> to vector<16x16x128xbf16>
    %16 = vector.extract_strided_slice %2 {offsets = [1, 0], sizes = [1, 128], strides = [1, 1]} : vector<9x128xbf16> to vector<1x128xbf16>
    %17 = vector.shape_cast %16 : vector<1x128xbf16> to vector<128xbf16>
    %18 = vector.shape_cast %17 : vector<128xbf16> to vector<1x1x128xbf16>
    %19 = vector.broadcast %18 : vector<1x1x128xbf16> to vector<16x16x128xbf16>
    %20 = arith.mulf %15, %19 : vector<16x16x128xbf16>
    %21 = arith.extf %20 : vector<16x16x128xbf16> to vector<16x16x128xf32>
    %22 = arith.addf %14, %21 : vector<16x16x128xf32>
    %23 = vector.extract_strided_slice %5 {offsets = [0, 0, 0], sizes = [16, 16, 128], strides = [1, 1, 1]} : vector<18x16x128xbf16> to vector<16x16x128xbf16>
    %24 = vector.extract_strided_slice %2 {offsets = [2, 0], sizes = [1, 128], strides = [1, 1]} : vector<9x128xbf16> to vector<1x128xbf16>
    %25 = vector.shape_cast %24 : vector<1x128xbf16> to vector<128xbf16>
    %26 = vector.shape_cast %25 : vector<128xbf16> to vector<1x1x128xbf16>
    %27 = vector.broadcast %26 : vector<1x1x128xbf16> to vector<16x16x128xbf16>
    %28 = arith.mulf %23, %27 : vector<16x16x128xbf16>
    %29 = arith.extf %28 : vector<16x16x128xbf16> to vector<16x16x128xf32>
    %30 = arith.addf %22, %29 : vector<16x16x128xf32>
    %31 = vector.extract_strided_slice %3 {offsets = [1, 0, 0], sizes = [16, 16, 128], strides = [1, 1, 1]} : vector<18x16x128xbf16> to vector<16x16x128xbf16>
    %32 = vector.extract_strided_slice %2 {offsets = [3, 0], sizes = [1, 128], strides = [1, 1]} : vector<9x128xbf16> to vector<1x128xbf16>
    %33 = vector.shape_cast %32 : vector<1x128xbf16> to vector<128xbf16>
    %34 = vector.shape_cast %33 : vector<128xbf16> to vector<1x1x128xbf16>
    %35 = vector.broadcast %34 : vector<1x1x128xbf16> to vector<16x16x128xbf16>
    %36 = arith.mulf %31, %35 : vector<16x16x128xbf16>
    %37 = arith.extf %36 : vector<16x16x128xbf16> to vector<16x16x128xf32>
    %38 = arith.addf %30, %37 : vector<16x16x128xf32>
    %39 = vector.extract_strided_slice %4 {offsets = [1, 0, 0], sizes = [16, 16, 128], strides = [1, 1, 1]} : vector<18x16x128xbf16> to vector<16x16x128xbf16>
    %40 = vector.extract_strided_slice %2 {offsets = [4, 0], sizes = [1, 128], strides = [1, 1]} : vector<9x128xbf16> to vector<1x128xbf16>
    %41 = vector.shape_cast %40 : vector<1x128xbf16> to vector<128xbf16>
    %42 = vector.shape_cast %41 : vector<128xbf16> to vector<1x1x128xbf16>
    %43 = vector.broadcast %42 : vector<1x1x128xbf16> to vector<16x16x128xbf16>
    %44 = arith.mulf %39, %43 : vector<16x16x128xbf16>
    %45 = arith.extf %44 : vector<16x16x128xbf16> to vector<16x16x128xf32>
    %46 = arith.addf %38, %45 : vector<16x16x128xf32>
    %47 = vector.extract_strided_slice %5 {offsets = [1, 0, 0], sizes = [16, 16, 128], strides = [1, 1, 1]} : vector<18x16x128xbf16> to vector<16x16x128xbf16>
    %48 = vector.extract_strided_slice %2 {offsets = [5, 0], sizes = [1, 128], strides = [1, 1]} : vector<9x128xbf16> to vector<1x128xbf16>
    %49 = vector.shape_cast %48 : vector<1x128xbf16> to vector<128xbf16>
    %50 = vector.shape_cast %49 : vector<128xbf16> to vector<1x1x128xbf16>
    %51 = vector.broadcast %50 : vector<1x1x128xbf16> to vector<16x16x128xbf16>
    %52 = arith.mulf %47, %51 : vector<16x16x128xbf16>
    %53 = arith.extf %52 : vector<16x16x128xbf16> to vector<16x16x128xf32>
    %54 = arith.addf %46, %53 : vector<16x16x128xf32>
    %55 = vector.extract_strided_slice %3 {offsets = [2, 0, 0], sizes = [16, 16, 128], strides = [1, 1, 1]} : vector<18x16x128xbf16> to vector<16x16x128xbf16>
    %56 = vector.extract_strided_slice %2 {offsets = [6, 0], sizes = [1, 128], strides = [1, 1]} : vector<9x128xbf16> to vector<1x128xbf16>
    %57 = vector.shape_cast %56 : vector<1x128xbf16> to vector<128xbf16>
    %58 = vector.shape_cast %57 : vector<128xbf16> to vector<1x1x128xbf16>
    %59 = vector.broadcast %58 : vector<1x1x128xbf16> to vector<16x16x128xbf16>
    %60 = arith.mulf %55, %59 : vector<16x16x128xbf16>
    %61 = arith.extf %60 : vector<16x16x128xbf16> to vector<16x16x128xf32>
    %62 = arith.addf %54, %61 : vector<16x16x128xf32>
    %63 = vector.extract_strided_slice %4 {offsets = [2, 0, 0], sizes = [16, 16, 128], strides = [1, 1, 1]} : vector<18x16x128xbf16> to vector<16x16x128xbf16>
    %64 = vector.extract_strided_slice %2 {offsets = [7, 0], sizes = [1, 128], strides = [1, 1]} : vector<9x128xbf16> to vector<1x128xbf16>
    %65 = vector.shape_cast %64 : vector<1x128xbf16> to vector<128xbf16>
    %66 = vector.shape_cast %65 : vector<128xbf16> to vector<1x1x128xbf16>
    %67 = vector.broadcast %66 : vector<1x1x128xbf16> to vector<16x16x128xbf16>
    %68 = arith.mulf %63, %67 : vector<16x16x128xbf16>
    %69 = arith.extf %68 : vector<16x16x128xbf16> to vector<16x16x128xf32>
    %70 = arith.addf %62, %69 : vector<16x16x128xf32>
    %71 = vector.extract_strided_slice %5 {offsets = [2, 0, 0], sizes = [16, 16, 128], strides = [1, 1, 1]} : vector<18x16x128xbf16> to vector<16x16x128xbf16>
    %72 = vector.extract_strided_slice %2 {offsets = [8, 0], sizes = [1, 128], strides = [1, 1]} : vector<9x128xbf16> to vector<1x128xbf16>
    %73 = vector.shape_cast %72 : vector<1x128xbf16> to vector<128xbf16>
    %74 = vector.shape_cast %73 : vector<128xbf16> to vector<1x1x128xbf16>
    %75 = vector.broadcast %74 : vector<1x1x128xbf16> to vector<16x16x128xbf16>
    %76 = arith.mulf %71, %75 : vector<16x16x128xbf16>
    %77 = arith.extf %76 : vector<16x16x128xbf16> to vector<16x16x128xf32>
    %78 = arith.addf %70, %77 : vector<16x16x128xf32>
    %c0_5 = arith.constant 0 : index
    %c0_6 = arith.constant 0 : index
    %79 = vector.load %arg4[%c0_5, %c0_6] : memref<1x128xf32, #tpu.memory_space<vmem>>, vector<1x128xf32>
    %80 = vector.shape_cast %79 : vector<1x128xf32> to vector<128xf32>
    %81 = vector.shape_cast %80 : vector<128xf32> to vector<1x1x128xf32>
    %82 = vector.broadcast %81 : vector<1x1x128xf32> to vector<16x16x128xf32>
    %83 = arith.mulf %78, %82 : vector<16x16x128xf32>
    %c0_7 = arith.constant 0 : index
    %c0_8 = arith.constant 0 : index
    %84 = vector.load %arg5[%c0_7, %c0_8] : memref<1x128xf32, #tpu.memory_space<vmem>>, vector<1x128xf32>
    %85 = vector.shape_cast %84 : vector<1x128xf32> to vector<128xf32>
    %86 = vector.shape_cast %85 : vector<128xf32> to vector<1x1x128xf32>
    %87 = vector.broadcast %86 : vector<1x1x128xf32> to vector<16x16x128xf32>
    %88 = arith.addf %83, %87 : vector<16x16x128xf32>
    %cst_9 = arith.constant 0.000000e+00 : f32
    %89 = vector.broadcast %cst_9 : f32 to vector<16x16x128xf32>
    %90 = arith.maximumf %88, %89 : vector<16x16x128xf32>
    %cst_10 = arith.constant 6.000000e+00 : f32
    %91 = vector.broadcast %cst_10 : f32 to vector<16x16x128xf32>
    %92 = arith.minimumf %90, %91 : vector<16x16x128xf32>
    %93 = arith.truncf %92 : vector<16x16x128xf32> to vector<16x16x128xbf16>
    %c0_11 = arith.constant 0 : index
    %c0_12 = arith.constant 0 : index
    %c0_13 = arith.constant 0 : index
    %c0_14 = arith.constant 0 : index
    %94 = vector.load %arg6[%c0_11, %c0_12, %c0_13, %c0_14] : memref<1x16x16x128xbf16, #tpu.memory_space<vmem>>, vector<1x16x16x128xbf16>
    %95 = vector.shape_cast %94 : vector<1x16x16x128xbf16> to vector<16x16x128xbf16>
    %96 = vector.shape_cast %93 : vector<16x16x128xbf16> to vector<1x16x16x128xbf16>
    tpu.vector_store %arg6[%c0_11, %c0_12, %c0_13, %c0_14], %96 {strides = array<i32>} : memref<1x16x16x128xbf16, #tpu.memory_space<vmem>>, vector<1x16x16x128xbf16>,
    return
  }
  func.func @transform_0(%arg0: i32, %arg1: i32) -> (i32, i32, i32, i32) {
    %c0_i32 = arith.constant 0 : i32
    %c0_i32_0 = arith.constant 0 : i32
    %c0_i32_1 = arith.constant 0 : i32
    return %arg0, %c0_i32, %c0_i32_0, %arg1 : i32, i32, i32, i32
  }
  func.func @transform_1(%arg0: i32, %arg1: i32) -> (i32, i32) {
    %c0_i32 = arith.constant 0 : i32
    %c0_i32_0 = arith.constant 0 : i32
    return %c0_i32, %arg1 : i32, i32
  }
  func.func @transform_2(%arg0: i32, %arg1: i32) -> (i32, i32) {
    %c0_i32 = arith.constant 0 : i32
    %c0_i32_0 = arith.constant 0 : i32
    return %c0_i32, %arg1 : i32, i32
  }
  func.func @transform_3(%arg0: i32, %arg1: i32) -> (i32, i32) {
    %c0_i32 = arith.constant 0 : i32
    %c0_i32_0 = arith.constant 0 : i32
    return %c0_i32, %arg1 : i32, i32
  }
  func.func @transform_4(%arg0: i32, %arg1: i32) -> (i32, i32, i32, i32) {
    %c0_i32 = arith.constant 0 : i32
    %c0_i32_0 = arith.constant 0 : i32
    %c0_i32_1 = arith.constant 0 : i32
    return %arg0, %c0_i32, %c0_i32_0, %arg1 : i32, i32, i32, i32
  }
}

module attributes {stable_mosaic.version = 11 : i64} {
  func.func @_pw_res_kernel(%arg0: i32, %arg1: memref<256x256xbf16, #tpu.memory_space<vmem>>, %arg2: memref<256x128xbf16, #tpu.memory_space<vmem>>, %arg3: memref<1x128xf32, #tpu.memory_space<vmem>>, %arg4: memref<1x128xf32, #tpu.memory_space<vmem>>, %arg5: memref<256x128xbf16, #tpu.memory_space<vmem>>, %arg6: memref<256x128xf32, #tpu.memory_space<vmem>>) attributes {dimension_semantics = [#tpu.dimension_semantics<parallel>], iteration_bounds = array<i64: 2>, scalar_prefetch = 0 : i64, scratch_operands = 0 : i64, tpu.core_type = #tpu.core_type<tc>, window_params = [{transform_indices = @transform_0, window_bounds = array<i64: 256, 256>}, {pipeline_mode = #tpu.pipeline_mode<synchronous>, transform_indices = @transform_1, window_bounds = array<i64: 256, 128>}, {pipeline_mode = #tpu.pipeline_mode<synchronous>, transform_indices = @transform_2, window_bounds = array<i64: 1, 128>}, {pipeline_mode = #tpu.pipeline_mode<synchronous>, transform_indices = @transform_3, window_bounds = array<i64: 1, 128>}, {transform_indices = @transform_4, window_bounds = array<i64: 256, 128>}, {transform_indices = @transform_5, window_bounds = array<i64: 256, 128>}]} {
    %c0 = arith.constant 0 : index
    %c0_0 = arith.constant 0 : index
    %0 = vector.load %arg1[%c0, %c0_0] : memref<256x256xbf16, #tpu.memory_space<vmem>>, vector<256x256xbf16>
    %c0_1 = arith.constant 0 : index
    %c0_2 = arith.constant 0 : index
    %1 = vector.load %arg2[%c0_1, %c0_2] : memref<256x128xbf16, #tpu.memory_space<vmem>>, vector<256x128xbf16>
    %cst = arith.constant dense<0.000000e+00> : vector<256x128xf32>
    %2 = tpu.matmul %0, %1, %cst {dimension_numbers = #tpu.dot_dimension_numbers<[1], [0], [0], [1], [0, 0, 1, 1], [], []>} : vector<256x256xbf16>, vector<256x128xbf16>, vector<256x128xf32> -> vector<256x128xf32>
    %c0_3 = arith.constant 0 : index
    %c0_4 = arith.constant 0 : index
    %3 = vector.load %arg3[%c0_3, %c0_4] : memref<1x128xf32, #tpu.memory_space<vmem>>, vector<1x128xf32>
    %4 = vector.broadcast %3 : vector<1x128xf32> to vector<256x128xf32>
    %5 = arith.mulf %2, %4 : vector<256x128xf32>
    %c0_5 = arith.constant 0 : index
    %c0_6 = arith.constant 0 : index
    %6 = vector.load %arg4[%c0_5, %c0_6] : memref<1x128xf32, #tpu.memory_space<vmem>>, vector<1x128xf32>
    %7 = vector.broadcast %6 : vector<1x128xf32> to vector<256x128xf32>
    %8 = arith.addf %5, %7 : vector<256x128xf32>
    %c0_7 = arith.constant 0 : index
    %c0_8 = arith.constant 0 : index
    %9 = vector.load %arg5[%c0_7, %c0_8] : memref<256x128xbf16, #tpu.memory_space<vmem>>, vector<256x128xbf16>
    %10 = arith.extf %9 : vector<256x128xbf16> to vector<256x128xf32>
    %11 = arith.addf %8, %10 : vector<256x128xf32>
    %c0_9 = arith.constant 0 : index
    %c0_10 = arith.constant 0 : index
    %12 = vector.load %arg6[%c0_9, %c0_10] : memref<256x128xf32, #tpu.memory_space<vmem>>, vector<256x128xf32>
    tpu.vector_store %arg6[%c0_9, %c0_10], %11 {strides = array<i32>} : memref<256x128xf32, #tpu.memory_space<vmem>>, vector<256x128xf32>,
    return
  }
  func.func @transform_0(%arg0: i32) -> (i32, i32) {
    %c0_i32 = arith.constant 0 : i32
    %c0_i32_0 = arith.constant 0 : i32
    return %arg0, %c0_i32 : i32, i32
  }
  func.func @transform_1(%arg0: i32) -> (i32, i32) {
    %c0_i32 = arith.constant 0 : i32
    %c0_i32_0 = arith.constant 0 : i32
    %c0_i32_1 = arith.constant 0 : i32
    return %c0_i32, %c0_i32_0 : i32, i32
  }
  func.func @transform_2(%arg0: i32) -> (i32, i32) {
    %c0_i32 = arith.constant 0 : i32
    %c0_i32_0 = arith.constant 0 : i32
    %c0_i32_1 = arith.constant 0 : i32
    return %c0_i32, %c0_i32_0 : i32, i32
  }
  func.func @transform_3(%arg0: i32) -> (i32, i32) {
    %c0_i32 = arith.constant 0 : i32
    %c0_i32_0 = arith.constant 0 : i32
    %c0_i32_1 = arith.constant 0 : i32
    return %c0_i32, %c0_i32_0 : i32, i32
  }
  func.func @transform_4(%arg0: i32) -> (i32, i32) {
    %c0_i32 = arith.constant 0 : i32
    %c0_i32_0 = arith.constant 0 : i32
    return %arg0, %c0_i32 : i32, i32
  }
  func.func @transform_5(%arg0: i32) -> (i32, i32) {
    %c0_i32 = arith.constant 0 : i32
    %c0_i32_0 = arith.constant 0 : i32
    return %arg0, %c0_i32 : i32, i32
  }
}

</mosaic_0001>

<llo_original>
// kernel: _lambda_.3
$region0: #{_lambda_.3}
  #allocation0 [shape = 'u32[]', space=smem, size = 0x4, offset = 0x4, fixed_abs, tag = 'smem constant byte address 0x4 - core index']
  #allocation1 [shape = 'u32[144,128]{1,0:T(1,128)}', space=vmem, size = 0x12000, scoped, tag = 'internal scratch']
  %s0 = inlined_call_operand.vmem [shape: bf16[512,128], index: 0, kind: input, shape index: {}]
  %s1 = inlined_call_operand.vmem [shape: bf16[128,256], index: 1, kind: input, shape index: {}]
  %s2 = inlined_call_operand.vmem [shape: f32[1,256], index: 2, kind: input, shape index: {}]
  %s3 = inlined_call_operand.vmem [shape: f32[1,256], index: 3, kind: input, shape index: {}]
  %s4 = inlined_call_operand.vmem [shape: bf16[512,256], index: 4, kind: output, shape index: {}]
  %s5 = sld [smem:[#allocation0]]
  $region49: #{_lambda_.3} parent=0
    _
  %s7 = ssub.s32 1, %s5
  %s8 = scalar_select 0, %s7, %s5
  loop: start=0, step=1, limit=4
  $region2: #{_lambda_.3} parent=0 // loop_pre_header
    _
  $region3: #{_lambda_.3} parent=0 // loop_header
    %s10 = sphi 0, %s14
    %p11 = scmp.ge.s32.totalorder %s10, 4
    %s20 = sphi 0, %s22
    %s23 = sphi 0, %s20
    %s24 = sphi 0, %s23
    %s40 = sphi 0, %s24
    %s44 = sphi 0, %s44
    %s46 = sphi 0, %s44
    %s47 = sphi 0, %s46
    %s61 = sphi 0, %s47
    %s65 = sphi 0, %s65
    %s67 = sphi 0, %s65
    %s68 = sphi 0, %s67
    %s82 = sphi 0, %s68
    %s86 = sphi 0, %s86
    %s88 = sphi 0, %s86
    %s89 = sphi 0, %s88
    %s103 = sphi 0, %s89
    %s109 = sphi 0, %s111
    %s112 = sphi 0, %s109
    %s113 = sphi 0, %s112
    %s129 = sphi 0, %s113
  $region4: #{_lambda_.3} parent=0 // loop_header_branch
    %13 = sbr.rel (%p11) target = $region8
  $region5: #{_lambda_.3} parent=0 // loop_body
    %s15 = ssub.s32 %s10, 1
    %s16 = ssub.s32 %s10, 2
    %s17 = sadd.s32 %s10, 1
    %s18 = ssub.s32 %s10, %s17
    %p19 = scmp.eq.s32.totalorder %s18, 0
    %s21 = sadd.s32 %s20, 1
    %s22 = scalar_select %p19, %s20, %s21
    %p25 = pneg %p19
    %p26 = scmp.eq.s32.totalorder %s10, 1
    %p27 = por %p25, %p26
    %p28 = scmp.ne.s32.totalorder %s20, %s23
    %p29 = scmp.eq.s32.totalorder %s10, 0
    %p30 = por %p28, %p29
    %p31 = scmp.ne.s32.totalorder %s20, %s23
    %p32 = scmp.eq.s32.totalorder %s15, 1
    %p33 = por %p31, %p32
    %p34 = scmp.ne.s32.totalorder %s23, %s24
    %p35 = scmp.eq.s32.totalorder %s15, 0
    %p36 = por %p34, %p35
    %p37 = scmp.ne.s32.totalorder %s23, %s24
    %p38 = scmp.eq.s32.totalorder %s16, 1
    %p39 = por %p37, %p38
    %p41 = scmp.ne.s32.totalorder %s24, %s40
    %p42 = scmp.eq.s32.totalorder %s16, 0
    %p43 = por %p41, %p42
    %s45 = sadd.s32 %s44, 1
    %p48 = scmp.eq.s32.totalorder %s10, 1
    %p49 = scmp.ne.s32.totalorder %s44, %s46
    %p50 = scmp.eq.s32.totalorder %s10, 0
    %p51 = por %p49, %p50
    %p52 = scmp.ne.s32.totalorder %s44, %s46
    %p53 = scmp.eq.s32.totalorder %s15, 1
    %p54 = por %p52, %p53
    %p55 = scmp.ne.s32.totalorder %s46, %s47
    %p56 = scmp.eq.s32.totalorder %s15, 0
    %p57 = por %p55, %p56
    %p58 = scmp.ne.s32.totalorder %s46, %s47
    %p59 = scmp.eq.s32.totalorder %s16, 1
    %p60 = por %p58, %p59
    %p62 = scmp.ne.s32.totalorder %s47, %s61
    %p63 = scmp.eq.s32.totalorder %s16, 0
    %p64 = por %p62, %p63
    %s66 = sadd.s32 %s65, 1
    %p69 = scmp.eq.s32.totalorder %s10, 1
    %p70 = scmp.ne.s32.totalorder %s65, %s67
    %p71 = scmp.eq.s32.totalorder %s10, 0
    %p72 = por %p70, %p71
    %p73 = scmp.ne.s32.totalorder %s65, %s67
    %p74 = scmp.eq.s32.totalorder %s15, 1
    %p75 = por %p73, %p74
    %p76 = scmp.ne.s32.totalorder %s67, %s68
    %p77 = scmp.eq.s32.totalorder %s15, 0
    %p78 = por %p76, %p77
    %p79 = scmp.ne.s32.totalorder %s67, %s68
    %p80 = scmp.eq.s32.totalorder %s16, 1
    %p81 = por %p79, %p80
    %p83 = scmp.ne.s32.totalorder %s68, %s82
    %p84 = scmp.eq.s32.totalorder %s16, 0
    %p85 = por %p83, %p84
    %s87 = sadd.s32 %s86, 1
    %p90 = scmp.eq.s32.totalorder %s10, 1
    %p91 = scmp.ne.s32.totalorder %s86, %s88
    %p92 = scmp.eq.s32.totalorder %s10, 0
    %p93 = por %p91, %p92
    %p94 = scmp.ne.s32.totalorder %s86, %s88
    %p95 = scmp.eq.s32.totalorder %s15, 1
    %p96 = por %p94, %p95
    %p97 = scmp.ne.s32.totalorder %s88, %s89
    %p98 = scmp.eq.s32.totalorder %s15, 0
    %p99 = por %p97, %p98
    %p100 = scmp.ne.s32.totalorder %s88, %s89
    %p101 = scmp.eq.s32.totalorder %s16, 1
    %p102 = por %p100, %p101
    %p104 = scmp.ne.s32.totalorder %s89, %s103
    %p105 = scmp.eq.s32.totalorder %s16, 0
    %p106 = por %p104, %p105
    %s107 = ssub.s32 %s10, %s17
    %p108 = scmp.eq.s32.totalorder %s107, 0
    %s110 = sadd.s32 %s109, 1
    %s111 = scalar_select %p108, %s109, %s110
    %p114 = pneg %p108
    %p115 = scmp.eq.s32.totalorder %s10, 1
    %p116 = por %p114, %p115
    %p117 = scmp.ne.s32.totalorder %s109, %s112
    %p118 = scmp.eq.s32.totalorder %s10, 0
    %p119 = por %p117, %p118
    %p120 = scmp.ne.s32.totalorder %s109, %s112
    %p121 = scmp.eq.s32.totalorder %s15, 1
    %p122 = por %p120, %p121
    %p123 = scmp.ne.s32.totalorder %s112, %s113
    %p124 = scmp.eq.s32.totalorder %s15, 0
    %p125 = por %p123, %p124
    %p126 = scmp.ne.s32.totalorder %s112, %s113
    %p127 = scmp.eq.s32.totalorder %s16, 1
    %p128 = por %p126, %p127
    %p130 = scmp.ne.s32.totalorder %s113, %s129
    %p131 = scmp.eq.s32.totalorder %s16, 0
    %p132 = por %p130, %p131
    %p133 = scmp.le.s32.totalorder 1, %s10
    %p134 = scmp.lt.s32.totalorder %s10, 3
    %p135 = pnand %p133, %p134
    %p136 = pneg %p135
    // Predicated region
    $region9: #{_lambda_.3} parent=5 // pred_check
      _
    $region10: #{_lambda_.3} parent=5 // pred_check_branch
      %138 = sbr.rel (%p135) target = $region12
    $region11: #{_lambda_.3} parent=5 // pred_region
      %s139 = ssub.s32 %s10, 1
      // Predicated region
      $region13: #{_lambda_.3} parent=11 // pred_check
        %p140 = pneg %p57
      $region14: #{_lambda_.3} parent=11 // pred_check_branch
        %142 = sbr.rel (%p140) target = $region16
      $region15: #{_lambda_.3} parent=11 // pred_region
        _
      $region16: #{_lambda_.3} parent=11 // pred_fallthru
        _
      // Predicated region
      $region17: #{_lambda_.3} parent=11 // pred_check
        %p143 = pneg %p78
      $region18: #{_lambda_.3} parent=11 // pred_check_branch
        %145 = sbr.rel (%p143) target = $region20
      $region19: #{_lambda_.3} parent=11 // pred_region
        _
      $region20: #{_lambda_.3} parent=11 // pred_fallthru
        _
      // Predicated region
      $region21: #{_lambda_.3} parent=11 // pred_check
        %p146 = pneg %p99
      $region22: #{_lambda_.3} parent=11 // pred_check_branch
        %148 = sbr.rel (%p146) target = $region24
      $region23: #{_lambda_.3} parent=11 // pred_region
        _
      $region24: #{_lambda_.3} parent=11 // pred_fallthru
        _
    $region12: #{_lambda_.3} parent=5 // pred_fallthru
      _
    %p149 = scmp.lt.s32.totalorder %s10, 2
    // Predicated region
    $region25: #{_lambda_.3} parent=5 // pred_check
      %p150 = pneg %p149
    $region26: #{_lambda_.3} parent=5 // pred_check_branch
      %152 = sbr.rel (%p150) target = $region28
    $region27: #{_lambda_.3} parent=5 // pred_region
      // Predicated region
      $region29: #{_lambda_.3} parent=27 // pred_check
        %p153 = pneg %p30
      $region30: #{_lambda_.3} parent=27 // pred_check_branch
        %155 = sbr.rel (%p153) target = $region32
      $region31: #{_lambda_.3} parent=27 // pred_region
        %s156 = smul.u32 32, %s10
        %p157 = scmp.lt.s32.totalorder %s156, 63
        %s158 = scalar_select %p157, %s156, 63
        %s159 = smul.addr %s158, 4
        %s160 = scalar_lea.vmem %s0, %s159
        %s161 = smul.u32 32, %s10
      $region32: #{_lambda_.3} parent=27 // pred_fallthru
        _
    $region28: #{_lambda_.3} parent=5 // pred_fallthru
      _
    %p162 = scmp.le.s32.totalorder 1, %s10
    %p163 = scmp.lt.s32.totalorder %s10, 3
    %p164 = pnand %p162, %p163
    %p165 = pneg %p164
    // Predicated region
    $region33: #{_lambda_.3} parent=5 // pred_check
      _
    $region34: #{_lambda_.3} parent=5 // pred_check_branch
      %167 = sbr.rel (%p164) target = $region36
    $region35: #{_lambda_.3} parent=5 // pred_region
      %s168 = ssub.s32 %s10, 1
      %s169 = smul.u32 32, %s15
      %p170 = scmp.lt.s32.totalorder %s169, 63
      %s171 = scalar_select %p170, %s169, 63
      %s172 = smul.addr %s171, 4
      %s173 = scalar_lea.vmem %s0, %s172
      %p174 = pneg %p36
      %p175 = pneg %p33
      %p176 = pneg %p57
      %p177 = pneg %p54
      %p178 = pneg %p78
      %p179 = pneg %p75
      %p180 = pneg %p99
      %p181 = pneg %p96
      %p182 = pneg %p125
      %p183 = pneg %p122
      %s184 = smul.u32 32, %s15
      %p185 = scmp.lt.s32.totalorder %s184, 63
      %s186 = scalar_select %p185, %s184, 63
      %s187 = smul.addr %s186, 2
      %s188 = smul.addr %s187, 4
      %s189 = scalar_lea.vmem %s4, %s188
      %s190 = smul.u32 32, %s15
      %p191 = scmp.lt.s32.totalorder %s190, 63
      %s192 = scalar_select %p191, %s190, 63
      %s193 = smul.addr %s192, 4
      %s194 = scalar_lea.vmem %s0, %s193
      %s195 = smul.u32 32, %s15
      %s196 = smul.u32 32, %s15
      %p197 = scmp.lt.s32.totalorder %s196, 63
      %s198 = scalar_select %p197, %s196, 63
      %s199 = smul.addr %s198, 2
      %s200 = smul.addr %s199, 4
      %s201 = scalar_lea.vmem %s4, %s200
      %s202 = smul.u32 32, %s15
      %v204 = vld [vmem:[%s194] sm:$0xf]
      %v205 = vld [vmem:[%s194 + $0x4] sm:$0xf]
      %v206 = vld [vmem:[%s194 + $0x8] sm:$0xf]
      %v207 = vld [vmem:[%s194 + $0xc] sm:$0xf]
      %v208 = vld [vmem:[%s194 + $0x10] sm:$0xf]
      %v209 = vld [vmem:[%s194 + $0x14] sm:$0xf]
      %v210 = vld [vmem:[%s194 + $0x18] sm:$0xf]
      %v211 = vld [vmem:[%s194 + $0x1c] sm:$0xf]
      %v212 = vld [vmem:[%s194 + $0x20] sm:$0xf]
      %v213 = vld [vmem:[%s194 + $0x24] sm:$0xf]
      %v214 = vld [vmem:[%s194 + $0x28] sm:$0xf]
      %v215 = vld [vmem:[%s194 + $0x2c] sm:$0xf]
      %v216 = vld [vmem:[%s194 + $0x30] sm:$0xf]
      %v217 = vld [vmem:[%s194 + $0x34] sm:$0xf]
      %v218 = vld [vmem:[%s194 + $0x38] sm:$0xf]
      %v219 = vld [vmem:[%s194 + $0x3c] sm:$0xf]
      %v220 = vld [vmem:[%s194 + $0x40] sm:$0xf]
      %v221 = vld [vmem:[%s194 + $0x44] sm:$0xf]
      %v222 = vld [vmem:[%s194 + $0x48] sm:$0xf]
      %v223 = vld [vmem:[%s194 + $0x4c] sm:$0xf]
      %v224 = vld [vmem:[%s194 + $0x50] sm:$0xf]
      %v225 = vld [vmem:[%s194 + $0x54] sm:$0xf]
      %v226 = vld [vmem:[%s194 + $0x58] sm:$0xf]
      %v227 = vld [vmem:[%s194 + $0x5c] sm:$0xf]
      %v228 = vld [vmem:[%s194 + $0x60] sm:$0xf]
      %v229 = vld [vmem:[%s194 + $0x64] sm:$0xf]
      %v230 = vld [vmem:[%s194 + $0x68] sm:$0xf]
      %v231 = vld [vmem:[%s194 + $0x6c] sm:$0xf]
      %v232 = vld [vmem:[%s194 + $0x70] sm:$0xf]
      %v233 = vld [vmem:[%s194 + $0x74] sm:$0xf]
      %v234 = vld [vmem:[%s194 + $0x78] sm:$0xf]
      %v235 = vld [vmem:[%s194 + $0x7c] sm:$0xf]
      %v236 = vld [vmem:[%s1] sm:$0xff]
      %v237 = vld [vmem:[%s1 + $0x8] sm:$0xff]
      %v238 = vld [vmem:[%s1 + $0x10] sm:$0xff]
      %v239 = vld [vmem:[%s1 + $0x18] sm:$0xff]
      %v240 = vld [vmem:[%s1 + $0x20] sm:$0xff]
      %v241 = vld [vmem:[%s1 + $0x28] sm:$0xff]
      %v242 = vld [vmem:[%s1 + $0x30] sm:$0xff]
      %v243 = vld [vmem:[%s1 + $0x38] sm:$0xff]
      %v244 = vld [vmem:[%s1 + $0x40] sm:$0xff]
      %v245 = vld [vmem:[%s1 + $0x48] sm:$0xff]
      %v246 = vld [vmem:[%s1 + $0x50] sm:$0xff]
      %v247 = vld [vmem:[%s1 + $0x58] sm:$0xff]
      %v248 = vld [vmem:[%s1 + $0x60] sm:$0xff]
      %v249 = vld [vmem:[%s1 + $0x68] sm:$0xff]
      %v250 = vld [vmem:[%s1 + $0x70] sm:$0xff]
      %v251 = vld [vmem:[%s1 + $0x78] sm:$0xff]
      %v284 = vunpack.c.l.b16 %v204
      %v285 = vunpack.c.l.b16 %v205
      %v286 = vunpack.c.l.b16 %v206
      %v287 = vunpack.c.l.b16 %v207
      %v288 = vunpack.c.l.b16 %v208
      %v289 = vunpack.c.l.b16 %v209
      %v290 = vunpack.c.l.b16 %v210
      %v291 = vunpack.c.l.b16 %v211
      %v292 = vunpack.c.l.b16 %v212
      %v293 = vunpack.c.l.b16 %v213
      %v294 = vunpack.c.l.b16 %v214
      %v295 = vunpack.c.l.b16 %v215
      %v296 = vunpack.c.l.b16 %v216
      %v297 = vunpack.c.l.b16 %v217
      %v298 = vunpack.c.l.b16 %v218
      %v299 = vunpack.c.l.b16 %v219
      %v300 = vunpack.c.l.b16 %v220
      %v301 = vunpack.c.l.b16 %v221
      %v302 = vunpack.c.l.b16 %v222
      %v303 = vunpack.c.l.b16 %v223
      %v304 = vunpack.c.l.b16 %v224
      %v305 = vunpack.c.l.b16 %v225
      %v306 = vunpack.c.l.b16 %v226
      %v307 = vunpack.c.l.b16 %v227
      %v308 = vunpack.c.l.b16 %v228
      %v309 = vunpack.c.l.b16 %v229
      %v310 = vunpack.c.l.b16 %v230
      %v311 = vunpack.c.l.b16 %v231
      %v312 = vunpack.c.l.b16 %v232
      %v313 = vunpack.c.l.b16 %v233
      %v314 = vunpack.c.l.b16 %v234
      %v315 = vunpack.c.l.b16 %v235
      %v316 = vpack.c.b16 %v285, %v284
      %v317 = vpack.c.b16 %v287, %v286
      %v318 = vpack.c.b16 %v289, %v288
      %v319 = vpack.c.b16 %v291, %v290
      %v320 = vpack.c.b16 %v293, %v292
      %v321 = vpack.c.b16 %v295, %v294
      %v322 = vpack.c.b16 %v297, %v296
      %v323 = vpack.c.b16 %v299, %v298
      %v324 = vpack.c.b16 %v301, %v300
      %v325 = vpack.c.b16 %v303, %v302
      %v326 = vpack.c.b16 %v305, %v304
      %v327 = vpack.c.b16 %v307, %v306
      %v328 = vpack.c.b16 %v309, %v308
      %v329 = vpack.c.b16 %v311, %v310
      %v330 = vpack.c.b16 %v313, %v312
      %v331 = vpack.c.b16 %v315, %v314
      %v364 = vunpack.c.l.b16 %v236
      %v365 = vunpack.c.h.b16 %v236
      %v366 = vunpack.c.l.b16 %v237
      %v367 = vunpack.c.h.b16 %v237
      %v368 = vunpack.c.l.b16 %v238
      %v369 = vunpack.c.h.b16 %v238
      %v370 = vunpack.c.l.b16 %v239
      %v371 = vunpack.c.h.b16 %v239
      %v372 = vunpack.c.l.b16 %v240
      %v373 = vunpack.c.h.b16 %v240
      %v374 = vunpack.c.l.b16 %v241
      %v375 = vunpack.c.h.b16 %v241
      %v376 = vunpack.c.l.b16 %v242
      %v377 = vunpack.c.h.b16 %v242
      %v378 = vunpack.c.l.b16 %v243
      %v379 = vunpack.c.h.b16 %v243
      %v380 = vunpack.c.l.b16 %v244
      %v381 = vunpack.c.h.b16 %v244
      %v382 = vunpack.c.l.b16 %v245
      %v383 = vunpack.c.h.b16 %v245
      %v384 = vunpack.c.l.b16 %v246
      %v385 = vunpack.c.h.b16 %v246
      %v386 = vunpack.c.l.b16 %v247
      %v387 = vunpack.c.h.b16 %v247
      %v388 = vunpack.c.l.b16 %v248
      %v389 = vunpack.c.h.b16 %v248
      %v390 = vunpack.c.l.b16 %v249
      %v391 = vunpack.c.h.b16 %v249
      %v392 = vunpack.c.l.b16 %v250
      %v393 = vunpack.c.h.b16 %v250
      %v394 = vunpack.c.l.b16 %v251
      %v395 = vunpack.c.h.b16 %v251
      %v396 = vpack.c.b16 %v366, %v364
      %v397 = vpack.c.b16 %v367, %v365
      %v398 = vpack.c.b16 %v370, %v368
      %v399 = vpack.c.b16 %v371, %v369
      %v400 = vpack.c.b16 %v374, %v372
      %v401 = vpack.c.b16 %v375, %v373
      %v402 = vpack.c.b16 %v378, %v376
      %v403 = vpack.c.b16 %v379, %v377
      %v404 = vpack.c.b16 %v382, %v380
      %v405 = vpack.c.b16 %v383, %v381
      %v406 = vpack.c.b16 %v386, %v384
      %v407 = vpack.c.b16 %v387, %v385
      %v408 = vpack.c.b16 %v390, %v388
      %v409 = vpack.c.b16 %v391, %v389
      %v410 = vpack.c.b16 %v394, %v392
      %v411 = vpack.c.b16 %v395, %v393
      %428 = vmatprep.subr.bf16.mxu0 %v411
      %429 = vmatpush1.bf16.msra.mxu0 %v410
      %430 = vmatprep.subr.bf16.mxu0 %v409
      %431 = vmatpush1.bf16.msra.mxu0 %v408
      %432 = vmatprep.subr.bf16.mxu0 %v407
      %433 = vmatpush1.bf16.msra.mxu0 %v406
      %434 = vmatprep.subr.bf16.mxu0 %v405
      %435 = vmatpush1.bf16.msra.mxu0 %v404
      %436 = vmatprep.subr.bf16.mxu0 %v403
      %437 = vmatpush1.bf16.msra.mxu0 %v402
      %438 = vmatprep.subr.bf16.mxu0 %v401
      %439 = vmatpush1.bf16.msra.mxu0 %v400
      %440 = vmatprep.subr.bf16.mxu0 %v399
      %441 = vmatpush1.bf16.msra.mxu0 %v398
      %442 = vmatprep.subr.bf16.mxu0 %v397
      %443 = vmatpush1.bf16.msra.mxu0 %v396
      %444 = vmatprep.subr.bf16.mxu0 0
      %445 = vmatpush2.bf16.msra.mxu0 0
      %446 = vmatprep.subr.bf16.mxu0 0
      %447 = vmatpush2.bf16.msra.mxu0 0
      %448 = vmatprep.subr.bf16.mxu0 0
      %449 = vmatpush2.bf16.msra.mxu0 0
      %450 = vmatprep.subr.bf16.mxu0 0
      %451 = vmatpush2.bf16.msra.mxu0 0
      %452 = vmatprep.subr.bf16.mxu0 0
      %453 = vmatpush2.bf16.msra.mxu0 0
      %454 = vmatprep.subr.bf16.mxu0 0
      %455 = vmatpush2.bf16.msra.mxu0 0
      %456 = vmatprep.subr.bf16.mxu0 0
      %457 = vmatpush2.bf16.msra.mxu0 0
      %458 = vmatprep.subr.bf16.mxu0 0
      %459 = vmatpush2.bf16.msra.mxu0 0
      %460 = vmatprep.mubr.bf16.mxu0 0
      %461 = vmatmul.mubr.bf16.gmra.mxu0 %v316
      %v462 = vpop.f32.mrf.mxu0
      %v463 = vadd.f32 0.0, %v462
      %v464 = vpop.f32.mrf.mxu0
      %v465 = vadd.f32 0.0, %v464
      %v466 = vpop.f32.mrf.mxu0
      %v467 = vadd.f32 0.0, %v466
      %v468 = vpop.f32.mrf.mxu0
      %v469 = vadd.f32 0.0, %v468
      %470 = vmatprep.mubr.bf16.mxu0 0
      %471 = vmatmul.mubr.bf16.gmra.mxu0 %v317
      %v472 = vpop.f32.mrf.mxu0
      %v473 = vadd.f32 0.0, %v472
      %v474 = vpop.f32.mrf.mxu0
      %v475 = vadd.f32 0.0, %v474
      %v476 = vpop.f32.mrf.mxu0
      %v477 = vadd.f32 0.0, %v476
      %v478 = vpop.f32.mrf.mxu0
      %v479 = vadd.f32 0.0, %v478
      %480 = vmatprep.mubr.bf16.mxu0 0
      %481 = vmatmul.mubr.bf16.gmra.mxu0 %v318
      %v482 = vpop.f32.mrf.mxu0
      %v483 = vadd.f32 0.0, %v482
      %v484 = vpop.f32.mrf.mxu0
      %v485 = vadd.f32 0.0, %v484
      %v486 = vpop.f32.mrf.mxu0
      %v487 = vadd.f32 0.0, %v486
      %v488 = vpop.f32.mrf.mxu0
      %v489 = vadd.f32 0.0, %v488
      %490 = vmatprep.mubr.bf16.mxu0 0
      %491 = vmatmul.mubr.bf16.gmra.mxu0 %v319
      %v492 = vpop.f32.mrf.mxu0
      %v493 = vadd.f32 0.0, %v492
      %v494 = vpop.f32.mrf.mxu0
      %v495 = vadd.f32 0.0, %v494
      %v496 = vpop.f32.mrf.mxu0
      %v497 = vadd.f32 0.0, %v496
      %v498 = vpop.f32.mrf.mxu0
      %v499 = vadd.f32 0.0, %v498
      %500 = vmatprep.mubr.bf16.mxu0 0
      %501 = vmatmul.mubr.bf16.gmra.mxu0 %v320
      %v502 = vpop.f32.mrf.mxu0
      %v503 = vadd.f32 0.0, %v502
      %v504 = vpop.f32.mrf.mxu0
      %v505 = vadd.f32 0.0, %v504
      %v506 = vpop.f32.mrf.mxu0
      %v507 = vadd.f32 0.0, %v506
      %v508 = vpop.f32.mrf.mxu0
      %v509 = vadd.f32 0.0, %v508
      %510 = vmatprep.mubr.bf16.mxu0 0
      %511 = vmatmul.mubr.bf16.gmra.mxu0 %v321
      %v512 = vpop.f32.mrf.mxu0
      %v513 = vadd.f32 0.0, %v512
      %v514 = vpop.f32.mrf.mxu0
      %v515 = vadd.f32 0.0, %v514
      %v516 = vpop.f32.mrf.mxu0
      %v517 = vadd.f32 0.0, %v516
      %v518 = vpop.f32.mrf.mxu0
      %v519 = vadd.f32 0.0, %v518
      %520 = vmatprep.mubr.bf16.mxu0 0
      %521 = vmatmul.mubr.bf16.gmra.mxu0 %v322
      %v522 = vpop.f32.mrf.mxu0
      %v523 = vadd.f32 0.0, %v522
      %v524 = vpop.f32.mrf.mxu0
      %v525 = vadd.f32 0.0, %v524
      %v526 = vpop.f32.mrf.mxu0
      %v527 = vadd.f32 0.0, %v526
      %v528 = vpop.f32.mrf.mxu0
      %v529 = vadd.f32 0.0, %v528
      %530 = vmatprep.mubr.bf16.mxu0 0
      %531 = vmatmul.mubr.bf16.gmra.mxu0 %v323
      %v532 = vpop.f32.mrf.mxu0
      %v533 = vadd.f32 0.0, %v532
      %v534 = vpop.f32.mrf.mxu0
      %v535 = vadd.f32 0.0, %v534
      %v536 = vpop.f32.mrf.mxu0
      %v537 = vadd.f32 0.0, %v536
      %v538 = vpop.f32.mrf.mxu0
      %v539 = vadd.f32 0.0, %v538
      %540 = vmatprep.mubr.bf16.mxu0 0
      %541 = vmatmul.mubr.bf16.gmra.mxu0 %v324
      %v542 = vpop.f32.mrf.mxu0
      %v543 = vadd.f32 0.0, %v542
      %v544 = vpop.f32.mrf.mxu0
      %v545 = vadd.f32 0.0, %v544
      %v546 = vpop.f32.mrf.mxu0
      %v547 = vadd.f32 0.0, %v546
      %v548 = vpop.f32.mrf.mxu0
      %v549 = vadd.f32 0.0, %v548
      %550 = vmatprep.mubr.bf16.mxu0 0
      %551 = vmatmul.mubr.bf16.gmra.mxu0 %v325
      %v552 = vpop.f32.mrf.mxu0
      %v553 = vadd.f32 0.0, %v552
      %v554 = vpop.f32.mrf.mxu0
      %v555 = vadd.f32 0.0, %v554
      %v556 = vpop.f32.mrf.mxu0
      %v557 = vadd.f32 0.0, %v556
      %v558 = vpop.f32.mrf.mxu0
      %v559 = vadd.f32 0.0, %v558
      %560 = vmatprep.mubr.bf16.mxu0 0
      %561 = vmatmul.mubr.bf16.gmra.mxu0 %v326
      %v562 = vpop.f32.mrf.mxu0
      %v563 = vadd.f32 0.0, %v562
      %v564 = vpop.f32.mrf.mxu0
      %v565 = vadd.f32 0.0, %v564
      %v566 = vpop.f32.mrf.mxu0
      %v567 = vadd.f32 0.0, %v566
      %v568 = vpop.f32.mrf.mxu0
      %v569 = vadd.f32 0.0, %v568
      %570 = vmatprep.mubr.bf16.mxu0 0
      %571 = vmatmul.mubr.bf16.gmra.mxu0 %v327
      %v572 = vpop.f32.mrf.mxu0
      %v573 = vadd.f32 0.0, %v572
      %v574 = vpop.f32.mrf.mxu0
      %v575 = vadd.f32 0.0, %v574
      %v576 = vpop.f32.mrf.mxu0
      %v577 = vadd.f32 0.0, %v576
      %v578 = vpop.f32.mrf.mxu0
      %v579 = vadd.f32 0.0, %v578
      %580 = vmatprep.mubr.bf16.mxu0 0
      %581 = vmatmul.mubr.bf16.gmra.mxu0 %v328
      %v582 = vpop.f32.mrf.mxu0
      %v583 = vadd.f32 0.0, %v582
      %v584 = vpop.f32.mrf.mxu0
      %v585 = vadd.f32 0.0, %v584
      %v586 = vpop.f32.mrf.mxu0
      %v587 = vadd.f32 0.0, %v586
      %v588 = vpop.f32.mrf.mxu0
      %v589 = vadd.f32 0.0, %v588
      %590 = vmatprep.mubr.bf16.mxu0 0
      %591 = vmatmul.mubr.bf16.gmra.mxu0 %v329
      %v592 = vpop.f32.mrf.mxu0
      %v593 = vadd.f32 0.0, %v592
      %v594 = vpop.f32.mrf.mxu0
      %v595 = vadd.f32 0.0, %v594
      %v596 = vpop.f32.mrf.mxu0
      %v597 = vadd.f32 0.0, %v596
      %v598 = vpop.f32.mrf.mxu0
      %v599 = vadd.f32 0.0, %v598
      %600 = vmatprep.mubr.bf16.mxu0 0
      %601 = vmatmul.mubr.bf16.gmra.mxu0 %v330
      %v602 = vpop.f32.mrf.mxu0
      %v603 = vadd.f32 0.0, %v602
      %v604 = vpop.f32.mrf.mxu0
      %v605 = vadd.f32 0.0, %v604
      %v606 = vpop.f32.mrf.mxu0
      %v607 = vadd.f32 0.0, %v606
      %v608 = vpop.f32.mrf.mxu0
      %v609 = vadd.f32 0.0, %v608
      %610 = vmatprep.mubr.bf16.mxu0 0
      %611 = vmatmul.mubr.bf16.gmra.mxu0 %v331
      %v612 = vpop.f32.mrf.mxu0
      %v613 = vadd.f32 0.0, %v612
      %v614 = vpop.f32.mrf.mxu0
      %v615 = vadd.f32 0.0, %v614
      %v616 = vpop.f32.mrf.mxu0
      %v617 = vadd.f32 0.0, %v616
      %v618 = vpop.f32.mrf.mxu0
      %v619 = vadd.f32 0.0, %v618
      %620 = vdwg.mxu0
      %v621 = vld [vmem:[%s2] sm:$0x3]
      %v623 = vlaneseq
      %v624 = vshrl.u32 %v623, 7
      %v625 = vsub.s32 0, %v624
      %v626 = vrot.slane %v621, %v625
      %v627 = vlaneseq
      %v628 = vshrl.u32 %v627, 7
      %v629 = vsub.s32 1, %v628
      %v630 = vrot.slane %v621, %v629
      %v633 = vmul.f32 %v463, %v626
      %v634 = vmul.f32 %v465, %v630
      %v635 = vmul.f32 %v467, %v626
      %v636 = vmul.f32 %v469, %v630
      %v637 = vmul.f32 %v473, %v626
      %v638 = vmul.f32 %v475, %v630
      %v639 = vmul.f32 %v477, %v626
      %v640 = vmul.f32 %v479, %v630
      %v641 = vmul.f32 %v483, %v626
      %v642 = vmul.f32 %v485, %v630
      %v643 = vmul.f32 %v487, %v626
      %v644 = vmul.f32 %v489, %v630
      %v645 = vmul.f32 %v493, %v626
      %v646 = vmul.f32 %v495, %v630
      %v647 = vmul.f32 %v497, %v626
      %v648 = vmul.f32 %v499, %v630
      %v649 = vmul.f32 %v503, %v626
      %v650 = vmul.f32 %v505, %v630
      %v651 = vmul.f32 %v507, %v626
      %v652 = vmul.f32 %v509, %v630
      %v653 = vmul.f32 %v513, %v626
      %v654 = vmul.f32 %v515, %v630
      %v655 = vmul.f32 %v517, %v626
      %v656 = vmul.f32 %v519, %v630
      %v657 = vmul.f32 %v523, %v626
      %v658 = vmul.f32 %v525, %v630
      %v659 = vmul.f32 %v527, %v626
      %v660 = vmul.f32 %v529, %v630
      %v661 = vmul.f32 %v533, %v626
      %v662 = vmul.f32 %v535, %v630
      %v663 = vmul.f32 %v537, %v626
      %v664 = vmul.f32 %v539, %v630
      %v665 = vmul.f32 %v543, %v626
      %v666 = vmul.f32 %v545, %v630
      %v667 = vmul.f32 %v547, %v626
      %v668 = vmul.f32 %v549, %v630
      %v669 = vmul.f32 %v553, %v626
      %v670 = vmul.f32 %v555, %v630
      %v671 = vmul.f32 %v557, %v626
      %v672 = vmul.f32 %v559, %v630
      %v673 = vmul.f32 %v563, %v626
      %v674 = vmul.f32 %v565, %v630
      %v675 = vmul.f32 %v567, %v626
      %v676 = vmul.f32 %v569, %v630
      %v677 = vmul.f32 %v573, %v626
      %v678 = vmul.f32 %v575, %v630
      %v679 = vmul.f32 %v577, %v626
      %v680 = vmul.f32 %v579, %v630
      %v681 = vmul.f32 %v583, %v626
      %v682 = vmul.f32 %v585, %v630
      %v683 = vmul.f32 %v587, %v626
      %v684 = vmul.f32 %v589, %v630
      %v685 = vmul.f32 %v593, %v626
      %v686 = vmul.f32 %v595, %v630
      %v687 = vmul.f32 %v597, %v626
      %v688 = vmul.f32 %v599, %v630
      %v689 = vmul.f32 %v603, %v626
      %v690 = vmul.f32 %v605, %v630
      %v691 = vmul.f32 %v607, %v626
      %v692 = vmul.f32 %v609, %v630
      %v693 = vmul.f32 %v613, %v626
      %v694 = vmul.f32 %v615, %v630
      %v695 = vmul.f32 %v617, %v626
      %v696 = vmul.f32 %v619, %v630
      %v697 = vld [vmem:[%s3] sm:$0x3]
      %v699 = vlaneseq
      %v700 = vshrl.u32 %v699, 7
      %v701 = vsub.s32 0, %v700
      %v702 = vrot.slane %v697, %v701
      %v703 = vlaneseq
      %v704 = vshrl.u32 %v703, 7
      %v705 = vsub.s32 1, %v704
      %v706 = vrot.slane %v697, %v705
      %v709 = vadd.f32 %v633, %v702
      %v710 = vadd.f32 %v634, %v706
      %v711 = vadd.f32 %v635, %v702
      %v712 = vadd.f32 %v636, %v706
      %v713 = vadd.f32 %v637, %v702
      %v714 = vadd.f32 %v638, %v706
      %v715 = vadd.f32 %v639, %v702
      %v716 = vadd.f32 %v640, %v706
      %v717 = vadd.f32 %v641, %v702
      %v718 = vadd.f32 %v642, %v706
      %v719 = vadd.f32 %v643, %v702
      %v720 = vadd.f32 %v644, %v706
      %v721 = vadd.f32 %v645, %v702
      %v722 = vadd.f32 %v646, %v706
      %v723 = vadd.f32 %v647, %v702
      %v724 = vadd.f32 %v648, %v706
      %v725 = vadd.f32 %v649, %v702
      %v726 = vadd.f32 %v650, %v706
      %v727 = vadd.f32 %v651, %v702
      %v728 = vadd.f32 %v652, %v706
      %v729 = vadd.f32 %v653, %v702
      %v730 = vadd.f32 %v654, %v706
      %v731 = vadd.f32 %v655, %v702
      %v732 = vadd.f32 %v656, %v706
      %v733 = vadd.f32 %v657, %v702
      %v734 = vadd.f32 %v658, %v706
      %v735 = vadd.f32 %v659, %v702
      %v736 = vadd.f32 %v660, %v706
      %v737 = vadd.f32 %v661, %v702
      %v738 = vadd.f32 %v662, %v706
      %v739 = vadd.f32 %v663, %v702
      %v740 = vadd.f32 %v664, %v706
      %v741 = vadd.f32 %v665, %v702
      %v742 = vadd.f32 %v666, %v706
      %v743 = vadd.f32 %v667, %v702
      %v744 = vadd.f32 %v668, %v706
      %v745 = vadd.f32 %v669, %v702
      %v746 = vadd.f32 %v670, %v706
      %v747 = vadd.f32 %v671, %v702
      %v748 = vadd.f32 %v672, %v706
      %v749 = vadd.f32 %v673, %v702
      %v750 = vadd.f32 %v674, %v706
      %v751 = vadd.f32 %v675, %v702
      %v752 = vadd.f32 %v676, %v706
      %v753 = vadd.f32 %v677, %v702
      %v754 = vadd.f32 %v678, %v706
      %v755 = vadd.f32 %v679, %v702
      %v756 = vadd.f32 %v680, %v706
      %v757 = vadd.f32 %v681, %v702
      %v758 = vadd.f32 %v682, %v706
      %v759 = vadd.f32 %v683, %v702
      %v760 = vadd.f32 %v684, %v706
      %v761 = vadd.f32 %v685, %v702
      %v762 = vadd.f32 %v686, %v706
      %v763 = vadd.f32 %v687, %v702
      %v764 = vadd.f32 %v688, %v706
      %v765 = vadd.f32 %v689, %v702
      %v766 = vadd.f32 %v690, %v706
      %v767 = vadd.f32 %v691, %v702
      %v768 = vadd.f32 %v692, %v706
      %v769 = vadd.f32 %v693, %v702
      %v770 = vadd.f32 %v694, %v706
      %v771 = vadd.f32 %v695, %v702
      %v772 = vadd.f32 %v696, %v706
      %v773 = vmax.f32 %v709, 0.0
      %v774 = vmax.f32 %v710, 0.0
      %v775 = vmax.f32 %v711, 0.0
      %v776 = vmax.f32 %v712, 0.0
      %v777 = vmax.f32 %v713, 0.0
      %v778 = vmax.f32 %v714, 0.0
      %v779 = vmax.f32 %v715, 0.0
      %v780 = vmax.f32 %v716, 0.0
      %v781 = vmax.f32 %v717, 0.0
      %v782 = vmax.f32 %v718, 0.0
      %v783 = vmax.f32 %v719, 0.0
      %v784 = vmax.f32 %v720, 0.0
      %v785 = vmax.f32 %v721, 0.0
      %v786 = vmax.f32 %v722, 0.0
      %v787 = vmax.f32 %v723, 0.0
      %v788 = vmax.f32 %v724, 0.0
      %v789 = vmax.f32 %v725, 0.0
      %v790 = vmax.f32 %v726, 0.0
      %v791 = vmax.f32 %v727, 0.0
      %v792 = vmax.f32 %v728, 0.0
      %v793 = vmax.f32 %v729, 0.0
      %v794 = vmax.f32 %v730, 0.0
      %v795 = vmax.f32 %v731, 0.0
      %v796 = vmax.f32 %v732, 0.0
      %v797 = vmax.f32 %v733, 0.0
      %v798 = vmax.f32 %v734, 0.0
      %v799 = vmax.f32 %v735, 0.0
      %v800 = vmax.f32 %v736, 0.0
      %v801 = vmax.f32 %v737, 0.0
      %v802 = vmax.f32 %v738, 0.0
      %v803 = vmax.f32 %v739, 0.0
      %v804 = vmax.f32 %v740, 0.0
      %v805 = vmax.f32 %v741, 0.0
      %v806 = vmax.f32 %v742, 0.0
      %v807 = vmax.f32 %v743, 0.0
      %v808 = vmax.f32 %v744, 0.0
      %v809 = vmax.f32 %v745, 0.0
      %v810 = vmax.f32 %v746, 0.0
      %v811 = vmax.f32 %v747, 0.0
      %v812 = vmax.f32 %v748, 0.0
      %v813 = vmax.f32 %v749, 0.0
      %v814 = vmax.f32 %v750, 0.0
      %v815 = vmax.f32 %v751, 0.0
      %v816 = vmax.f32 %v752, 0.0
      %v817 = vmax.f32 %v753, 0.0
      %v818 = vmax.f32 %v754, 0.0
      %v819 = vmax.f32 %v755, 0.0
      %v820 = vmax.f32 %v756, 0.0
      %v821 = vmax.f32 %v757, 0.0
      %v822 = vmax.f32 %v758, 0.0
      %v823 = vmax.f32 %v759, 0.0
      %v824 = vmax.f32 %v760, 0.0
      %v825 = vmax.f32 %v761, 0.0
      %v826 = vmax.f32 %v762, 0.0
      %v827 = vmax.f32 %v763, 0.0
      %v828 = vmax.f32 %v764, 0.0
      %v829 = vmax.f32 %v765, 0.0
      %v830 = vmax.f32 %v766, 0.0
      %v831 = vmax.f32 %v767, 0.0
      %v832 = vmax.f32 %v768, 0.0
      %v833 = vmax.f32 %v769, 0.0
      %v834 = vmax.f32 %v770, 0.0
      %v835 = vmax.f32 %v771, 0.0
      %v836 = vmax.f32 %v772, 0.0
      %v837 = vmin.f32 %v773, 6.0
      %v838 = vmin.f32 %v774, 6.0
      %v839 = vmin.f32 %v775, 6.0
      %v840 = vmin.f32 %v776, 6.0
      %v841 = vmin.f32 %v777, 6.0
      %v842 = vmin.f32 %v778, 6.0
      %v843 = vmin.f32 %v779, 6.0
      %v844 = vmin.f32 %v780, 6.0
      %v845 = vmin.f32 %v781, 6.0
      %v846 = vmin.f32 %v782, 6.0
      %v847 = vmin.f32 %v783, 6.0
      %v848 = vmin.f32 %v784, 6.0
      %v849 = vmin.f32 %v785, 6.0
      %v850 = vmin.f32 %v786, 6.0
      %v851 = vmin.f32 %v787, 6.0
      %v852 = vmin.f32 %v788, 6.0
      %v853 = vmin.f32 %v789, 6.0
      %v854 = vmin.f32 %v790, 6.0
      %v855 = vmin.f32 %v791, 6.0
      %v856 = vmin.f32 %v792, 6.0
      %v857 = vmin.f32 %v793, 6.0
      %v858 = vmin.f32 %v794, 6.0
      %v859 = vmin.f32 %v795, 6.0
      %v860 = vmin.f32 %v796, 6.0
      %v861 = vmin.f32 %v797, 6.0
      %v862 = vmin.f32 %v798, 6.0
      %v863 = vmin.f32 %v799, 6.0
      %v864 = vmin.f32 %v800, 6.0
      %v865 = vmin.f32 %v801, 6.0
      %v866 = vmin.f32 %v802, 6.0
      %v867 = vmin.f32 %v803, 6.0
      %v868 = vmin.f32 %v804, 6.0
      %v869 = vmin.f32 %v805, 6.0
      %v870 = vmin.f32 %v806, 6.0
      %v871 = vmin.f32 %v807, 6.0
      %v872 = vmin.f32 %v808, 6.0
      %v873 = vmin.f32 %v809, 6.0
      %v874 = vmin.f32 %v810, 6.0
      %v875 = vmin.f32 %v811, 6.0
      %v876 = vmin.f32 %v812, 6.0
      %v877 = vmin.f32 %v813, 6.0
      %v878 = vmin.f32 %v814, 6.0
      %v879 = vmin.f32 %v815, 6.0
      %v880 = vmin.f32 %v816, 6.0
      %v881 = vmin.f32 %v817, 6.0
      %v882 = vmin.f32 %v818, 6.0
      %v883 = vmin.f32 %v819, 6.0
      %v884 = vmin.f32 %v820, 6.0
      %v885 = vmin.f32 %v821, 6.0
      %v886 = vmin.f32 %v822, 6.0
      %v887 = vmin.f32 %v823, 6.0
      %v888 = vmin.f32 %v824, 6.0
      %v889 = vmin.f32 %v825, 6.0
      %v890 = vmin.f32 %v826, 6.0
      %v891 = vmin.f32 %v827, 6.0
      %v892 = vmin.f32 %v828, 6.0
      %v893 = vmin.f32 %v829, 6.0
      %v894 = vmin.f32 %v830, 6.0
      %v895 = vmin.f32 %v831, 6.0
      %v896 = vmin.f32 %v832, 6.0
      %v897 = vmin.f32 %v833, 6.0
      %v898 = vmin.f32 %v834, 6.0
      %v899 = vmin.f32 %v835, 6.0
      %v900 = vmin.f32 %v836, 6.0
      %v901 = vpack.c.bf16 %v839, %v837
      %v902 = vpack.c.bf16 %v840, %v838
      %v903 = vpack.c.bf16 %v843, %v841
      %v904 = vpack.c.bf16 %v844, %v842
      %v905 = vpack.c.bf16 %v847, %v845
      %v906 = vpack.c.bf16 %v848, %v846
      %v907 = vpack.c.bf16 %v851, %v849
      %v908 = vpack.c.bf16 %v852, %v850
      %v909 = vpack.c.bf16 %v855, %v853
      %v910 = vpack.c.bf16 %v856, %v854
      %v911 = vpack.c.bf16 %v859, %v857
      %v912 = vpack.c.bf16 %v860, %v858
      %v913 = vpack.c.bf16 %v863, %v861
      %v914 = vpack.c.bf16 %v864, %v862
      %v915 = vpack.c.bf16 %v867, %v865
      %v916 = vpack.c.bf16 %v868, %v866
      %v917 = vpack.c.bf16 %v871, %v869
      %v918 = vpack.c.bf16 %v872, %v870
      %v919 = vpack.c.bf16 %v875, %v873
      %v920 = vpack.c.bf16 %v876, %v874
      %v921 = vpack.c.bf16 %v879, %v877
      %v922 = vpack.c.bf16 %v880, %v878
      %v923 = vpack.c.bf16 %v883, %v881
      %v924 = vpack.c.bf16 %v884, %v882
      %v925 = vpack.c.bf16 %v887, %v885
      %v926 = vpack.c.bf16 %v888, %v886
      %v927 = vpack.c.bf16 %v891, %v889
      %v928 = vpack.c.bf16 %v892, %v890
      %v929 = vpack.c.bf16 %v895, %v893
      %v930 = vpack.c.bf16 %v896, %v894
      %v931 = vpack.c.bf16 %v899, %v897
      %v932 = vpack.c.bf16 %v900, %v898
      %v965 = vunpack.c.l.b16 %v901
      %v966 = vunpack.c.l.b16 %v902
      %v967 = vunpack.c.h.b16 %v901
      %v968 = vunpack.c.h.b16 %v902
      %v969 = vunpack.c.l.b16 %v903
      %v970 = vunpack.c.l.b16 %v904
      %v971 = vunpack.c.h.b16 %v903
      %v972 = vunpack.c.h.b16 %v904
      %v973 = vunpack.c.l.b16 %v905
      %v974 = vunpack.c.l.b16 %v906
      %v975 = vunpack.c.h.b16 %v905
      %v976 = vunpack.c.h.b16 %v906
      %v977 = vunpack.c.l.b16 %v907
      %v978 = vunpack.c.l.b16 %v908
      %v979 = vunpack.c.h.b16 %v907
      %v980 = vunpack.c.h.b16 %v908
      %v981 = vunpack.c.l.b16 %v909
      %v982 = vunpack.c.l.b16 %v910
      %v983 = vunpack.c.h.b16 %v909
      %v984 = vunpack.c.h.b16 %v910
      %v985 = vunpack.c.l.b16 %v911
      %v986 = vunpack.c.l.b16 %v912
      %v987 = vunpack.c.h.b16 %v911
      %v988 = vunpack.c.h.b16 %v912
      %v989 = vunpack.c.l.b16 %v913
      %v990 = vunpack.c.l.b16 %v914
      %v991 = vunpack.c.h.b16 %v913
      %v992 = vunpack.c.h.b16 %v914
      %v993 = vunpack.c.l.b16 %v915
      %v994 = vunpack.c.l.b16 %v916
      %v995 = vunpack.c.h.b16 %v915
      %v996 = vunpack.c.h.b16 %v916
      %v997 = vunpack.c.l.b16 %v917
      %v998 = vunpack.c.l.b16 %v918
      %v999 = vunpack.c.h.b16 %v917
      %v1000 = vunpack.c.h.b16 %v918
      %v1001 = vunpack.c.l.b16 %v919
      %v1002 = vunpack.c.l.b16 %v920
      %v1003 = vunpack.c.h.b16 %v919
      %v1004 = vunpack.c.h.b16 %v920
      %v1005 = vunpack.c.l.b16 %v921
      %v1006 = vunpack.c.l.b16 %v922
      %v1007 = vunpack.c.h.b16 %v921
      %v1008 = vunpack.c.h.b16 %v922
      %v1009 = vunpack.c.l.b16 %v923
      %v1010 = vunpack.c.l.b16 %v924
      %v1011 = vunpack.c.h.b16 %v923
      %v1012 = vunpack.c.h.b16 %v924
      %v1013 = vunpack.c.l.b16 %v925
      %v1014 = vunpack.c.l.b16 %v926
      %v1015 = vunpack.c.h.b16 %v925
      %v1016 = vunpack.c.h.b16 %v926
      %v1017 = vunpack.c.l.b16 %v927
      %v1018 = vunpack.c.l.b16 %v928
      %v1019 = vunpack.c.h.b16 %v927
      %v1020 = vunpack.c.h.b16 %v928
      %v1021 = vunpack.c.l.b16 %v929
      %v1022 = vunpack.c.l.b16 %v930
      %v1023 = vunpack.c.h.b16 %v929
      %v1024 = vunpack.c.h.b16 %v930
      %v1025 = vunpack.c.l.b16 %v931
      %v1026 = vunpack.c.l.b16 %v932
      %v1027 = vunpack.c.h.b16 %v931
      %v1028 = vunpack.c.h.b16 %v932
      %v1029 = vpack.c.b16 %v966, %v965
      %v1030 = vpack.c.b16 %v968, %v967
      %v1031 = vpack.c.b16 %v970, %v969
      %v1032 = vpack.c.b16 %v972, %v971
      %v1033 = vpack.c.b16 %v974, %v973
      %v1034 = vpack.c.b16 %v976, %v975
      %v1035 = vpack.c.b16 %v978, %v977
      %v1036 = vpack.c.b16 %v980, %v979
      %v1037 = vpack.c.b16 %v982, %v981
      %v1038 = vpack.c.b16 %v984, %v983
      %v1039 = vpack.c.b16 %v986, %v985
      %v1040 = vpack.c.b16 %v988, %v987
      %v1041 = vpack.c.b16 %v990, %v989
      %v1042 = vpack.c.b16 %v992, %v991
      %v1043 = vpack.c.b16 %v994, %v993
      %v1044 = vpack.c.b16 %v996, %v995
      %v1045 = vpack.c.b16 %v998, %v997
      %v1046 = vpack.c.b16 %v1000, %v999
      %v1047 = vpack.c.b16 %v1002, %v1001
      %v1048 = vpack.c.b16 %v1004, %v1003
      %v1049 = vpack.c.b16 %v1006, %v1005
      %v1050 = vpack.c.b16 %v1008, %v1007
      %v1051 = vpack.c.b16 %v1010, %v1009
      %v1052 = vpack.c.b16 %v1012, %v1011
      %v1053 = vpack.c.b16 %v1014, %v1013
      %v1054 = vpack.c.b16 %v1016, %v1015
      %v1055 = vpack.c.b16 %v1018, %v1017
      %v1056 = vpack.c.b16 %v1020, %v1019
      %v1057 = vpack.c.b16 %v1022, %v1021
      %v1058 = vpack.c.b16 %v1024, %v1023
      %v1059 = vpack.c.b16 %v1026, %v1025
      %v1060 = vpack.c.b16 %v1028, %v1027
      %1093 = vst [vmem:[%s201] sm:$0xff] %v1029
      %1094 = vst [vmem:[%s201 + $0x8] sm:$0xff] %v1030
      %1095 = vst [vmem:[%s201 + $0x10] sm:$0xff] %v1031
      %1096 = vst [vmem:[%s201 + $0x18] sm:$0xff] %v1032
      %1097 = vst [vmem:[%s201 + $0x20] sm:$0xff] %v1033
      %1098 = vst [vmem:[%s201 + $0x28] sm:$0xff] %v1034
      %1099 = vst [vmem:[%s201 + $0x30] sm:$0xff] %v1035
      %1100 = vst [vmem:[%s201 + $0x38] sm:$0xff] %v1036
      %1101 = vst [vmem:[%s201 + $0x40] sm:$0xff] %v1037
      %1102 = vst [vmem:[%s201 + $0x48] sm:$0xff] %v1038
      %1103 = vst [vmem:[%s201 + $0x50] sm:$0xff] %v1039
      %1104 = vst [vmem:[%s201 + $0x58] sm:$0xff] %v1040
      %1105 = vst [vmem:[%s201 + $0x60] sm:$0xff] %v1041
      %1106 = vst [vmem:[%s201 + $0x68] sm:$0xff] %v1042
      %1107 = vst [vmem:[%s201 + $0x70] sm:$0xff] %v1043
      %1108 = vst [vmem:[%s201 + $0x78] sm:$0xff] %v1044
      %1109 = vst [vmem:[%s201 + $0x80] sm:$0xff] %v1045
      %1110 = vst [vmem:[%s201 + $0x88] sm:$0xff] %v1046
      %1111 = vst [vmem:[%s201 + $0x90] sm:$0xff] %v1047
      %1112 = vst [vmem:[%s201 + $0x98] sm:$0xff] %v1048
      %1113 = vst [vmem:[%s201 + $0xa0] sm:$0xff] %v1049
      %1114 = vst [vmem:[%s201 + $0xa8] sm:$0xff] %v1050
      %1115 = vst [vmem:[%s201 + $0xb0] sm:$0xff] %v1051
      %1116 = vst [vmem:[%s201 + $0xb8] sm:$0xff] %v1052
      %1117 = vst [vmem:[%s201 + $0xc0] sm:$0xff] %v1053
      %1118 = vst [vmem:[%s201 + $0xc8] sm:$0xff] %v1054
      %1119 = vst [vmem:[%s201 + $0xd0] sm:$0xff] %v1055
      %1120 = vst [vmem:[%s201 + $0xd8] sm:$0xff] %v1056
      %1121 = vst [vmem:[%s201 + $0xe0] sm:$0xff] %v1057
      %1122 = vst [vmem:[%s201 + $0xe8] sm:$0xff] %v1058
      %1123 = vst [vmem:[%s201 + $0xf0] sm:$0xff] %v1059
      %1124 = vst [vmem:[%s201 + $0xf8] sm:$0xff] %v1060
      %s1125 = smul.u32 32, %s15
      %p1126 = scmp.lt.s32.totalorder %s1125, 63
      %s1127 = scalar_select %p1126, %s1125, 63
      %s1128 = smul.addr %s1127, 2
      %s1129 = smul.addr %s1128, 4
      %s1130 = scalar_lea.vmem %s4, %s1129
      // Predicated region
      $region37: #{_lambda_.3} parent=35 // pred_check
        %p1131 = pneg %p122
      $region38: #{_lambda_.3} parent=35 // pred_check_branch
        %1133 = sbr.rel (%p1131) target = $region40
      $region39: #{_lambda_.3} parent=35 // pred_region
        %s1134 = smul.u32 32, %s15
      $region40: #{_lambda_.3} parent=35 // pred_fallthru
        _
    $region36: #{_lambda_.3} parent=5 // pred_fallthru
      _
    %p1135 = scmp.le.s32.totalorder 2, %s10
    // Predicated region
    $region41: #{_lambda_.3} parent=5 // pred_check
      %p1136 = pneg %p1135
    $region42: #{_lambda_.3} parent=5 // pred_check_branch
      %1138 = sbr.rel (%p1136) target = $region44
    $region43: #{_lambda_.3} parent=5 // pred_region
      %s1139 = ssub.s32 %s10, 2
      // Predicated region
      $region45: #{_lambda_.3} parent=43 // pred_check
        %p1140 = pneg %p128
      $region46: #{_lambda_.3} parent=43 // pred_check_branch
        %1142 = sbr.rel (%p1140) target = $region48
      $region47: #{_lambda_.3} parent=43 // pred_region
        %s1143 = smul.u32 32, %s16
        %p1144 = scmp.lt.s32.totalorder %s1143, 63
        %s1145 = scalar_select %p1144, %s1143, 63
        %s1146 = smul.addr %s1145, 2
        %s1147 = smul.addr %s1146, 4
        %s1148 = scalar_lea.vmem %s4, %s1147
      $region48: #{_lambda_.3} parent=43 // pred_fallthru
        _
    $region44: #{_lambda_.3} parent=5 // pred_fallthru
      _
  $region6: #{_lambda_.3} parent=0 // loop_footer
    %s14 = sadd.s32 1, %s10
  $region7: #{_lambda_.3} parent=0 // loop_footer_branch
    %9 = sbr.rel target = $region3
  $region8: #{_lambda_.3} parent=0 // loop_exit
    _

// kernel: _lambda_.5
$region0: #{_lambda_.5}
  #allocation0 [shape = 'u32[]', space=smem, size = 0x4, offset = 0x4, fixed_abs, tag = 'smem constant byte address 0x4 - core index']
  #allocation1 [shape = 'u32[144,128]{1,0:T(1,128)}', space=vmem, size = 0x12000, scoped, tag = 'internal scratch']
  %s0 = inlined_call_operand.vmem [shape: bf16[512,256], index: 0, kind: input, shape index: {}]
  %s1 = inlined_call_operand.vmem [shape: bf16[256,128], index: 1, kind: input, shape index: {}]
  %s2 = inlined_call_operand.vmem [shape: f32[1,128], index: 2, kind: input, shape index: {}]
  %s3 = inlined_call_operand.vmem [shape: f32[1,128], index: 3, kind: input, shape index: {}]
  %s4 = inlined_call_operand.vmem [shape: bf16[512,128], index: 4, kind: input, shape index: {}]
  %s5 = inlined_call_operand.vmem [shape: f32[512,128], index: 5, kind: output, shape index: {}]
  %s6 = sld [smem:[#allocation0]]
  $region53: #{_lambda_.5} parent=0
    _
  %s8 = ssub.s32 1, %s6
  %s9 = scalar_select 0, %s8, %s6
  loop: start=0, step=1, limit=4
  $region2: #{_lambda_.5} parent=0 // loop_pre_header
    _
  $region3: #{_lambda_.5} parent=0 // loop_header
    %s11 = sphi 0, %s15
    %p12 = scmp.ge.s32.totalorder %s11, 4
    %s21 = sphi 0, %s23
    %s24 = sphi 0, %s21
    %s25 = sphi 0, %s24
    %s41 = sphi 0, %s25
    %s45 = sphi 0, %s45
    %s47 = sphi 0, %s45
    %s48 = sphi 0, %s47
    %s62 = sphi 0, %s48
    %s66 = sphi 0, %s66
    %s68 = sphi 0, %s66
    %s69 = sphi 0, %s68
    %s83 = sphi 0, %s69
    %s87 = sphi 0, %s87
    %s89 = sphi 0, %s87
    %s90 = sphi 0, %s89
    %s104 = sphi 0, %s90
    %s110 = sphi 0, %s112
    %s113 = sphi 0, %s110
    %s114 = sphi 0, %s113
    %s130 = sphi 0, %s114
    %s136 = sphi 0, %s138
    %s139 = sphi 0, %s136
    %s140 = sphi 0, %s139
    %s156 = sphi 0, %s140
  $region4: #{_lambda_.5} parent=0 // loop_header_branch
    %14 = sbr.rel (%p12) target = $region8
  $region5: #{_lambda_.5} parent=0 // loop_body
    %s16 = ssub.s32 %s11, 1
    %s17 = ssub.s32 %s11, 2
    %s18 = sadd.s32 %s11, 1
    %s19 = ssub.s32 %s11, %s18
    %p20 = scmp.eq.s32.totalorder %s19, 0
    %s22 = sadd.s32 %s21, 1
    %s23 = scalar_select %p20, %s21, %s22
    %p26 = pneg %p20
    %p27 = scmp.eq.s32.totalorder %s11, 1
    %p28 = por %p26, %p27
    %p29 = scmp.ne.s32.totalorder %s21, %s24
    %p30 = scmp.eq.s32.totalorder %s11, 0
    %p31 = por %p29, %p30
    %p32 = scmp.ne.s32.totalorder %s21, %s24
    %p33 = scmp.eq.s32.totalorder %s16, 1
    %p34 = por %p32, %p33
    %p35 = scmp.ne.s32.totalorder %s24, %s25
    %p36 = scmp.eq.s32.totalorder %s16, 0
    %p37 = por %p35, %p36
    %p38 = scmp.ne.s32.totalorder %s24, %s25
    %p39 = scmp.eq.s32.totalorder %s17, 1
    %p40 = por %p38, %p39
    %p42 = scmp.ne.s32.totalorder %s25, %s41
    %p43 = scmp.eq.s32.totalorder %s17, 0
    %p44 = por %p42, %p43
    %s46 = sadd.s32 %s45, 1
    %p49 = scmp.eq.s32.totalorder %s11, 1
    %p50 = scmp.ne.s32.totalorder %s45, %s47
    %p51 = scmp.eq.s32.totalorder %s11, 0
    %p52 = por %p50, %p51
    %p53 = scmp.ne.s32.totalorder %s45, %s47
    %p54 = scmp.eq.s32.totalorder %s16, 1
    %p55 = por %p53, %p54
    %p56 = scmp.ne.s32.totalorder %s47, %s48
    %p57 = scmp.eq.s32.totalorder %s16, 0
    %p58 = por %p56, %p57
    %p59 = scmp.ne.s32.totalorder %s47, %s48
    %p60 = scmp.eq.s32.totalorder %s17, 1
    %p61 = por %p59, %p60
    %p63 = scmp.ne.s32.totalorder %s48, %s62
    %p64 = scmp.eq.s32.totalorder %s17, 0
    %p65 = por %p63, %p64
    %s67 = sadd.s32 %s66, 1
    %p70 = scmp.eq.s32.totalorder %s11, 1
    %p71 = scmp.ne.s32.totalorder %s66, %s68
    %p72 = scmp.eq.s32.totalorder %s11, 0
    %p73 = por %p71, %p72
    %p74 = scmp.ne.s32.totalorder %s66, %s68
    %p75 = scmp.eq.s32.totalorder %s16, 1
    %p76 = por %p74, %p75
    %p77 = scmp.ne.s32.totalorder %s68, %s69
    %p78 = scmp.eq.s32.totalorder %s16, 0
    %p79 = por %p77, %p78
    %p80 = scmp.ne.s32.totalorder %s68, %s69
    %p81 = scmp.eq.s32.totalorder %s17, 1
    %p82 = por %p80, %p81
    %p84 = scmp.ne.s32.totalorder %s69, %s83
    %p85 = scmp.eq.s32.totalorder %s17, 0
    %p86 = por %p84, %p85
    %s88 = sadd.s32 %s87, 1
    %p91 = scmp.eq.s32.totalorder %s11, 1
    %p92 = scmp.ne.s32.totalorder %s87, %s89
    %p93 = scmp.eq.s32.totalorder %s11, 0
    %p94 = por %p92, %p93
    %p95 = scmp.ne.s32.totalorder %s87, %s89
    %p96 = scmp.eq.s32.totalorder %s16, 1
    %p97 = por %p95, %p96
    %p98 = scmp.ne.s32.totalorder %s89, %s90
    %p99 = scmp.eq.s32.totalorder %s16, 0
    %p100 = por %p98, %p99
    %p101 = scmp.ne.s32.totalorder %s89, %s90
    %p102 = scmp.eq.s32.totalorder %s17, 1
    %p103 = por %p101, %p102
    %p105 = scmp.ne.s32.totalorder %s90, %s104
    %p106 = scmp.eq.s32.totalorder %s17, 0
    %p107 = por %p105, %p106
    %s108 = ssub.s32 %s11, %s18
    %p109 = scmp.eq.s32.totalorder %s108, 0
    %s111 = sadd.s32 %s110, 1
    %s112 = scalar_select %p109, %s110, %s111
    %p115 = pneg %p109
    %p116 = scmp.eq.s32.totalorder %s11, 1
    %p117 = por %p115, %p116
    %p118 = scmp.ne.s32.totalorder %s110, %s113
    %p119 = scmp.eq.s32.totalorder %s11, 0
    %p120 = por %p118, %p119
    %p121 = scmp.ne.s32.totalorder %s110, %s113
    %p122 = scmp.eq.s32.totalorder %s16, 1
    %p123 = por %p121, %p122
    %p124 = scmp.ne.s32.totalorder %s113, %s114
    %p125 = scmp.eq.s32.totalorder %s16, 0
    %p126 = por %p124, %p125
    %p127 = scmp.ne.s32.totalorder %s113, %s114
    %p128 = scmp.eq.s32.totalorder %s17, 1
    %p129 = por %p127, %p128
    %p131 = scmp.ne.s32.totalorder %s114, %s130
    %p132 = scmp.eq.s32.totalorder %s17, 0
    %p133 = por %p131, %p132
    %s134 = ssub.s32 %s11, %s18
    %p135 = scmp.eq.s32.totalorder %s134, 0
    %s137 = sadd.s32 %s136, 1
    %s138 = scalar_select %p135, %s136, %s137
    %p141 = pneg %p135
    %p142 = scmp.eq.s32.totalorder %s11, 1
    %p143 = por %p141, %p142
    %p144 = scmp.ne.s32.totalorder %s136, %s139
    %p145 = scmp.eq.s32.totalorder %s11, 0
    %p146 = por %p144, %p145
    %p147 = scmp.ne.s32.totalorder %s136, %s139
    %p148 = scmp.eq.s32.totalorder %s16, 1
    %p149 = por %p147, %p148
    %p150 = scmp.ne.s32.totalorder %s139, %s140
    %p151 = scmp.eq.s32.totalorder %s16, 0
    %p152 = por %p150, %p151
    %p153 = scmp.ne.s32.totalorder %s139, %s140
    %p154 = scmp.eq.s32.totalorder %s17, 1
    %p155 = por %p153, %p154
    %p157 = scmp.ne.s32.totalorder %s140, %s156
    %p158 = scmp.eq.s32.totalorder %s17, 0
    %p159 = por %p157, %p158
    %p160 = scmp.le.s32.totalorder 1, %s11
    %p161 = scmp.lt.s32.totalorder %s11, 3
    %p162 = pnand %p160, %p161
    %p163 = pneg %p162
    // Predicated region
    $region9: #{_lambda_.5} parent=5 // pred_check
      _
    $region10: #{_lambda_.5} parent=5 // pred_check_branch
      %165 = sbr.rel (%p162) target = $region12
    $region11: #{_lambda_.5} parent=5 // pred_region
      %s166 = ssub.s32 %s11, 1
      // Predicated region
      $region13: #{_lambda_.5} parent=11 // pred_check
        %p167 = pneg %p58
      $region14: #{_lambda_.5} parent=11 // pred_check_branch
        %169 = sbr.rel (%p167) target = $region16
      $region15: #{_lambda_.5} parent=11 // pred_region
        _
      $region16: #{_lambda_.5} parent=11 // pred_fallthru
        _
      // Predicated region
      $region17: #{_lambda_.5} parent=11 // pred_check
        %p170 = pneg %p79
      $region18: #{_lambda_.5} parent=11 // pred_check_branch
        %172 = sbr.rel (%p170) target = $region20
      $region19: #{_lambda_.5} parent=11 // pred_region
        _
      $region20: #{_lambda_.5} parent=11 // pred_fallthru
        _
      // Predicated region
      $region21: #{_lambda_.5} parent=11 // pred_check
        %p173 = pneg %p100
      $region22: #{_lambda_.5} parent=11 // pred_check_branch
        %175 = sbr.rel (%p173) target = $region24
      $region23: #{_lambda_.5} parent=11 // pred_region
        _
      $region24: #{_lambda_.5} parent=11 // pred_fallthru
        _
    $region12: #{_lambda_.5} parent=5 // pred_fallthru
      _
    %p176 = scmp.lt.s32.totalorder %s11, 2
    // Predicated region
    $region25: #{_lambda_.5} parent=5 // pred_check
      %p177 = pneg %p176
    $region26: #{_lambda_.5} parent=5 // pred_check_branch
      %179 = sbr.rel (%p177) target = $region28
    $region27: #{_lambda_.5} parent=5 // pred_region
      // Predicated region
      $region29: #{_lambda_.5} parent=27 // pred_check
        %p180 = pneg %p31
      $region30: #{_lambda_.5} parent=27 // pred_check_branch
        %182 = sbr.rel (%p180) target = $region32
      $region31: #{_lambda_.5} parent=27 // pred_region
        %s183 = smul.u32 32, %s11
        %p184 = scmp.lt.s32.totalorder %s183, 63
        %s185 = scalar_select %p184, %s183, 63
        %s186 = smul.addr %s185, 2
        %s187 = smul.addr %s186, 4
        %s188 = scalar_lea.vmem %s0, %s187
        %s189 = smul.u32 32, %s11
      $region32: #{_lambda_.5} parent=27 // pred_fallthru
        _
      // Predicated region
      $region33: #{_lambda_.5} parent=27 // pred_check
        %p190 = pneg %p120
      $region34: #{_lambda_.5} parent=27 // pred_check_branch
        %192 = sbr.rel (%p190) target = $region36
      $region35: #{_lambda_.5} parent=27 // pred_region
        %s193 = smul.u32 32, %s11
        %p194 = scmp.lt.s32.totalorder %s193, 63
        %s195 = scalar_select %p194, %s193, 63
        %s196 = smul.addr %s195, 4
        %s197 = scalar_lea.vmem %s4, %s196
        %s198 = smul.u32 32, %s11
      $region36: #{_lambda_.5} parent=27 // pred_fallthru
        _
    $region28: #{_lambda_.5} parent=5 // pred_fallthru
      _
    %p199 = scmp.le.s32.totalorder 1, %s11
    %p200 = scmp.lt.s32.totalorder %s11, 3
    %p201 = pnand %p199, %p200
    %p202 = pneg %p201
    // Predicated region
    $region37: #{_lambda_.5} parent=5 // pred_check
      _
    $region38: #{_lambda_.5} parent=5 // pred_check_branch
      %204 = sbr.rel (%p201) target = $region40
    $region39: #{_lambda_.5} parent=5 // pred_region
      %s205 = ssub.s32 %s11, 1
      %s206 = smul.u32 32, %s16
      %p207 = scmp.lt.s32.totalorder %s206, 63
      %s208 = scalar_select %p207, %s206, 63
      %s209 = smul.addr %s208, 2
      %s210 = smul.addr %s209, 4
      %s211 = scalar_lea.vmem %s0, %s210
      %p212 = pneg %p37
      %p213 = pneg %p34
      %p214 = pneg %p58
      %p215 = pneg %p55
      %p216 = pneg %p79
      %p217 = pneg %p76
      %p218 = pneg %p100
      %p219 = pneg %p97
      %s220 = smul.u32 32, %s16
      %p221 = scmp.lt.s32.totalorder %s220, 63
      %s222 = scalar_select %p221, %s220, 63
      %s223 = smul.addr %s222, 4
      %s224 = scalar_lea.vmem %s4, %s223
      %p225 = pneg %p126
      %p226 = pneg %p123
      %p227 = pneg %p152
      %p228 = pneg %p149
      %s229 = smul.u32 32, %s16
      %p230 = scmp.lt.s32.totalorder %s229, 63
      %s231 = scalar_select %p230, %s229, 63
      %s232 = smul.addr %s231, 8
      %s233 = scalar_lea.vmem %s5, %s232
      %s234 = smul.u32 32, %s16
      %p235 = scmp.lt.s32.totalorder %s234, 63
      %s236 = scalar_select %p235, %s234, 63
      %s237 = smul.addr %s236, 2
      %s238 = smul.addr %s237, 4
      %s239 = scalar_lea.vmem %s0, %s238
      %s240 = smul.u32 32, %s16
      %s241 = smul.u32 32, %s16
      %p242 = scmp.lt.s32.totalorder %s241, 63
      %s243 = scalar_select %p242, %s241, 63
      %s244 = smul.addr %s243, 4
      %s245 = scalar_lea.vmem %s4, %s244
      %s246 = smul.u32 32, %s16
      %s247 = smul.u32 32, %s16
      %p248 = scmp.lt.s32.totalorder %s247, 63
      %s249 = scalar_select %p248, %s247, 63
      %s250 = smul.addr %s249, 8
      %s251 = scalar_lea.vmem %s5, %s250
      %s252 = smul.u32 32, %s16
      %v254 = vld [vmem:[%s239] sm:$0xff]
      %v255 = vld [vmem:[%s239 + $0x8] sm:$0xff]
      %v256 = vld [vmem:[%s239 + $0x10] sm:$0xff]
      %v257 = vld [vmem:[%s239 + $0x18] sm:$0xff]
      %v258 = vld [vmem:[%s239 + $0x20] sm:$0xff]
      %v259 = vld [vmem:[%s239 + $0x28] sm:$0xff]
      %v260 = vld [vmem:[%s239 + $0x30] sm:$0xff]
      %v261 = vld [vmem:[%s239 + $0x38] sm:$0xff]
      %v262 = vld [vmem:[%s239 + $0x40] sm:$0xff]
      %v263 = vld [vmem:[%s239 + $0x48] sm:$0xff]
      %v264 = vld [vmem:[%s239 + $0x50] sm:$0xff]
      %v265 = vld [vmem:[%s239 + $0x58] sm:$0xff]
      %v266 = vld [vmem:[%s239 + $0x60] sm:$0xff]
      %v267 = vld [vmem:[%s239 + $0x68] sm:$0xff]
      %v268 = vld [vmem:[%s239 + $0x70] sm:$0xff]
      %v269 = vld [vmem:[%s239 + $0x78] sm:$0xff]
      %v270 = vld [vmem:[%s239 + $0x80] sm:$0xff]
      %v271 = vld [vmem:[%s239 + $0x88] sm:$0xff]
      %v272 = vld [vmem:[%s239 + $0x90] sm:$0xff]
      %v273 = vld [vmem:[%s239 + $0x98] sm:$0xff]
      %v274 = vld [vmem:[%s239 + $0xa0] sm:$0xff]
      %v275 = vld [vmem:[%s239 + $0xa8] sm:$0xff]
      %v276 = vld [vmem:[%s239 + $0xb0] sm:$0xff]
      %v277 = vld [vmem:[%s239 + $0xb8] sm:$0xff]
      %v278 = vld [vmem:[%s239 + $0xc0] sm:$0xff]
      %v279 = vld [vmem:[%s239 + $0xc8] sm:$0xff]
      %v280 = vld [vmem:[%s239 + $0xd0] sm:$0xff]
      %v281 = vld [vmem:[%s239 + $0xd8] sm:$0xff]
      %v282 = vld [vmem:[%s239 + $0xe0] sm:$0xff]
      %v283 = vld [vmem:[%s239 + $0xe8] sm:$0xff]
      %v284 = vld [vmem:[%s239 + $0xf0] sm:$0xff]
      %v285 = vld [vmem:[%s239 + $0xf8] sm:$0xff]
      %v286 = vld [vmem:[%s1] sm:$0xf]
      %v287 = vld [vmem:[%s1 + $0x4] sm:$0xf]
      %v288 = vld [vmem:[%s1 + $0x8] sm:$0xf]
      %v289 = vld [vmem:[%s1 + $0xc] sm:$0xf]
      %v290 = vld [vmem:[%s1 + $0x10] sm:$0xf]
      %v291 = vld [vmem:[%s1 + $0x14] sm:$0xf]
      %v292 = vld [vmem:[%s1 + $0x18] sm:$0xf]
      %v293 = vld [vmem:[%s1 + $0x1c] sm:$0xf]
      %v294 = vld [vmem:[%s1 + $0x20] sm:$0xf]
      %v295 = vld [vmem:[%s1 + $0x24] sm:$0xf]
      %v296 = vld [vmem:[%s1 + $0x28] sm:$0xf]
      %v297 = vld [vmem:[%s1 + $0x2c] sm:$0xf]
      %v298 = vld [vmem:[%s1 + $0x30] sm:$0xf]
      %v299 = vld [vmem:[%s1 + $0x34] sm:$0xf]
      %v300 = vld [vmem:[%s1 + $0x38] sm:$0xf]
      %v301 = vld [vmem:[%s1 + $0x3c] sm:$0xf]
      %v302 = vld [vmem:[%s1 + $0x40] sm:$0xf]
      %v303 = vld [vmem:[%s1 + $0x44] sm:$0xf]
      %v304 = vld [vmem:[%s1 + $0x48] sm:$0xf]
      %v305 = vld [vmem:[%s1 + $0x4c] sm:$0xf]
      %v306 = vld [vmem:[%s1 + $0x50] sm:$0xf]
      %v307 = vld [vmem:[%s1 + $0x54] sm:$0xf]
      %v308 = vld [vmem:[%s1 + $0x58] sm:$0xf]
      %v309 = vld [vmem:[%s1 + $0x5c] sm:$0xf]
      %v310 = vld [vmem:[%s1 + $0x60] sm:$0xf]
      %v311 = vld [vmem:[%s1 + $0x64] sm:$0xf]
      %v312 = vld [vmem:[%s1 + $0x68] sm:$0xf]
      %v313 = vld [vmem:[%s1 + $0x6c] sm:$0xf]
      %v314 = vld [vmem:[%s1 + $0x70] sm:$0xf]
      %v315 = vld [vmem:[%s1 + $0x74] sm:$0xf]
      %v316 = vld [vmem:[%s1 + $0x78] sm:$0xf]
      %v317 = vld [vmem:[%s1 + $0x7c] sm:$0xf]
      %v350 = vunpack.c.l.b16 %v254
      %v351 = vunpack.c.h.b16 %v254
      %v352 = vunpack.c.l.b16 %v255
      %v353 = vunpack.c.h.b16 %v255
      %v354 = vunpack.c.l.b16 %v256
      %v355 = vunpack.c.h.b16 %v256
      %v356 = vunpack.c.l.b16 %v257
      %v357 = vunpack.c.h.b16 %v257
      %v358 = vunpack.c.l.b16 %v258
      %v359 = vunpack.c.h.b16 %v258
      %v360 = vunpack.c.l.b16 %v259
      %v361 = vunpack.c.h.b16 %v259
      %v362 = vunpack.c.l.b16 %v260
      %v363 = vunpack.c.h.b16 %v260
      %v364 = vunpack.c.l.b16 %v261
      %v365 = vunpack.c.h.b16 %v261
      %v366 = vunpack.c.l.b16 %v262
      %v367 = vunpack.c.h.b16 %v262
      %v368 = vunpack.c.l.b16 %v263
      %v369 = vunpack.c.h.b16 %v263
      %v370 = vunpack.c.l.b16 %v264
      %v371 = vunpack.c.h.b16 %v264
      %v372 = vunpack.c.l.b16 %v265
      %v373 = vunpack.c.h.b16 %v265
      %v374 = vunpack.c.l.b16 %v266
      %v375 = vunpack.c.h.b16 %v266
      %v376 = vunpack.c.l.b16 %v267
      %v377 = vunpack.c.h.b16 %v267
      %v378 = vunpack.c.l.b16 %v268
      %v379 = vunpack.c.h.b16 %v268
      %v380 = vunpack.c.l.b16 %v269
      %v381 = vunpack.c.h.b16 %v269
      %v382 = vunpack.c.l.b16 %v270
      %v383 = vunpack.c.h.b16 %v270
      %v384 = vunpack.c.l.b16 %v271
      %v385 = vunpack.c.h.b16 %v271
      %v386 = vunpack.c.l.b16 %v272
      %v387 = vunpack.c.h.b16 %v272
      %v388 = vunpack.c.l.b16 %v273
      %v389 = vunpack.c.h.b16 %v273
      %v390 = vunpack.c.l.b16 %v274
      %v391 = vunpack.c.h.b16 %v274
      %v392 = vunpack.c.l.b16 %v275
      %v393 = vunpack.c.h.b16 %v275
      %v394 = vunpack.c.l.b16 %v276
      %v395 = vunpack.c.h.b16 %v276
      %v396 = vunpack.c.l.b16 %v277
      %v397 = vunpack.c.h.b16 %v277
      %v398 = vunpack.c.l.b16 %v278
      %v399 = vunpack.c.h.b16 %v278
      %v400 = vunpack.c.l.b16 %v279
      %v401 = vunpack.c.h.b16 %v279
      %v402 = vunpack.c.l.b16 %v280
      %v403 = vunpack.c.h.b16 %v280
      %v404 = vunpack.c.l.b16 %v281
      %v405 = vunpack.c.h.b16 %v281
      %v406 = vunpack.c.l.b16 %v282
      %v407 = vunpack.c.h.b16 %v282
      %v408 = vunpack.c.l.b16 %v283
      %v409 = vunpack.c.h.b16 %v283
      %v410 = vunpack.c.l.b16 %v284
      %v411 = vunpack.c.h.b16 %v284
      %v412 = vunpack.c.l.b16 %v285
      %v413 = vunpack.c.h.b16 %v285
      %v414 = vpack.c.b16 %v352, %v350
      %v415 = vpack.c.b16 %v353, %v351
      %v416 = vpack.c.b16 %v356, %v354
      %v417 = vpack.c.b16 %v357, %v355
      %v418 = vpack.c.b16 %v360, %v358
      %v419 = vpack.c.b16 %v361, %v359
      %v420 = vpack.c.b16 %v364, %v362
      %v421 = vpack.c.b16 %v365, %v363
      %v422 = vpack.c.b16 %v368, %v366
      %v423 = vpack.c.b16 %v369, %v367
      %v424 = vpack.c.b16 %v372, %v370
      %v425 = vpack.c.b16 %v373, %v371
      %v426 = vpack.c.b16 %v376, %v374
      %v427 = vpack.c.b16 %v377, %v375
      %v428 = vpack.c.b16 %v380, %v378
      %v429 = vpack.c.b16 %v381, %v379
      %v430 = vpack.c.b16 %v384, %v382
      %v431 = vpack.c.b16 %v385, %v383
      %v432 = vpack.c.b16 %v388, %v386
      %v433 = vpack.c.b16 %v389, %v387
      %v434 = vpack.c.b16 %v392, %v390
      %v435 = vpack.c.b16 %v393, %v391
      %v436 = vpack.c.b16 %v396, %v394
      %v437 = vpack.c.b16 %v397, %v395
      %v438 = vpack.c.b16 %v400, %v398
      %v439 = vpack.c.b16 %v401, %v399
      %v440 = vpack.c.b16 %v404, %v402
      %v441 = vpack.c.b16 %v405, %v403
      %v442 = vpack.c.b16 %v408, %v406
      %v443 = vpack.c.b16 %v409, %v407
      %v444 = vpack.c.b16 %v412, %v410
      %v445 = vpack.c.b16 %v413, %v411
      %v510 = vunpack.c.l.b16 %v286
      %v511 = vunpack.c.l.b16 %v287
      %v512 = vunpack.c.l.b16 %v288
      %v513 = vunpack.c.l.b16 %v289
      %v514 = vunpack.c.l.b16 %v290
      %v515 = vunpack.c.l.b16 %v291
      %v516 = vunpack.c.l.b16 %v292
      %v517 = vunpack.c.l.b16 %v293
      %v518 = vunpack.c.l.b16 %v294
      %v519 = vunpack.c.l.b16 %v295
      %v520 = vunpack.c.l.b16 %v296
      %v521 = vunpack.c.l.b16 %v297
      %v522 = vunpack.c.l.b16 %v298
      %v523 = vunpack.c.l.b16 %v299
      %v524 = vunpack.c.l.b16 %v300
      %v525 = vunpack.c.l.b16 %v301
      %v526 = vunpack.c.l.b16 %v302
      %v527 = vunpack.c.l.b16 %v303
      %v528 = vunpack.c.l.b16 %v304
      %v529 = vunpack.c.l.b16 %v305
      %v530 = vunpack.c.l.b16 %v306
      %v531 = vunpack.c.l.b16 %v307
      %v532 = vunpack.c.l.b16 %v308
      %v533 = vunpack.c.l.b16 %v309
      %v534 = vunpack.c.l.b16 %v310
      %v535 = vunpack.c.l.b16 %v311
      %v536 = vunpack.c.l.b16 %v312
      %v537 = vunpack.c.l.b16 %v313
      %v538 = vunpack.c.l.b16 %v314
      %v539 = vunpack.c.l.b16 %v315
      %v540 = vunpack.c.l.b16 %v316
      %v541 = vunpack.c.l.b16 %v317
      %v542 = vpack.c.b16 %v511, %v510
      %v543 = vpack.c.b16 %v513, %v512
      %v544 = vpack.c.b16 %v515, %v514
      %v545 = vpack.c.b16 %v517, %v516
      %v546 = vpack.c.b16 %v519, %v518
      %v547 = vpack.c.b16 %v521, %v520
      %v548 = vpack.c.b16 %v523, %v522
      %v549 = vpack.c.b16 %v525, %v524
      %v550 = vpack.c.b16 %v527, %v526
      %v551 = vpack.c.b16 %v529, %v528
      %v552 = vpack.c.b16 %v531, %v530
      %v553 = vpack.c.b16 %v533, %v532
      %v554 = vpack.c.b16 %v535, %v534
      %v555 = vpack.c.b16 %v537, %v536
      %v556 = vpack.c.b16 %v539, %v538
      %v557 = vpack.c.b16 %v541, %v540
      %574 = vmatprep.subr.bf16.mxu0 0
      %575 = vmatpush1.bf16.msra.mxu0 %v549
      %576 = vmatprep.subr.bf16.mxu0 0
      %577 = vmatpush1.bf16.msra.mxu0 %v548
      %578 = vmatprep.subr.bf16.mxu0 0
      %579 = vmatpush1.bf16.msra.mxu0 %v547
      %580 = vmatprep.subr.bf16.mxu0 0
      %581 = vmatpush1.bf16.msra.mxu0 %v546
      %582 = vmatprep.subr.bf16.mxu0 0
      %583 = vmatpush1.bf16.msra.mxu0 %v545
      %584 = vmatprep.subr.bf16.mxu0 0
      %585 = vmatpush1.bf16.msra.mxu0 %v544
      %586 = vmatprep.subr.bf16.mxu0 0
      %587 = vmatpush1.bf16.msra.mxu0 %v543
      %588 = vmatprep.subr.bf16.mxu0 0
      %589 = vmatpush1.bf16.msra.mxu0 %v542
      %590 = vmatprep.subr.bf16.mxu0 0
      %591 = vmatpush2.bf16.msra.mxu0 %v557
      %592 = vmatprep.subr.bf16.mxu0 0
      %593 = vmatpush2.bf16.msra.mxu0 %v556
      %594 = vmatprep.subr.bf16.mxu0 0
      %595 = vmatpush2.bf16.msra.mxu0 %v555
      %596 = vmatprep.subr.bf16.mxu0 0
      %597 = vmatpush2.bf16.msra.mxu0 %v554
      %598 = vmatprep.subr.bf16.mxu0 0
      %599 = vmatpush2.bf16.msra.mxu0 %v553
      %600 = vmatprep.subr.bf16.mxu0 0
      %601 = vmatpush2.bf16.msra.mxu0 %v552
      %602 = vmatprep.subr.bf16.mxu0 0
      %603 = vmatpush2.bf16.msra.mxu0 %v551
      %604 = vmatprep.subr.bf16.mxu0 0
      %605 = vmatpush2.bf16.msra.mxu0 %v550
      %606 = vmatprep.mubr.bf16.mxu0 %v415
      %607 = vmatmul.mubr.bf16.gmra.mxu0 %v414
      %v608 = vpop.f32.mrf.mxu0
      %v609 = vadd.f32 0.0, %v608
      %v610 = vpop.f32.mrf.mxu0
      %v611 = vpop.f32.mrf.mxu0
      %v612 = vadd.f32 0.0, %v611
      %v613 = vpop.f32.mrf.mxu0
      %614 = vmatprep.mubr.bf16.mxu0 %v417
      %615 = vmatmul.mubr.bf16.gmra.mxu0 %v416
      %v616 = vpop.f32.mrf.mxu0
      %v617 = vadd.f32 0.0, %v616
      %v618 = vpop.f32.mrf.mxu0
      %v619 = vpop.f32.mrf.mxu0
      %v620 = vadd.f32 0.0, %v619
      %v621 = vpop.f32.mrf.mxu0
      %622 = vmatprep.mubr.bf16.mxu0 %v419
      %623 = vmatmul.mubr.bf16.gmra.mxu0 %v418
      %v624 = vpop.f32.mrf.mxu0
      %v625 = vadd.f32 0.0, %v624
      %v626 = vpop.f32.mrf.mxu0
      %v627 = vpop.f32.mrf.mxu0
      %v628 = vadd.f32 0.0, %v627
      %v629 = vpop.f32.mrf.mxu0
      %630 = vmatprep.mubr.bf16.mxu0 %v421
      %631 = vmatmul.mubr.bf16.gmra.mxu0 %v420
      %v632 = vpop.f32.mrf.mxu0
      %v633 = vadd.f32 0.0, %v632
      %v634 = vpop.f32.mrf.mxu0
      %v635 = vpop.f32.mrf.mxu0
      %v636 = vadd.f32 0.0, %v635
      %v637 = vpop.f32.mrf.mxu0
      %638 = vmatprep.mubr.bf16.mxu0 %v423
      %639 = vmatmul.mubr.bf16.gmra.mxu0 %v422
      %v640 = vpop.f32.mrf.mxu0
      %v641 = vadd.f32 0.0, %v640
      %v642 = vpop.f32.mrf.mxu0
      %v643 = vpop.f32.mrf.mxu0
      %v644 = vadd.f32 0.0, %v643
      %v645 = vpop.f32.mrf.mxu0
      %646 = vmatprep.mubr.bf16.mxu0 %v425
      %647 = vmatmul.mubr.bf16.gmra.mxu0 %v424
      %v648 = vpop.f32.mrf.mxu0
      %v649 = vadd.f32 0.0, %v648
      %v650 = vpop.f32.mrf.mxu0
      %v651 = vpop.f32.mrf.mxu0
      %v652 = vadd.f32 0.0, %v651
      %v653 = vpop.f32.mrf.mxu0
      %654 = vmatprep.mubr.bf16.mxu0 %v427
      %655 = vmatmul.mubr.bf16.gmra.mxu0 %v426
      %v656 = vpop.f32.mrf.mxu0
      %v657 = vadd.f32 0.0, %v656
      %v658 = vpop.f32.mrf.mxu0
      %v659 = vpop.f32.mrf.mxu0
      %v660 = vadd.f32 0.0, %v659
      %v661 = vpop.f32.mrf.mxu0
      %662 = vmatprep.mubr.bf16.mxu0 %v429
      %663 = vmatmul.mubr.bf16.gmra.mxu0 %v428
      %v664 = vpop.f32.mrf.mxu0
      %v665 = vadd.f32 0.0, %v664
      %v666 = vpop.f32.mrf.mxu0
      %v667 = vpop.f32.mrf.mxu0
      %v668 = vadd.f32 0.0, %v667
      %v669 = vpop.f32.mrf.mxu0
      %670 = vmatprep.mubr.bf16.mxu0 %v431
      %671 = vmatmul.mubr.bf16.gmra.mxu0 %v430
      %v672 = vpop.f32.mrf.mxu0
      %v673 = vadd.f32 0.0, %v672
      %v674 = vpop.f32.mrf.mxu0
      %v675 = vpop.f32.mrf.mxu0
      %v676 = vadd.f32 0.0, %v675
      %v677 = vpop.f32.mrf.mxu0
      %678 = vmatprep.mubr.bf16.mxu0 %v433
      %679 = vmatmul.mubr.bf16.gmra.mxu0 %v432
      %v680 = vpop.f32.mrf.mxu0
      %v681 = vadd.f32 0.0, %v680
      %v682 = vpop.f32.mrf.mxu0
      %v683 = vpop.f32.mrf.mxu0
      %v684 = vadd.f32 0.0, %v683
      %v685 = vpop.f32.mrf.mxu0
      %686 = vmatprep.mubr.bf16.mxu0 %v435
      %687 = vmatmul.mubr.bf16.gmra.mxu0 %v434
      %v688 = vpop.f32.mrf.mxu0
      %v689 = vadd.f32 0.0, %v688
      %v690 = vpop.f32.mrf.mxu0
      %v691 = vpop.f32.mrf.mxu0
      %v692 = vadd.f32 0.0, %v691
      %v693 = vpop.f32.mrf.mxu0
      %694 = vmatprep.mubr.bf16.mxu0 %v437
      %695 = vmatmul.mubr.bf16.gmra.mxu0 %v436
      %v696 = vpop.f32.mrf.mxu0
      %v697 = vadd.f32 0.0, %v696
      %v698 = vpop.f32.mrf.mxu0
      %v699 = vpop.f32.mrf.mxu0
      %v700 = vadd.f32 0.0, %v699
      %v701 = vpop.f32.mrf.mxu0
      %702 = vmatprep.mubr.bf16.mxu0 %v439
      %703 = vmatmul.mubr.bf16.gmra.mxu0 %v438
      %v704 = vpop.f32.mrf.mxu0
      %v705 = vadd.f32 0.0, %v704
      %v706 = vpop.f32.mrf.mxu0
      %v707 = vpop.f32.mrf.mxu0
      %v708 = vadd.f32 0.0, %v707
      %v709 = vpop.f32.mrf.mxu0
      %710 = vmatprep.mubr.bf16.mxu0 %v441
      %711 = vmatmul.mubr.bf16.gmra.mxu0 %v440
      %v712 = vpop.f32.mrf.mxu0
      %v713 = vadd.f32 0.0, %v712
      %v714 = vpop.f32.mrf.mxu0
      %v715 = vpop.f32.mrf.mxu0
      %v716 = vadd.f32 0.0, %v715
      %v717 = vpop.f32.mrf.mxu0
      %718 = vmatprep.mubr.bf16.mxu0 %v443
      %719 = vmatmul.mubr.bf16.gmra.mxu0 %v442
      %v720 = vpop.f32.mrf.mxu0
      %v721 = vadd.f32 0.0, %v720
      %v722 = vpop.f32.mrf.mxu0
      %v723 = vpop.f32.mrf.mxu0
      %v724 = vadd.f32 0.0, %v723
      %v725 = vpop.f32.mrf.mxu0
      %726 = vmatprep.mubr.bf16.mxu0 %v445
      %727 = vmatmul.mubr.bf16.gmra.mxu0 %v444
      %v728 = vpop.f32.mrf.mxu0
      %v729 = vadd.f32 0.0, %v728
      %v730 = vpop.f32.mrf.mxu0
      %v731 = vpop.f32.mrf.mxu0
      %v732 = vadd.f32 0.0, %v731
      %v733 = vpop.f32.mrf.mxu0
      %734 = vdwg.mxu0
      %v735 = vld [vmem:[%s2] sm:$0x1]
      %v737 = vlaneseq
      %v738 = vshrl.u32 %v737, 7
      %v739 = vsub.s32 0, %v738
      %v740 = vrot.slane %v735, %v739
      %v742 = vmul.f32 %v609, %v740
      %v743 = vmul.f32 %v612, %v740
      %v744 = vmul.f32 %v617, %v740
      %v745 = vmul.f32 %v620, %v740
      %v746 = vmul.f32 %v625, %v740
      %v747 = vmul.f32 %v628, %v740
      %v748 = vmul.f32 %v633, %v740
      %v749 = vmul.f32 %v636, %v740
      %v750 = vmul.f32 %v641, %v740
      %v751 = vmul.f32 %v644, %v740
      %v752 = vmul.f32 %v649, %v740
      %v753 = vmul.f32 %v652, %v740
      %v754 = vmul.f32 %v657, %v740
      %v755 = vmul.f32 %v660, %v740
      %v756 = vmul.f32 %v665, %v740
      %v757 = vmul.f32 %v668, %v740
      %v758 = vmul.f32 %v673, %v740
      %v759 = vmul.f32 %v676, %v740
      %v760 = vmul.f32 %v681, %v740
      %v761 = vmul.f32 %v684, %v740
      %v762 = vmul.f32 %v689, %v740
      %v763 = vmul.f32 %v692, %v740
      %v764 = vmul.f32 %v697, %v740
      %v765 = vmul.f32 %v700, %v740
      %v766 = vmul.f32 %v705, %v740
      %v767 = vmul.f32 %v708, %v740
      %v768 = vmul.f32 %v713, %v740
      %v769 = vmul.f32 %v716, %v740
      %v770 = vmul.f32 %v721, %v740
      %v771 = vmul.f32 %v724, %v740
      %v772 = vmul.f32 %v729, %v740
      %v773 = vmul.f32 %v732, %v740
      %v774 = vld [vmem:[%s3] sm:$0x1]
      %v776 = vlaneseq
      %v777 = vshrl.u32 %v776, 7
      %v778 = vsub.s32 0, %v777
      %v779 = vrot.slane %v774, %v778
      %v781 = vadd.f32 %v742, %v779
      %v782 = vadd.f32 %v743, %v779
      %v783 = vadd.f32 %v744, %v779
      %v784 = vadd.f32 %v745, %v779
      %v785 = vadd.f32 %v746, %v779
      %v786 = vadd.f32 %v747, %v779
      %v787 = vadd.f32 %v748, %v779
      %v788 = vadd.f32 %v749, %v779
      %v789 = vadd.f32 %v750, %v779
      %v790 = vadd.f32 %v751, %v779
      %v791 = vadd.f32 %v752, %v779
      %v792 = vadd.f32 %v753, %v779
      %v793 = vadd.f32 %v754, %v779
      %v794 = vadd.f32 %v755, %v779
      %v795 = vadd.f32 %v756, %v779
      %v796 = vadd.f32 %v757, %v779
      %v797 = vadd.f32 %v758, %v779
      %v798 = vadd.f32 %v759, %v779
      %v799 = vadd.f32 %v760, %v779
      %v800 = vadd.f32 %v761, %v779
      %v801 = vadd.f32 %v762, %v779
      %v802 = vadd.f32 %v763, %v779
      %v803 = vadd.f32 %v764, %v779
      %v804 = vadd.f32 %v765, %v779
      %v805 = vadd.f32 %v766, %v779
      %v806 = vadd.f32 %v767, %v779
      %v807 = vadd.f32 %v768, %v779
      %v808 = vadd.f32 %v769, %v779
      %v809 = vadd.f32 %v770, %v779
      %v810 = vadd.f32 %v771, %v779
      %v811 = vadd.f32 %v772, %v779
      %v812 = vadd.f32 %v773, %v779
      %v813 = vld [vmem:[%s245] sm:$0xf]
      %v814 = vld [vmem:[%s245 + $0x4] sm:$0xf]
      %v815 = vld [vmem:[%s245 + $0x8] sm:$0xf]
      %v816 = vld [vmem:[%s245 + $0xc] sm:$0xf]
      %v817 = vld [vmem:[%s245 + $0x10] sm:$0xf]
      %v818 = vld [vmem:[%s245 + $0x14] sm:$0xf]
      %v819 = vld [vmem:[%s245 + $0x18] sm:$0xf]
      %v820 = vld [vmem:[%s245 + $0x1c] sm:$0xf]
      %v821 = vld [vmem:[%s245 + $0x20] sm:$0xf]
      %v822 = vld [vmem:[%s245 + $0x24] sm:$0xf]
      %v823 = vld [vmem:[%s245 + $0x28] sm:$0xf]
      %v824 = vld [vmem:[%s245 + $0x2c] sm:$0xf]
      %v825 = vld [vmem:[%s245 + $0x30] sm:$0xf]
      %v826 = vld [vmem:[%s245 + $0x34] sm:$0xf]
      %v827 = vld [vmem:[%s245 + $0x38] sm:$0xf]
      %v828 = vld [vmem:[%s245 + $0x3c] sm:$0xf]
      %v829 = vld [vmem:[%s245 + $0x40] sm:$0xf]
      %v830 = vld [vmem:[%s245 + $0x44] sm:$0xf]
      %v831 = vld [vmem:[%s245 + $0x48] sm:$0xf]
      %v832 = vld [vmem:[%s245 + $0x4c] sm:$0xf]
      %v833 = vld [vmem:[%s245 + $0x50] sm:$0xf]
      %v834 = vld [vmem:[%s245 + $0x54] sm:$0xf]
      %v835 = vld [vmem:[%s245 + $0x58] sm:$0xf]
      %v836 = vld [vmem:[%s245 + $0x5c] sm:$0xf]
      %v837 = vld [vmem:[%s245 + $0x60] sm:$0xf]
      %v838 = vld [vmem:[%s245 + $0x64] sm:$0xf]
      %v839 = vld [vmem:[%s245 + $0x68] sm:$0xf]
      %v840 = vld [vmem:[%s245 + $0x6c] sm:$0xf]
      %v841 = vld [vmem:[%s245 + $0x70] sm:$0xf]
      %v842 = vld [vmem:[%s245 + $0x74] sm:$0xf]
      %v843 = vld [vmem:[%s245 + $0x78] sm:$0xf]
      %v844 = vld [vmem:[%s245 + $0x7c] sm:$0xf]
      %v845 = vunpack.c.l.bf16 %v813
      %v846 = vunpack.c.l.bf16 %v814
      %v847 = vunpack.c.l.bf16 %v815
      %v848 = vunpack.c.l.bf16 %v816
      %v849 = vunpack.c.l.bf16 %v817
      %v850 = vunpack.c.l.bf16 %v818
      %v851 = vunpack.c.l.bf16 %v819
      %v852 = vunpack.c.l.bf16 %v820
      %v853 = vunpack.c.l.bf16 %v821
      %v854 = vunpack.c.l.bf16 %v822
      %v855 = vunpack.c.l.bf16 %v823
      %v856 = vunpack.c.l.bf16 %v824
      %v857 = vunpack.c.l.bf16 %v825
      %v858 = vunpack.c.l.bf16 %v826
      %v859 = vunpack.c.l.bf16 %v827
      %v860 = vunpack.c.l.bf16 %v828
      %v861 = vunpack.c.l.bf16 %v829
      %v862 = vunpack.c.l.bf16 %v830
      %v863 = vunpack.c.l.bf16 %v831
      %v864 = vunpack.c.l.bf16 %v832
      %v865 = vunpack.c.l.bf16 %v833
      %v866 = vunpack.c.l.bf16 %v834
      %v867 = vunpack.c.l.bf16 %v835
      %v868 = vunpack.c.l.bf16 %v836
      %v869 = vunpack.c.l.bf16 %v837
      %v870 = vunpack.c.l.bf16 %v838
      %v871 = vunpack.c.l.bf16 %v839
      %v872 = vunpack.c.l.bf16 %v840
      %v873 = vunpack.c.l.bf16 %v841
      %v874 = vunpack.c.l.bf16 %v842
      %v875 = vunpack.c.l.bf16 %v843
      %v876 = vunpack.c.l.bf16 %v844
      %v877 = vadd.f32 %v781, %v845
      %v878 = vadd.f32 %v782, %v846
      %v879 = vadd.f32 %v783, %v847
      %v880 = vadd.f32 %v784, %v848
      %v881 = vadd.f32 %v785, %v849
      %v882 = vadd.f32 %v786, %v850
      %v883 = vadd.f32 %v787, %v851
      %v884 = vadd.f32 %v788, %v852
      %v885 = vadd.f32 %v789, %v853
      %v886 = vadd.f32 %v790, %v854
      %v887 = vadd.f32 %v791, %v855
      %v888 = vadd.f32 %v792, %v856
      %v889 = vadd.f32 %v793, %v857
      %v890 = vadd.f32 %v794, %v858
      %v891 = vadd.f32 %v795, %v859
      %v892 = vadd.f32 %v796, %v860
      %v893 = vadd.f32 %v797, %v861
      %v894 = vadd.f32 %v798, %v862
      %v895 = vadd.f32 %v799, %v863
      %v896 = vadd.f32 %v800, %v864
      %v897 = vadd.f32 %v801, %v865
      %v898 = vadd.f32 %v802, %v866
      %v899 = vadd.f32 %v803, %v867
      %v900 = vadd.f32 %v804, %v868
      %v901 = vadd.f32 %v805, %v869
      %v902 = vadd.f32 %v806, %v870
      %v903 = vadd.f32 %v807, %v871
      %v904 = vadd.f32 %v808, %v872
      %v905 = vadd.f32 %v809, %v873
      %v906 = vadd.f32 %v810, %v874
      %v907 = vadd.f32 %v811, %v875
      %v908 = vadd.f32 %v812, %v876
      %909 = vst [vmem:[%s251] sm:$0xff] %v877
      %910 = vst [vmem:[%s251 + $0x8] sm:$0xff] %v878
      %911 = vst [vmem:[%s251 + $0x10] sm:$0xff] %v879
      %912 = vst [vmem:[%s251 + $0x18] sm:$0xff] %v880
      %913 = vst [vmem:[%s251 + $0x20] sm:$0xff] %v881
      %914 = vst [vmem:[%s251 + $0x28] sm:$0xff] %v882
      %915 = vst [vmem:[%s251 + $0x30] sm:$0xff] %v883
      %916 = vst [vmem:[%s251 + $0x38] sm:$0xff] %v884
      %917 = vst [vmem:[%s251 + $0x40] sm:$0xff] %v885
      %918 = vst [vmem:[%s251 + $0x48] sm:$0xff] %v886
      %919 = vst [vmem:[%s251 + $0x50] sm:$0xff] %v887
      %920 = vst [vmem:[%s251 + $0x58] sm:$0xff] %v888
      %921 = vst [vmem:[%s251 + $0x60] sm:$0xff] %v889
      %922 = vst [vmem:[%s251 + $0x68] sm:$0xff] %v890
      %923 = vst [vmem:[%s251 + $0x70] sm:$0xff] %v891
      %924 = vst [vmem:[%s251 + $0x78] sm:$0xff] %v892
      %925 = vst [vmem:[%s251 + $0x80] sm:$0xff] %v893
      %926 = vst [vmem:[%s251 + $0x88] sm:$0xff] %v894
      %927 = vst [vmem:[%s251 + $0x90] sm:$0xff] %v895
      %928 = vst [vmem:[%s251 + $0x98] sm:$0xff] %v896
      %929 = vst [vmem:[%s251 + $0xa0] sm:$0xff] %v897
      %930 = vst [vmem:[%s251 + $0xa8] sm:$0xff] %v898
      %931 = vst [vmem:[%s251 + $0xb0] sm:$0xff] %v899
      %932 = vst [vmem:[%s251 + $0xb8] sm:$0xff] %v900
      %933 = vst [vmem:[%s251 + $0xc0] sm:$0xff] %v901
      %934 = vst [vmem:[%s251 + $0xc8] sm:$0xff] %v902
      %935 = vst [vmem:[%s251 + $0xd0] sm:$0xff] %v903
      %936 = vst [vmem:[%s251 + $0xd8] sm:$0xff] %v904
      %937 = vst [vmem:[%s251 + $0xe0] sm:$0xff] %v905
      %938 = vst [vmem:[%s251 + $0xe8] sm:$0xff] %v906
      %939 = vst [vmem:[%s251 + $0xf0] sm:$0xff] %v907
      %940 = vst [vmem:[%s251 + $0xf8] sm:$0xff] %v908
      %s941 = smul.u32 32, %s16
      %p942 = scmp.lt.s32.totalorder %s941, 63
      %s943 = scalar_select %p942, %s941, 63
      %s944 = smul.addr %s943, 8
      %s945 = scalar_lea.vmem %s5, %s944
      // Predicated region
      $region41: #{_lambda_.5} parent=39 // pred_check
        %p946 = pneg %p149
      $region42: #{_lambda_.5} parent=39 // pred_check_branch
        %948 = sbr.rel (%p946) target = $region44
      $region43: #{_lambda_.5} parent=39 // pred_region
        %s949 = smul.u32 32, %s16
      $region44: #{_lambda_.5} parent=39 // pred_fallthru
        _
    $region40: #{_lambda_.5} parent=5 // pred_fallthru
      _
    %p950 = scmp.le.s32.totalorder 2, %s11
    // Predicated region
    $region45: #{_lambda_.5} parent=5 // pred_check
      %p951 = pneg %p950
    $region46: #{_lambda_.5} parent=5 // pred_check_branch
      %953 = sbr.rel (%p951) target = $region48
    $region47: #{_lambda_.5} parent=5 // pred_region
      %s954 = ssub.s32 %s11, 2
      // Predicated region
      $region49: #{_lambda_.5} parent=47 // pred_check
        %p955 = pneg %p155
      $region50: #{_lambda_.5} parent=47 // pred_check_branch
        %957 = sbr.rel (%p955) target = $region52
      $region51: #{_lambda_.5} parent=47 // pred_region
        %s958 = smul.u32 32, %s17
        %p959 = scmp.lt.s32.totalorder %s958, 63
        %s960 = scalar_select %p959, %s958, 63
        %s961 = smul.addr %s960, 8
        %s962 = scalar_lea.vmem %s5, %s961
      $region52: #{_lambda_.5} parent=47 // pred_fallthru
        _
    $region48: #{_lambda_.5} parent=5 // pred_fallthru
      _
  $region6: #{_lambda_.5} parent=0 // loop_footer
    %s15 = sadd.s32 1, %s11
  $region7: #{_lambda_.5} parent=0 // loop_footer_branch
    %10 = sbr.rel target = $region3
  $region8: #{_lambda_.5} parent=0 // loop_exit
    _

// kernel: _lambda_.4
$region0: #{_lambda_.4}
  #allocation0 [shape = 'u32[]', space=smem, size = 0x4, offset = 0x4, fixed_abs, tag = 'smem constant byte address 0x4 - core index']
  #allocation1 [shape = 'u32[144,128]{1,0:T(1,128)}', space=vmem, size = 0x12000, scoped, tag = 'internal scratch']
  %s0 = inlined_call_operand.vmem [shape: bf16[2,18,18,256], index: 0, kind: input, shape index: {}]
  %s1 = inlined_call_operand.vmem [shape: bf16[9,256], index: 1, kind: input, shape index: {}]
  %s2 = inlined_call_operand.vmem [shape: f32[1,256], index: 2, kind: input, shape index: {}]
  %s3 = inlined_call_operand.vmem [shape: f32[1,256], index: 3, kind: input, shape index: {}]
  %s4 = inlined_call_operand.vmem [shape: bf16[2,16,16,256], index: 4, kind: output, shape index: {}]
  %s5 = sld [smem:[#allocation0]]
  $region168: #{_lambda_.4} parent=0
    _
  %s7 = ssub.s32 1, %s5
  %s8 = scalar_select 0, %s7, %s5
  $region1: #{_lambda_.4} parent=0
    #allocation2 [shape = 'u8[221184]{0}', space=vmem, size = 0x36000, scoped, tag = 'input window, operand 0']
    #allocation3 [shape = 'u8[8192]{0}', space=vmem, size = 0x2000, scoped, tag = 'input window, operand 1']
    #allocation4 [shape = 'u8[131072]{0}', space=vmem, size = 0x20000, scoped, tag = 'output window, operand 0']
    loop: start=0, step=1, limit=6
    $region2: #{_lambda_.4} parent=1 // loop_pre_header
      _
    $region3: #{_lambda_.4} parent=1 // loop_header
      %s10 = sphi 0, %s14
      %p11 = scmp.ge.s32.totalorder %s10, 6
      %s17 = sphi 0, %s29
      %s18 = sphi 0, %s25
      %s19 = sphi 0, %s17
      %s20 = sphi 0, %s18
      %s21 = sphi 0, %s19
      %s22 = sphi 0, %s20
      %s34 = sphi 0, %s36
      %s37 = sphi 0, %s34
      %s38 = sphi 0, %s37
      %s54 = sphi 0, %s38
      %s60 = sphi 0, %s62
      %s63 = sphi 0, %s60
      %s64 = sphi 0, %s63
      %s80 = sphi 0, %s64
      %s86 = sphi 0, %s88
      %s89 = sphi 0, %s86
      %s90 = sphi 0, %s89
      %s106 = sphi 0, %s90
      %s112 = sphi 0, %s114
      %s115 = sphi 0, %s112
      %s116 = sphi 0, %s115
      %s132 = sphi 0, %s116
      %s140 = sphi 0, %s142
      %s143 = sphi 0, %s140
      %s144 = sphi 0, %s143
      %s160 = sphi 0, %s144
    $region4: #{_lambda_.4} parent=1 // loop_header_branch
      %13 = sbr.rel (%p11) target = $region8
    $region5: #{_lambda_.4} parent=1 // loop_body
      %s15 = ssub.s32 %s10, 1
      %s16 = ssub.s32 %s10, 2
      %s23 = sadd.s32 1, %s18
      %p24 = scmp.ge.s32.totalorder %s23, 2
      %s25 = scalar_select %p24, 0, %s23
      %s26 = sadd.s32 1, %s17
      %s27 = scalar_select %p24, %s26, %s17
      %p28 = scmp.ge.s32.totalorder %s27, 2
      %s29 = scalar_select %p28, 0, %s27
      %s30 = ssub.s32 %s17, %s29
      %s31 = ssub.s32 %s18, %s25
      %s32 = sor.u32 %s30, %s31
      %p33 = scmp.eq.s32.totalorder %s32, 0
      %s35 = sadd.s32 %s34, 1
      %s36 = scalar_select %p33, %s34, %s35
      %p39 = pneg %p33
      %p40 = scmp.eq.s32.totalorder %s10, 3
      %p41 = por %p39, %p40
      %p42 = scmp.ne.s32.totalorder %s34, %s37
      %p43 = scmp.eq.s32.totalorder %s10, 0
      %p44 = por %p42, %p43
      %p45 = scmp.ne.s32.totalorder %s34, %s37
      %p46 = scmp.eq.s32.totalorder %s15, 3
      %p47 = por %p45, %p46
      %p48 = scmp.ne.s32.totalorder %s37, %s38
      %p49 = scmp.eq.s32.totalorder %s15, 0
      %p50 = por %p48, %p49
      %p51 = scmp.ne.s32.totalorder %s37, %s38
      %p52 = scmp.eq.s32.totalorder %s16, 3
      %p53 = por %p51, %p52
      %p55 = scmp.ne.s32.totalorder %s38, %s54
      %p56 = scmp.eq.s32.totalorder %s16, 0
      %p57 = por %p55, %p56
      %s58 = ssub.s32 %s18, %s25
      %p59 = scmp.eq.s32.totalorder %s58, 0
      %s61 = sadd.s32 %s60, 1
      %s62 = scalar_select %p59, %s60, %s61
      %p65 = pneg %p59
      %p66 = scmp.eq.s32.totalorder %s10, 3
      %p67 = por %p65, %p66
      %p68 = scmp.ne.s32.totalorder %s60, %s63
      %p69 = scmp.eq.s32.totalorder %s10, 0
      %p70 = por %p68, %p69
      %p71 = scmp.ne.s32.totalorder %s60, %s63
      %p72 = scmp.eq.s32.totalorder %s15, 3
      %p73 = por %p71, %p72
      %p74 = scmp.ne.s32.totalorder %s63, %s64
      %p75 = scmp.eq.s32.totalorder %s15, 0
      %p76 = por %p74, %p75
      %p77 = scmp.ne.s32.totalorder %s63, %s64
      %p78 = scmp.eq.s32.totalorder %s16, 3
      %p79 = por %p77, %p78
      %p81 = scmp.ne.s32.totalorder %s64, %s80
      %p82 = scmp.eq.s32.totalorder %s16, 0
      %p83 = por %p81, %p82
      %s84 = ssub.s32 %s18, %s25
      %p85 = scmp.eq.s32.totalorder %s84, 0
      %s87 = sadd.s32 %s86, 1
      %s88 = scalar_select %p85, %s86, %s87
      %p91 = pneg %p85
      %p92 = scmp.eq.s32.totalorder %s10, 3
      %p93 = por %p91, %p92
      %p94 = scmp.ne.s32.totalorder %s86, %s89
      %p95 = scmp.eq.s32.totalorder %s10, 0
      %p96 = por %p94, %p95
      %p97 = scmp.ne.s32.totalorder %s86, %s89
      %p98 = scmp.eq.s32.totalorder %s15, 3
      %p99 = por %p97, %p98
      %p100 = scmp.ne.s32.totalorder %s89, %s90
      %p101 = scmp.eq.s32.totalorder %s15, 0
      %p102 = por %p100, %p101
      %p103 = scmp.ne.s32.totalorder %s89, %s90
      %p104 = scmp.eq.s32.totalorder %s16, 3
      %p105 = por %p103, %p104
      %p107 = scmp.ne.s32.totalorder %s90, %s106
      %p108 = scmp.eq.s32.totalorder %s16, 0
      %p109 = por %p107, %p108
      %s110 = ssub.s32 %s18, %s25
      %p111 = scmp.eq.s32.totalorder %s110, 0
      %s113 = sadd.s32 %s112, 1
      %s114 = scalar_select %p111, %s112, %s113
      %p117 = pneg %p111
      %p118 = scmp.eq.s32.totalorder %s10, 3
      %p119 = por %p117, %p118
      %p120 = scmp.ne.s32.totalorder %s112, %s115
      %p121 = scmp.eq.s32.totalorder %s10, 0
      %p122 = por %p120, %p121
      %p123 = scmp.ne.s32.totalorder %s112, %s115
      %p124 = scmp.eq.s32.totalorder %s15, 3
      %p125 = por %p123, %p124
      %p126 = scmp.ne.s32.totalorder %s115, %s116
      %p127 = scmp.eq.s32.totalorder %s15, 0
      %p128 = por %p126, %p127
      %p129 = scmp.ne.s32.totalorder %s115, %s116
      %p130 = scmp.eq.s32.totalorder %s16, 3
      %p131 = por %p129, %p130
      %p133 = scmp.ne.s32.totalorder %s116, %s132
      %p134 = scmp.eq.s32.totalorder %s16, 0
      %p135 = por %p133, %p134
      %s136 = ssub.s32 %s17, %s29
      %s137 = ssub.s32 %s18, %s25
      %s138 = sor.u32 %s136, %s137
      %p139 = scmp.eq.s32.totalorder %s138, 0
      %s141 = sadd.s32 %s140, 1
      %s142 = scalar_select %p139, %s140, %s141
      %p145 = pneg %p139
      %p146 = scmp.eq.s32.totalorder %s10, 3
      %p147 = por %p145, %p146
      %p148 = scmp.ne.s32.totalorder %s140, %s143
      %p149 = scmp.eq.s32.totalorder %s10, 0
      %p150 = por %p148, %p149
      %p151 = scmp.ne.s32.totalorder %s140, %s143
      %p152 = scmp.eq.s32.totalorder %s15, 3
      %p153 = por %p151, %p152
      %p154 = scmp.ne.s32.totalorder %s143, %s144
      %p155 = scmp.eq.s32.totalorder %s15, 0
      %p156 = por %p154, %p155
      %p157 = scmp.ne.s32.totalorder %s143, %s144
      %p158 = scmp.eq.s32.totalorder %s16, 3
      %p159 = por %p157, %p158
      %p161 = scmp.ne.s32.totalorder %s144, %s160
      %p162 = scmp.eq.s32.totalorder %s16, 0
      %p163 = por %p161, %p162
      %p164 = scmp.le.s32.totalorder 1, %s10
      %p165 = scmp.lt.s32.totalorder %s10, 5
      %p166 = pnand %p164, %p165
      %p167 = pneg %p166
      // Predicated region
      $region9: #{_lambda_.4} parent=5 // pred_check
        _
      $region10: #{_lambda_.4} parent=5 // pred_check_branch
        %169 = sbr.rel (%p166) target = $region12
      $region11: #{_lambda_.4} parent=5 // pred_region
        %s170 = ssub.s32 %s10, 1
      $region12: #{_lambda_.4} parent=5 // pred_fallthru
        _
      %p171 = scmp.lt.s32.totalorder %s10, 4
      // Predicated region
      $region13: #{_lambda_.4} parent=5 // pred_check
        %p172 = pneg %p171
      $region14: #{_lambda_.4} parent=5 // pred_check_branch
        %174 = sbr.rel (%p172) target = $region16
      $region15: #{_lambda_.4} parent=5 // pred_region
        // Predicated region
        $region17: #{_lambda_.4} parent=15 // pred_check
          %p175 = pneg %p44
        $region18: #{_lambda_.4} parent=15 // pred_check_branch
          %177 = sbr.rel (%p175) target = $region20
        $region19: #{_lambda_.4} parent=15 // pred_region
          %s178 = sand.u32 %s34, 1
          %s179 = sand.u32 %s34, 1
          %s180 = smul.addr %s179, 216
          %s181 = scalar_lea.vmem [#allocation2], %s180
          %s182 = smul.addr %s17, 108
          %s183 = sadd.s32 %s18, %s182
          %s184 = smul.addr %s183, 4
          %s185 = scalar_lea.vmem %s0, %s184
          // Predicated region
          $region21: #{_lambda_.4} parent=19 // pred_check
            _
          $region22: #{_lambda_.4} parent=19 // pred_check_branch
            %187 = sbr.rel (0) target = $region24
          $region23: #{_lambda_.4} parent=19 // pred_region
            // Predicated region
            $region25: #{_lambda_.4} parent=23 // pred_check
              _
            $region26: #{_lambda_.4} parent=23 // pred_check_branch
              %189 = sbr.rel target = $region28
            $region27: #{_lambda_.4} parent=23 // pred_region
              // Predicated region
              $region40: #{_lambda_.4} parent=27 // pred_check
                _
              $region41: #{_lambda_.4} parent=27 // pred_check_branch
                %311 = sbr.rel (0) target = $region43
              $region42: #{_lambda_.4} parent=27 // pred_region
                loop: start=0, step=1, limit=1
                $region44: #{_lambda_.4} parent=42 // loop_pre_header
                  _
                $region45: #{_lambda_.4} parent=42 // loop_header
                  %s313 = sphi 0, %s317
                  %p314 = scmp.ge.s32.totalorder %s313, 1
                  %s318 = sphi %s185, %s185
                  %s319 = sphi %s181, %s181
                $region46: #{_lambda_.4} parent=42 // loop_header_branch
                  %316 = sbr.rel (%p314) target = $region50
                $region47: #{_lambda_.4} parent=42 // loop_body
                  _
                $region48: #{_lambda_.4} parent=42 // loop_footer
                  %s317 = sadd.s32 1, %s313
                $region49: #{_lambda_.4} parent=42 // loop_footer_branch
                  %312 = sbr.rel target = $region45
                $region50: #{_lambda_.4} parent=42 // loop_exit
                  _
                %s321 = ssub.s32 16, 1
                loop: start=0, step=1, limit=1
                $region51: #{_lambda_.4} parent=42 // loop_pre_header
                  _
                $region52: #{_lambda_.4} parent=42 // loop_header
                  %s323 = sphi 0, %s327
                  %p324 = scmp.ge.s32.totalorder %s323, 1
                  %s328 = sphi %s185, %s185
                  %s329 = sphi %s181, %s181
                $region53: #{_lambda_.4} parent=42 // loop_header_branch
                  %326 = sbr.rel (%p324) target = $region57
                $region54: #{_lambda_.4} parent=42 // loop_body
                  %v330 = vld [vmem:[%s328] sm:%s321]
                  %331 = vst [vmem:[%s329] sm:%s321] %v330
                  %v332 = vld [vmem:[%s328 + $0x8] sm:%s321]
                  %333 = vst [vmem:[%s329 + $0x4] sm:%s321] %v332
                  %v334 = vld [vmem:[%s328 + $0x10] sm:%s321]
                  %335 = vst [vmem:[%s329 + $0x8] sm:%s321] %v334
                  %v336 = vld [vmem:[%s328 + $0x18] sm:%s321]
                  %337 = vst [vmem:[%s329 + $0xc] sm:%s321] %v336
                  %v338 = vld [vmem:[%s328 + $0x20] sm:%s321]
                  %339 = vst [vmem:[%s329 + $0x10] sm:%s321] %v338
                  %v340 = vld [vmem:[%s328 + $0x28] sm:%s321]
                  %341 = vst [vmem:[%s329 + $0x14] sm:%s321] %v340
                  %v342 = vld [vmem:[%s328 + $0x30] sm:%s321]
                  %343 = vst [vmem:[%s329 + $0x18] sm:%s321] %v342
                  %v344 = vld [vmem:[%s328 + $0x38] sm:%s321]
                  %345 = vst [vmem:[%s329 + $0x1c] sm:%s321] %v344
                  %v346 = vld [vmem:[%s328 + $0x40] sm:%s321]
                  %347 = vst [vmem:[%s329 + $0x20] sm:%s321] %v346
                  %v348 = vld [vmem:[%s328 + $0x48] sm:%s321]
                  %349 = vst [vmem:[%s329 + $0x24] sm:%s321] %v348
                  %v350 = vld [vmem:[%s328 + $0x50] sm:%s321]
                  %351 = vst [vmem:[%s329 + $0x28] sm:%s321] %v350
                  %v352 = vld [vmem:[%s328 + $0x58] sm:%s321]
                  %353 = vst [vmem:[%s329 + $0x2c] sm:%s321] %v352
                  %v354 = vld [vmem:[%s328 + $0x60] sm:%s321]
                  %355 = vst [vmem:[%s329 + $0x30] sm:%s321] %v354
                  %v356 = vld [vmem:[%s328 + $0x68] sm:%s321]
                  %357 = vst [vmem:[%s329 + $0x34] sm:%s321] %v356
                  %v358 = vld [vmem:[%s328 + $0x70] sm:%s321]
                  %359 = vst [vmem:[%s329 + $0x38] sm:%s321] %v358
                  %v360 = vld [vmem:[%s328 + $0x78] sm:%s321]
                  %361 = vst [vmem:[%s329 + $0x3c] sm:%s321] %v360
                  %v362 = vld [vmem:[%s328 + $0x80] sm:%s321]
                  %363 = vst [vmem:[%s329 + $0x40] sm:%s321] %v362
                  %v364 = vld [vmem:[%s328 + $0x88] sm:%s321]
                  %365 = vst [vmem:[%s329 + $0x44] sm:%s321] %v364
                  %v366 = vld [vmem:[%s328 + $0x90] sm:%s321]
                  %367 = vst [vmem:[%s329 + $0x48] sm:%s321] %v366
                  %v368 = vld [vmem:[%s328 + $0x98] sm:%s321]
                  %369 = vst [vmem:[%s329 + $0x4c] sm:%s321] %v368
                  %v370 = vld [vmem:[%s328 + $0xa0] sm:%s321]
                  %371 = vst [vmem:[%s329 + $0x50] sm:%s321] %v370
                  %v372 = vld [vmem:[%s328 + $0xa8] sm:%s321]
                  %373 = vst [vmem:[%s329 + $0x54] sm:%s321] %v372
                  %v374 = vld [vmem:[%s328 + $0xb0] sm:%s321]
                  %375 = vst [vmem:[%s329 + $0x58] sm:%s321] %v374
                  %v376 = vld [vmem:[%s328 + $0xb8] sm:%s321]
                  %377 = vst [vmem:[%s329 + $0x5c] sm:%s321] %v376
                  %v378 = vld [vmem:[%s328 + $0xc0] sm:%s321]
                  %379 = vst [vmem:[%s329 + $0x60] sm:%s321] %v378
                  %v380 = vld [vmem:[%s328 + $0xc8] sm:%s321]
                  %381 = vst [vmem:[%s329 + $0x64] sm:%s321] %v380
                  %v382 = vld [vmem:[%s328 + $0xd0] sm:%s321]
                  %383 = vst [vmem:[%s329 + $0x68] sm:%s321] %v382
                  %v384 = vld [vmem:[%s328 + $0xd8] sm:%s321]
                  %385 = vst [vmem:[%s329 + $0x6c] sm:%s321] %v384
                  %v386 = vld [vmem:[%s328 + $0xe0] sm:%s321]
                  %387 = vst [vmem:[%s329 + $0x70] sm:%s321] %v386
                  %v388 = vld [vmem:[%s328 + $0xe8] sm:%s321]
                  %389 = vst [vmem:[%s329 + $0x74] sm:%s321] %v388
                  %v390 = vld [vmem:[%s328 + $0xf0] sm:%s321]
                  %391 = vst [vmem:[%s329 + $0x78] sm:%s321] %v390
                  %v392 = vld [vmem:[%s328 + $0xf8] sm:%s321]
                  %393 = vst [vmem:[%s329 + $0x7c] sm:%s321] %v392
                  %v394 = vld [vmem:[%s328 + $0x100] sm:%s321]
                  %395 = vst [vmem:[%s329 + $0x80] sm:%s321] %v394
                  %v396 = vld [vmem:[%s328 + $0x108] sm:%s321]
                  %397 = vst [vmem:[%s329 + $0x84] sm:%s321] %v396
                  %v398 = vld [vmem:[%s328 + $0x110] sm:%s321]
                  %399 = vst [vmem:[%s329 + $0x88] sm:%s321] %v398
                  %v400 = vld [vmem:[%s328 + $0x118] sm:%s321]
                  %401 = vst [vmem:[%s329 + $0x8c] sm:%s321] %v400
                  %v402 = vld [vmem:[%s328 + $0x120] sm:%s321]
                  %403 = vst [vmem:[%s329 + $0x90] sm:%s321] %v402
                  %v404 = vld [vmem:[%s328 + $0x128] sm:%s321]
                  %405 = vst [vmem:[%s329 + $0x94] sm:%s321] %v404
                  %v406 = vld [vmem:[%s328 + $0x130] sm:%s321]
                  %407 = vst [vmem:[%s329 + $0x98] sm:%s321] %v406
                  %v408 = vld [vmem:[%s328 + $0x138] sm:%s321]
                  %409 = vst [vmem:[%s329 + $0x9c] sm:%s321] %v408
                  %v410 = vld [vmem:[%s328 + $0x140] sm:%s321]
                  %411 = vst [vmem:[%s329 + $0xa0] sm:%s321] %v410
                  %v412 = vld [vmem:[%s328 + $0x148] sm:%s321]
                  %413 = vst [vmem:[%s329 + $0xa4] sm:%s321] %v412
                  %v414 = vld [vmem:[%s328 + $0x150] sm:%s321]
                  %415 = vst [vmem:[%s329 + $0xa8] sm:%s321] %v414
                  %v416 = vld [vmem:[%s328 + $0x158] sm:%s321]
                  %417 = vst [vmem:[%s329 + $0xac] sm:%s321] %v416
                  %v418 = vld [vmem:[%s328 + $0x160] sm:%s321]
                  %419 = vst [vmem:[%s329 + $0xb0] sm:%s321] %v418
                  %v420 = vld [vmem:[%s328 + $0x168] sm:%s321]
                  %421 = vst [vmem:[%s329 + $0xb4] sm:%s321] %v420
                  %v422 = vld [vmem:[%s328 + $0x170] sm:%s321]
                  %423 = vst [vmem:[%s329 + $0xb8] sm:%s321] %v422
                  %v424 = vld [vmem:[%s328 + $0x178] sm:%s321]
                  %425 = vst [vmem:[%s329 + $0xbc] sm:%s321] %v424
                  %v426 = vld [vmem:[%s328 + $0x180] sm:%s321]
                  %427 = vst [vmem:[%s329 + $0xc0] sm:%s321] %v426
                  %v428 = vld [vmem:[%s328 + $0x188] sm:%s321]
                  %429 = vst [vmem:[%s329 + $0xc4] sm:%s321] %v428
                  %v430 = vld [vmem:[%s328 + $0x190] sm:%s321]
                  %431 = vst [vmem:[%s329 + $0xc8] sm:%s321] %v430
                  %v432 = vld [vmem:[%s328 + $0x198] sm:%s321]
                  %433 = vst [vmem:[%s329 + $0xcc] sm:%s321] %v432
                  %v434 = vld [vmem:[%s328 + $0x1a0] sm:%s321]
                  %435 = vst [vmem:[%s329 + $0xd0] sm:%s321] %v434
                  %v436 = vld [vmem:[%s328 + $0x1a8] sm:%s321]
                  %437 = vst [vmem:[%s329 + $0xd4] sm:%s321] %v436
                $region55: #{_lambda_.4} parent=42 // loop_footer
                  %s327 = sadd.s32 1, %s323
                $region56: #{_lambda_.4} parent=42 // loop_footer_branch
                  %322 = sbr.rel target = $region52
                $region57: #{_lambda_.4} parent=42 // loop_exit
                  _
              $region43: #{_lambda_.4} parent=27 // pred_fallthru
                _
            $region28: #{_lambda_.4} parent=23 // pred_fallthru
              _
            // Predicated region
            $region29: #{_lambda_.4} parent=23 // pred_check
              _
            $region30: #{_lambda_.4} parent=23 // pred_check_branch
              %191 = sbr.rel (0) target = $region32
            $region31: #{_lambda_.4} parent=23 // pred_region
              %s193 = ssub.s32 16, 1
              loop: start=0, step=1, limit=1
              $region33: #{_lambda_.4} parent=31 // loop_pre_header
                _
              $region34: #{_lambda_.4} parent=31 // loop_header
                %s195 = sphi 0, %s199
                %p196 = scmp.ge.s32.totalorder %s195, 1
                %s200 = sphi %s185, %s185
                %s201 = sphi %s181, %s181
              $region35: #{_lambda_.4} parent=31 // loop_header_branch
                %198 = sbr.rel (%p196) target = $region39
              $region36: #{_lambda_.4} parent=31 // loop_body
                %v202 = vld [vmem:[%s200] sm:%s193]
                %203 = vst [vmem:[%s201] sm:%s193] %v202
                %v204 = vld [vmem:[%s200 + $0x8] sm:%s193]
                %205 = vst [vmem:[%s201 + $0x4] sm:%s193] %v204
                %v206 = vld [vmem:[%s200 + $0x10] sm:%s193]
                %207 = vst [vmem:[%s201 + $0x8] sm:%s193] %v206
                %v208 = vld [vmem:[%s200 + $0x18] sm:%s193]
                %209 = vst [vmem:[%s201 + $0xc] sm:%s193] %v208
                %v210 = vld [vmem:[%s200 + $0x20] sm:%s193]
                %211 = vst [vmem:[%s201 + $0x10] sm:%s193] %v210
                %v212 = vld [vmem:[%s200 + $0x28] sm:%s193]
                %213 = vst [vmem:[%s201 + $0x14] sm:%s193] %v212
                %v214 = vld [vmem:[%s200 + $0x30] sm:%s193]
                %215 = vst [vmem:[%s201 + $0x18] sm:%s193] %v214
                %v216 = vld [vmem:[%s200 + $0x38] sm:%s193]
                %217 = vst [vmem:[%s201 + $0x1c] sm:%s193] %v216
                %v218 = vld [vmem:[%s200 + $0x40] sm:%s193]
                %219 = vst [vmem:[%s201 + $0x20] sm:%s193] %v218
                %v220 = vld [vmem:[%s200 + $0x48] sm:%s193]
                %221 = vst [vmem:[%s201 + $0x24] sm:%s193] %v220
                %v222 = vld [vmem:[%s200 + $0x50] sm:%s193]
                %223 = vst [vmem:[%s201 + $0x28] sm:%s193] %v222
                %v224 = vld [vmem:[%s200 + $0x58] sm:%s193]
                %225 = vst [vmem:[%s201 + $0x2c] sm:%s193] %v224
                %v226 = vld [vmem:[%s200 + $0x60] sm:%s193]
                %227 = vst [vmem:[%s201 + $0x30] sm:%s193] %v226
                %v228 = vld [vmem:[%s200 + $0x68] sm:%s193]
                %229 = vst [vmem:[%s201 + $0x34] sm:%s193] %v228
                %v230 = vld [vmem:[%s200 + $0x70] sm:%s193]
                %231 = vst [vmem:[%s201 + $0x38] sm:%s193] %v230
                %v232 = vld [vmem:[%s200 + $0x78] sm:%s193]
                %233 = vst [vmem:[%s201 + $0x3c] sm:%s193] %v232
                %v234 = vld [vmem:[%s200 + $0x80] sm:%s193]
                %235 = vst [vmem:[%s201 + $0x40] sm:%s193] %v234
                %v236 = vld [vmem:[%s200 + $0x88] sm:%s193]
                %237 = vst [vmem:[%s201 + $0x44] sm:%s193] %v236
                %v238 = vld [vmem:[%s200 + $0x90] sm:%s193]
                %239 = vst [vmem:[%s201 + $0x48] sm:%s193] %v238
                %v240 = vld [vmem:[%s200 + $0x98] sm:%s193]
                %241 = vst [vmem:[%s201 + $0x4c] sm:%s193] %v240
                %v242 = vld [vmem:[%s200 + $0xa0] sm:%s193]
                %243 = vst [vmem:[%s201 + $0x50] sm:%s193] %v242
                %v244 = vld [vmem:[%s200 + $0xa8] sm:%s193]
                %245 = vst [vmem:[%s201 + $0x54] sm:%s193] %v244
                %v246 = vld [vmem:[%s200 + $0xb0] sm:%s193]
                %247 = vst [vmem:[%s201 + $0x58] sm:%s193] %v246
                %v248 = vld [vmem:[%s200 + $0xb8] sm:%s193]
                %249 = vst [vmem:[%s201 + $0x5c] sm:%s193] %v248
                %v250 = vld [vmem:[%s200 + $0xc0] sm:%s193]
                %251 = vst [vmem:[%s201 + $0x60] sm:%s193] %v250
                %v252 = vld [vmem:[%s200 + $0xc8] sm:%s193]
                %253 = vst [vmem:[%s201 + $0x64] sm:%s193] %v252
                %v254 = vld [vmem:[%s200 + $0xd0] sm:%s193]
                %255 = vst [vmem:[%s201 + $0x68] sm:%s193] %v254
                %v256 = vld [vmem:[%s200 + $0xd8] sm:%s193]
                %257 = vst [vmem:[%s201 + $0x6c] sm:%s193] %v256
                %v258 = vld [vmem:[%s200 + $0xe0] sm:%s193]
                %259 = vst [vmem:[%s201 + $0x70] sm:%s193] %v258
                %v260 = vld [vmem:[%s200 + $0xe8] sm:%s193]
                %261 = vst [vmem:[%s201 + $0x74] sm:%s193] %v260
                %v262 = vld [vmem:[%s200 + $0xf0] sm:%s193]
                %263 = vst [vmem:[%s201 + $0x78] sm:%s193] %v262
                %v264 = vld [vmem:[%s200 + $0xf8] sm:%s193]
                %265 = vst [vmem:[%s201 + $0x7c] sm:%s193] %v264
                %v266 = vld [vmem:[%s200 + $0x100] sm:%s193]
                %267 = vst [vmem:[%s201 + $0x80] sm:%s193] %v266
                %v268 = vld [vmem:[%s200 + $0x108] sm:%s193]
                %269 = vst [vmem:[%s201 + $0x84] sm:%s193] %v268
                %v270 = vld [vmem:[%s200 + $0x110] sm:%s193]
                %271 = vst [vmem:[%s201 + $0x88] sm:%s193] %v270
                %v272 = vld [vmem:[%s200 + $0x118] sm:%s193]
                %273 = vst [vmem:[%s201 + $0x8c] sm:%s193] %v272
                %v274 = vld [vmem:[%s200 + $0x120] sm:%s193]
                %275 = vst [vmem:[%s201 + $0x90] sm:%s193] %v274
                %v276 = vld [vmem:[%s200 + $0x128] sm:%s193]
                %277 = vst [vmem:[%s201 + $0x94] sm:%s193] %v276
                %v278 = vld [vmem:[%s200 + $0x130] sm:%s193]
                %279 = vst [vmem:[%s201 + $0x98] sm:%s193] %v278
                %v280 = vld [vmem:[%s200 + $0x138] sm:%s193]
                %281 = vst [vmem:[%s201 + $0x9c] sm:%s193] %v280
                %v282 = vld [vmem:[%s200 + $0x140] sm:%s193]
                %283 = vst [vmem:[%s201 + $0xa0] sm:%s193] %v282
                %v284 = vld [vmem:[%s200 + $0x148] sm:%s193]
                %285 = vst [vmem:[%s201 + $0xa4] sm:%s193] %v284
                %v286 = vld [vmem:[%s200 + $0x150] sm:%s193]
                %287 = vst [vmem:[%s201 + $0xa8] sm:%s193] %v286
                %v288 = vld [vmem:[%s200 + $0x158] sm:%s193]
                %289 = vst [vmem:[%s201 + $0xac] sm:%s193] %v288
                %v290 = vld [vmem:[%s200 + $0x160] sm:%s193]
                %291 = vst [vmem:[%s201 + $0xb0] sm:%s193] %v290
                %v292 = vld [vmem:[%s200 + $0x168] sm:%s193]
                %293 = vst [vmem:[%s201 + $0xb4] sm:%s193] %v292
                %v294 = vld [vmem:[%s200 + $0x170] sm:%s193]
                %295 = vst [vmem:[%s201 + $0xb8] sm:%s193] %v294
                %v296 = vld [vmem:[%s200 + $0x178] sm:%s193]
                %297 = vst [vmem:[%s201 + $0xbc] sm:%s193] %v296
                %v298 = vld [vmem:[%s200 + $0x180] sm:%s193]
                %299 = vst [vmem:[%s201 + $0xc0] sm:%s193] %v298
                %v300 = vld [vmem:[%s200 + $0x188] sm:%s193]
                %301 = vst [vmem:[%s201 + $0xc4] sm:%s193] %v300
                %v302 = vld [vmem:[%s200 + $0x190] sm:%s193]
                %303 = vst [vmem:[%s201 + $0xc8] sm:%s193] %v302
                %v304 = vld [vmem:[%s200 + $0x198] sm:%s193]
                %305 = vst [vmem:[%s201 + $0xcc] sm:%s193] %v304
                %v306 = vld [vmem:[%s200 + $0x1a0] sm:%s193]
                %307 = vst [vmem:[%s201 + $0xd0] sm:%s193] %v306
                %v308 = vld [vmem:[%s200 + $0x1a8] sm:%s193]
                %309 = vst [vmem:[%s201 + $0xd4] sm:%s193] %v308
              $region37: #{_lambda_.4} parent=31 // loop_footer
                %s199 = sadd.s32 1, %s195
              $region38: #{_lambda_.4} parent=31 // loop_footer_branch
                %194 = sbr.rel target = $region34
              $region39: #{_lambda_.4} parent=31 // loop_exit
                _
            $region32: #{_lambda_.4} parent=23 // pred_fallthru
              _
          $region24: #{_lambda_.4} parent=19 // pred_fallthru
            _
          %438 = vnop
        $region20: #{_lambda_.4} parent=15 // pred_fallthru
          _
        // Predicated region
        $region58: #{_lambda_.4} parent=15 // pred_check
          %p439 = pneg %p70
        $region59: #{_lambda_.4} parent=15 // pred_check_branch
          %441 = sbr.rel (%p439) target = $region61
        $region60: #{_lambda_.4} parent=15 // pred_region
          %s442 = sand.u32 %s60, 1
          %s443 = sand.u32 %s60, 1
          %s444 = smul.addr %s443, 8
          %s445 = scalar_lea.vmem [#allocation3], %s444
          %s446 = smul.addr %s18, 4
          %s447 = scalar_lea.vmem %s1, %s446
          // Predicated region
          $region62: #{_lambda_.4} parent=60 // pred_check
            _
          $region63: #{_lambda_.4} parent=60 // pred_check_branch
            %449 = sbr.rel (0) target = $region65
          $region64: #{_lambda_.4} parent=60 // pred_region
            // Predicated region
            $region66: #{_lambda_.4} parent=64 // pred_check
              _
            $region67: #{_lambda_.4} parent=64 // pred_check_branch
              %451 = sbr.rel target = $region69
            $region68: #{_lambda_.4} parent=64 // pred_region
              // Predicated region
              $region81: #{_lambda_.4} parent=68 // pred_check
                _
              $region82: #{_lambda_.4} parent=68 // pred_check_branch
                %469 = sbr.rel (0) target = $region84
              $region83: #{_lambda_.4} parent=68 // pred_region
                loop: start=0, step=1, limit=1
                $region85: #{_lambda_.4} parent=83 // loop_pre_header
                  _
                $region86: #{_lambda_.4} parent=83 // loop_header
                  %s471 = sphi 0, %s475
                  %p472 = scmp.ge.s32.totalorder %s471, 1
                  %s476 = sphi %s447, %s447
                  %s477 = sphi %s445, %s445
                $region87: #{_lambda_.4} parent=83 // loop_header_branch
                  %474 = sbr.rel (%p472) target = $region91
                $region88: #{_lambda_.4} parent=83 // loop_body
                  _
                $region89: #{_lambda_.4} parent=83 // loop_footer
                  %s475 = sadd.s32 1, %s471
                $region90: #{_lambda_.4} parent=83 // loop_footer_branch
                  %470 = sbr.rel target = $region86
                $region91: #{_lambda_.4} parent=83 // loop_exit
                  _
                %s479 = ssub.s32 16, 1
                loop: start=0, step=1, limit=1
                $region92: #{_lambda_.4} parent=83 // loop_pre_header
                  _
                $region93: #{_lambda_.4} parent=83 // loop_header
                  %s481 = sphi 0, %s485
                  %p482 = scmp.ge.s32.totalorder %s481, 1
                  %s486 = sphi %s447, %s447
                  %s487 = sphi %s445, %s445
                $region94: #{_lambda_.4} parent=83 // loop_header_branch
                  %484 = sbr.rel (%p482) target = $region98
                $region95: #{_lambda_.4} parent=83 // loop_body
                  %v488 = vld [vmem:[%s486] sm:%s479]
                  %489 = vst [vmem:[%s487] sm:%s479] %v488
                  %v490 = vld [vmem:[%s486 + $0x8] sm:%s479]
                  %491 = vst [vmem:[%s487 + $0x4] sm:%s479] %v490
                $region96: #{_lambda_.4} parent=83 // loop_footer
                  %s485 = sadd.s32 1, %s481
                $region97: #{_lambda_.4} parent=83 // loop_footer_branch
                  %480 = sbr.rel target = $region93
                $region98: #{_lambda_.4} parent=83 // loop_exit
                  _
              $region84: #{_lambda_.4} parent=68 // pred_fallthru
                _
            $region69: #{_lambda_.4} parent=64 // pred_fallthru
              _
            // Predicated region
            $region70: #{_lambda_.4} parent=64 // pred_check
              _
            $region71: #{_lambda_.4} parent=64 // pred_check_branch
              %453 = sbr.rel (0) target = $region73
            $region72: #{_lambda_.4} parent=64 // pred_region
              %s455 = ssub.s32 16, 1
              loop: start=0, step=1, limit=1
              $region74: #{_lambda_.4} parent=72 // loop_pre_header
                _
              $region75: #{_lambda_.4} parent=72 // loop_header
                %s457 = sphi 0, %s461
                %p458 = scmp.ge.s32.totalorder %s457, 1
                %s462 = sphi %s447, %s447
                %s463 = sphi %s445, %s445
              $region76: #{_lambda_.4} parent=72 // loop_header_branch
                %460 = sbr.rel (%p458) target = $region80
              $region77: #{_lambda_.4} parent=72 // loop_body
                %v464 = vld [vmem:[%s462] sm:%s455]
                %465 = vst [vmem:[%s463] sm:%s455] %v464
                %v466 = vld [vmem:[%s462 + $0x8] sm:%s455]
                %467 = vst [vmem:[%s463 + $0x4] sm:%s455] %v466
              $region78: #{_lambda_.4} parent=72 // loop_footer
                %s461 = sadd.s32 1, %s457
              $region79: #{_lambda_.4} parent=72 // loop_footer_branch
                %456 = sbr.rel target = $region75
              $region80: #{_lambda_.4} parent=72 // loop_exit
                _
            $region73: #{_lambda_.4} parent=64 // pred_fallthru
              _
          $region65: #{_lambda_.4} parent=60 // pred_fallthru
            _
          %492 = vnop
        $region61: #{_lambda_.4} parent=15 // pred_fallthru
          _
        // Predicated region
        $region99: #{_lambda_.4} parent=15 // pred_check
          %p493 = pneg %p96
        $region100: #{_lambda_.4} parent=15 // pred_check_branch
          %495 = sbr.rel (%p493) target = $region102
        $region101: #{_lambda_.4} parent=15 // pred_region
          %p496 = scmp.lt.s32.totalorder %s18, 1
          %s497 = scalar_select %p496, %s18, 1
          %s498 = scalar_lea.vmem %s2, %s497
        $region102: #{_lambda_.4} parent=15 // pred_fallthru
          _
        // Predicated region
        $region103: #{_lambda_.4} parent=15 // pred_check
          %p499 = pneg %p122
        $region104: #{_lambda_.4} parent=15 // pred_check_branch
          %501 = sbr.rel (%p499) target = $region106
        $region105: #{_lambda_.4} parent=15 // pred_region
          %p502 = scmp.lt.s32.totalorder %s18, 1
          %s503 = scalar_select %p502, %s18, 1
          %s504 = scalar_lea.vmem %s3, %s503
        $region106: #{_lambda_.4} parent=15 // pred_fallthru
          _
      $region16: #{_lambda_.4} parent=5 // pred_fallthru
        _
      %p505 = scmp.le.s32.totalorder 1, %s10
      %p506 = scmp.lt.s32.totalorder %s10, 5
      %p507 = pnand %p505, %p506
      %p508 = pneg %p507
      // Predicated region
      $region107: #{_lambda_.4} parent=5 // pred_check
        _
      $region108: #{_lambda_.4} parent=5 // pred_check_branch
        %510 = sbr.rel (%p507) target = $region110
      $region109: #{_lambda_.4} parent=5 // pred_region
        %s511 = ssub.s32 %s10, 1
        %s512 = sand.u32 %s37, 1
        %s513 = sand.u32 %s37, 1
        %s514 = smul.addr %s513, 216
        %s515 = scalar_lea.vmem [#allocation2], %s514
        // Predicated region
        $region111: #{_lambda_.4} parent=109 // pred_check
          %p516 = pneg %p50
        $region112: #{_lambda_.4} parent=109 // pred_check_branch
          %518 = sbr.rel (%p516) target = $region114
        $region113: #{_lambda_.4} parent=109 // pred_region
          _
        $region114: #{_lambda_.4} parent=109 // pred_fallthru
          _
        %s519 = sand.u32 %s63, 1
        %s520 = sand.u32 %s63, 1
        %s521 = smul.addr %s520, 8
        %s522 = scalar_lea.vmem [#allocation3], %s521
        // Predicated region
        $region115: #{_lambda_.4} parent=109 // pred_check
          %p523 = pneg %p76
        $region116: #{_lambda_.4} parent=109 // pred_check_branch
          %525 = sbr.rel (%p523) target = $region118
        $region117: #{_lambda_.4} parent=109 // pred_region
          _
        $region118: #{_lambda_.4} parent=109 // pred_fallthru
          _
        %s526 = sand.u32 %s37, 1
        %s527 = sand.u32 %s37, 1
        %s528 = smul.addr %s527, 216
        %s529 = scalar_lea.vmem [#allocation2], %s528
        %p530 = pneg %p50
        %p531 = pneg %p47
        %s532 = sand.u32 %s63, 1
        %s533 = sand.u32 %s63, 1
        %s534 = smul.addr %s533, 8
        %s535 = scalar_lea.vmem [#allocation3], %s534
        %p536 = pneg %p76
        %p537 = pneg %p73
        %p538 = scmp.lt.s32.totalorder %s20, 1
        %s539 = scalar_select %p538, %s20, 1
        %s540 = scalar_lea.vmem %s2, %s539
        %p541 = pneg %p102
        %p542 = pneg %p99
        %p543 = scmp.lt.s32.totalorder %s20, 1
        %s544 = scalar_select %p543, %s20, 1
        %s545 = scalar_lea.vmem %s3, %s544
        %p546 = pneg %p128
        %p547 = pneg %p125
        %p548 = pneg %p156
        %p549 = pneg %p153
        %s550 = sand.u32 %s143, 1
        %s551 = sand.u32 %s143, 1
        %s552 = smul.addr %s551, 128
        %s553 = scalar_lea.vmem [#allocation4], %s552
        %p554 = scmp.lt.s32.totalorder %s20, 1
        %s555 = scalar_select %p554, %s20, 1
        %s556 = scalar_lea.vmem %s2, %s555
        %p557 = scmp.lt.s32.totalorder %s20, 1
        %s558 = scalar_select %p557, %s20, 1
        %s559 = scalar_lea.vmem %s3, %s558
        %v560 = vld [vmem:[%s515] sm:$0xf]
        %v561 = vld [vmem:[%s515 + $0x4] sm:$0xf]
        %v562 = vld [vmem:[%s515 + $0x8] sm:$0x1]
        %v563 = vld [vmem:[%s515 + $0xc] sm:$0xf]
        %v564 = vld [vmem:[%s515 + $0x10] sm:$0xf]
        %v565 = vld [vmem:[%s515 + $0x14] sm:$0x1]
        %v566 = vld [vmem:[%s515 + $0x18] sm:$0xf]
        %v567 = vld [vmem:[%s515 + $0x1c] sm:$0xf]
        %v568 = vld [vmem:[%s515 + $0x20] sm:$0x1]
        %v569 = vld [vmem:[%s515 + $0x24] sm:$0xf]
        %v570 = vld [vmem:[%s515 + $0x28] sm:$0xf]
        %v571 = vld [vmem:[%s515 + $0x2c] sm:$0x1]
        %v572 = vld [vmem:[%s515 + $0x30] sm:$0xf]
        %v573 = vld [vmem:[%s515 + $0x34] sm:$0xf]
        %v574 = vld [vmem:[%s515 + $0x38] sm:$0x1]
        %v575 = vld [vmem:[%s515 + $0x3c] sm:$0xf]
        %v576 = vld [vmem:[%s515 + $0x40] sm:$0xf]
        %v577 = vld [vmem:[%s515 + $0x44] sm:$0x1]
        %v578 = vld [vmem:[%s515 + $0x48] sm:$0xf]
        %v579 = vld [vmem:[%s515 + $0x4c] sm:$0xf]
        %v580 = vld [vmem:[%s515 + $0x50] sm:$0x1]
        %v581 = vld [vmem:[%s515 + $0x54] sm:$0xf]
        %v582 = vld [vmem:[%s515 + $0x58] sm:$0xf]
        %v583 = vld [vmem:[%s515 + $0x5c] sm:$0x1]
        %v584 = vld [vmem:[%s515 + $0x60] sm:$0xf]
        %v585 = vld [vmem:[%s515 + $0x64] sm:$0xf]
        %v586 = vld [vmem:[%s515 + $0x68] sm:$0x1]
        %v587 = vld [vmem:[%s515 + $0x6c] sm:$0xf]
        %v588 = vld [vmem:[%s515 + $0x70] sm:$0xf]
        %v589 = vld [vmem:[%s515 + $0x74] sm:$0x1]
        %v590 = vld [vmem:[%s515 + $0x78] sm:$0xf]
        %v591 = vld [vmem:[%s515 + $0x7c] sm:$0xf]
        %v592 = vld [vmem:[%s515 + $0x80] sm:$0x1]
        %v593 = vld [vmem:[%s515 + $0x84] sm:$0xf]
        %v594 = vld [vmem:[%s515 + $0x88] sm:$0xf]
        %v595 = vld [vmem:[%s515 + $0x8c] sm:$0x1]
        %v596 = vld [vmem:[%s515 + $0x90] sm:$0xf]
        %v597 = vld [vmem:[%s515 + $0x94] sm:$0xf]
        %v598 = vld [vmem:[%s515 + $0x98] sm:$0x1]
        %v599 = vld [vmem:[%s515 + $0x9c] sm:$0xf]
        %v600 = vld [vmem:[%s515 + $0xa0] sm:$0xf]
        %v601 = vld [vmem:[%s515 + $0xa4] sm:$0x1]
        %v602 = vld [vmem:[%s515 + $0xa8] sm:$0xf]
        %v603 = vld [vmem:[%s515 + $0xac] sm:$0xf]
        %v604 = vld [vmem:[%s515 + $0xb0] sm:$0x1]
        %v605 = vld [vmem:[%s515 + $0xb4] sm:$0xf]
        %v606 = vld [vmem:[%s515 + $0xb8] sm:$0xf]
        %v607 = vld [vmem:[%s515 + $0xbc] sm:$0x1]
        %v608 = vld [vmem:[%s515 + $0xc0] sm:$0xf]
        %v609 = vld [vmem:[%s515 + $0xc4] sm:$0xf]
        %v610 = vld [vmem:[%s515 + $0xc8] sm:$0x1]
        %v611 = vld [vmem:[%s515 + $0xcc] sm:$0xf]
        %v612 = vld [vmem:[%s515 + $0xd0] sm:$0xf]
        %v613 = vld [vmem:[%s515 + $0xd4] sm:$0x1]
        %v614 = vld [vmem:[%s522] sm:$0xf]
        %v615 = vld [vmem:[%s522 + $0x4] sm:$0x1]
        %v617 = vpack.i.b16 %v614, %v614
        %v619 = vlaneseq
        %v620 = vshrl.u32 %v619, 7
        %v621 = vsub.s32 0, %v620
        %v622 = vrot.slane %v617, %v621
        %v624 = vunpack.c.l.b16 %v622
        %v625 = vpack.c.b16 %v624, %v624
        %v627 = vmul.bf16 %v560, %v625
        %v628 = vmul.bf16 %v561, %v625
        %v629 = vmul.bf16 %v563, %v625
        %v630 = vmul.bf16 %v564, %v625
        %v631 = vmul.bf16 %v566, %v625
        %v632 = vmul.bf16 %v567, %v625
        %v633 = vmul.bf16 %v569, %v625
        %v634 = vmul.bf16 %v570, %v625
        %v635 = vmul.bf16 %v572, %v625
        %v636 = vmul.bf16 %v573, %v625
        %v637 = vmul.bf16 %v575, %v625
        %v638 = vmul.bf16 %v576, %v625
        %v639 = vmul.bf16 %v578, %v625
        %v640 = vmul.bf16 %v579, %v625
        %v641 = vmul.bf16 %v581, %v625
        %v642 = vmul.bf16 %v582, %v625
        %v643 = vmul.bf16 %v584, %v625
        %v644 = vmul.bf16 %v585, %v625
        %v645 = vmul.bf16 %v587, %v625
        %v646 = vmul.bf16 %v588, %v625
        %v647 = vmul.bf16 %v590, %v625
        %v648 = vmul.bf16 %v591, %v625
        %v649 = vmul.bf16 %v593, %v625
        %v650 = vmul.bf16 %v594, %v625
        %v651 = vmul.bf16 %v596, %v625
        %v652 = vmul.bf16 %v597, %v625
        %v653 = vmul.bf16 %v599, %v625
        %v654 = vmul.bf16 %v600, %v625
        %v655 = vmul.bf16 %v602, %v625
        %v656 = vmul.bf16 %v603, %v625
        %v657 = vmul.bf16 %v605, %v625
        %v658 = vmul.bf16 %v606, %v625
        %v659 = vunpack.c.l.bf16 %v627
        %v660 = vunpack.c.l.bf16 %v628
        %v661 = vunpack.c.l.bf16 %v629
        %v662 = vunpack.c.l.bf16 %v630
        %v663 = vunpack.c.l.bf16 %v631
        %v664 = vunpack.c.l.bf16 %v632
        %v665 = vunpack.c.l.bf16 %v633
        %v666 = vunpack.c.l.bf16 %v634
        %v667 = vunpack.c.l.bf16 %v635
        %v668 = vunpack.c.l.bf16 %v636
        %v669 = vunpack.c.l.bf16 %v637
        %v670 = vunpack.c.l.bf16 %v638
        %v671 = vunpack.c.l.bf16 %v639
        %v672 = vunpack.c.l.bf16 %v640
        %v673 = vunpack.c.l.bf16 %v641
        %v674 = vunpack.c.l.bf16 %v642
        %v675 = vunpack.c.l.bf16 %v643
        %v676 = vunpack.c.l.bf16 %v644
        %v677 = vunpack.c.l.bf16 %v645
        %v678 = vunpack.c.l.bf16 %v646
        %v679 = vunpack.c.l.bf16 %v647
        %v680 = vunpack.c.l.bf16 %v648
        %v681 = vunpack.c.l.bf16 %v649
        %v682 = vunpack.c.l.bf16 %v650
        %v683 = vunpack.c.l.bf16 %v651
        %v684 = vunpack.c.l.bf16 %v652
        %v685 = vunpack.c.l.bf16 %v653
        %v686 = vunpack.c.l.bf16 %v654
        %v687 = vunpack.c.l.bf16 %v655
        %v688 = vunpack.c.l.bf16 %v656
        %v689 = vunpack.c.l.bf16 %v657
        %v690 = vunpack.c.l.bf16 %v658
        %v691 = vadd.f32 %v659, 0.0
        %v692 = vadd.f32 %v660, 0.0
        %v693 = vadd.f32 %v661, 0.0
        %v694 = vadd.f32 %v662, 0.0
        %v695 = vadd.f32 %v663, 0.0
        %v696 = vadd.f32 %v664, 0.0
        %v697 = vadd.f32 %v665, 0.0
        %v698 = vadd.f32 %v666, 0.0
        %v699 = vadd.f32 %v667, 0.0
        %v700 = vadd.f32 %v668, 0.0
        %v701 = vadd.f32 %v669, 0.0
        %v702 = vadd.f32 %v670, 0.0
        %v703 = vadd.f32 %v671, 0.0
        %v704 = vadd.f32 %v672, 0.0
        %v705 = vadd.f32 %v673, 0.0
        %v706 = vadd.f32 %v674, 0.0
        %v707 = vadd.f32 %v675, 0.0
        %v708 = vadd.f32 %v676, 0.0
        %v709 = vadd.f32 %v677, 0.0
        %v710 = vadd.f32 %v678, 0.0
        %v711 = vadd.f32 %v679, 0.0
        %v712 = vadd.f32 %v680, 0.0
        %v713 = vadd.f32 %v681, 0.0
        %v714 = vadd.f32 %v682, 0.0
        %v715 = vadd.f32 %v683, 0.0
        %v716 = vadd.f32 %v684, 0.0
        %v717 = vadd.f32 %v685, 0.0
        %v718 = vadd.f32 %v686, 0.0
        %v719 = vadd.f32 %v687, 0.0
        %v720 = vadd.f32 %v688, 0.0
        %v721 = vadd.f32 %v689, 0.0
        %v722 = vadd.f32 %v690, 0.0
        %v723 = vshrl.u32 %v614, 16
        %v724 = vpack.i.b16 %v723, %v723
        %v726 = vlaneseq
        %v727 = vshrl.u32 %v726, 7
        %v728 = vsub.s32 0, %v727
        %v729 = vrot.slane %v724, %v728
        %v731 = vunpack.c.l.b16 %v729
        %v732 = vpack.c.b16 %v731, %v731
        %v734 = vmul.bf16 %v560, %v732
        %v735 = vmul.bf16 %v561, %v732
        %v736 = vmul.bf16 %v562, %v732
        %v737 = vmul.bf16 %v563, %v732
        %v738 = vmul.bf16 %v564, %v732
        %v739 = vmul.bf16 %v565, %v732
        %v740 = vmul.bf16 %v566, %v732
        %v741 = vmul.bf16 %v567, %v732
        %v742 = vmul.bf16 %v568, %v732
        %v743 = vmul.bf16 %v569, %v732
        %v744 = vmul.bf16 %v570, %v732
        %v745 = vmul.bf16 %v571, %v732
        %v746 = vmul.bf16 %v572, %v732
        %v747 = vmul.bf16 %v573, %v732
        %v748 = vmul.bf16 %v574, %v732
        %v749 = vmul.bf16 %v575, %v732
        %v750 = vmul.bf16 %v576, %v732
        %v751 = vmul.bf16 %v577, %v732
        %v752 = vmul.bf16 %v578, %v732
        %v753 = vmul.bf16 %v579, %v732
        %v754 = vmul.bf16 %v580, %v732
        %v755 = vmul.bf16 %v581, %v732
        %v756 = vmul.bf16 %v582, %v732
        %v757 = vmul.bf16 %v583, %v732
        %v758 = vmul.bf16 %v584, %v732
        %v759 = vmul.bf16 %v585, %v732
        %v760 = vmul.bf16 %v586, %v732
        %v761 = vmul.bf16 %v587, %v732
        %v762 = vmul.bf16 %v588, %v732
        %v763 = vmul.bf16 %v589, %v732
        %v764 = vmul.bf16 %v590, %v732
        %v765 = vmul.bf16 %v591, %v732
        %v766 = vmul.bf16 %v592, %v732
        %v767 = vmul.bf16 %v593, %v732
        %v768 = vmul.bf16 %v594, %v732
        %v769 = vmul.bf16 %v595, %v732
        %v770 = vmul.bf16 %v596, %v732
        %v771 = vmul.bf16 %v597, %v732
        %v772 = vmul.bf16 %v598, %v732
        %v773 = vmul.bf16 %v599, %v732
        %v774 = vmul.bf16 %v600, %v732
        %v775 = vmul.bf16 %v601, %v732
        %v776 = vmul.bf16 %v602, %v732
        %v777 = vmul.bf16 %v603, %v732
        %v778 = vmul.bf16 %v604, %v732
        %v779 = vmul.bf16 %v605, %v732
        %v780 = vmul.bf16 %v606, %v732
        %v781 = vmul.bf16 %v607, %v732
        %v782 = vunpack.c.l.bf16 %v734
        %v783 = vunpack.c.l.bf16 %v735
        %v784 = vunpack.c.l.bf16 %v736
        %v785 = vunpack.c.l.bf16 %v737
        %v786 = vunpack.c.l.bf16 %v738
        %v787 = vunpack.c.l.bf16 %v739
        %v788 = vunpack.c.l.bf16 %v740
        %v789 = vunpack.c.l.bf16 %v741
        %v790 = vunpack.c.l.bf16 %v742
        %v791 = vunpack.c.l.bf16 %v743
        %v792 = vunpack.c.l.bf16 %v744
        %v793 = vunpack.c.l.bf16 %v745
        %v794 = vunpack.c.l.bf16 %v746
        %v795 = vunpack.c.l.bf16 %v747
        %v796 = vunpack.c.l.bf16 %v748
        %v797 = vunpack.c.l.bf16 %v749
        %v798 = vunpack.c.l.bf16 %v750
        %v799 = vunpack.c.l.bf16 %v751
        %v800 = vunpack.c.l.bf16 %v752
        %v801 = vunpack.c.l.bf16 %v753
        %v802 = vunpack.c.l.bf16 %v754
        %v803 = vunpack.c.l.bf16 %v755
        %v804 = vunpack.c.l.bf16 %v756
        %v805 = vunpack.c.l.bf16 %v757
        %v806 = vunpack.c.l.bf16 %v758
        %v807 = vunpack.c.l.bf16 %v759
        %v808 = vunpack.c.l.bf16 %v760
        %v809 = vunpack.c.l.bf16 %v761
        %v810 = vunpack.c.l.bf16 %v762
        %v811 = vunpack.c.l.bf16 %v763
        %v812 = vunpack.c.l.bf16 %v764
        %v813 = vunpack.c.l.bf16 %v765
        %v814 = vunpack.c.l.bf16 %v766
        %v815 = vunpack.c.l.bf16 %v767
        %v816 = vunpack.c.l.bf16 %v768
        %v817 = vunpack.c.l.bf16 %v769
        %v818 = vunpack.c.l.bf16 %v770
        %v819 = vunpack.c.l.bf16 %v771
        %v820 = vunpack.c.l.bf16 %v772
        %v821 = vunpack.c.l.bf16 %v773
        %v822 = vunpack.c.l.bf16 %v774
        %v823 = vunpack.c.l.bf16 %v775
        %v824 = vunpack.c.l.bf16 %v776
        %v825 = vunpack.c.l.bf16 %v777
        %v826 = vunpack.c.l.bf16 %v778
        %v827 = vunpack.c.l.bf16 %v779
        %v828 = vunpack.c.l.bf16 %v780
        %v829 = vunpack.c.l.bf16 %v781
        %vm878 = vcmask 1046528
        %v879 = vrot.slane %v782, 1
        %v880 = vrot.slane %v783, 1
        %v881 = vsel %vm878, %v879, %v880
        %v882 = vrot.slane %v784, 1
        %v883 = vsel %vm878, %v880, %v882
        %v884 = vrot.slane %v785, 1
        %v885 = vrot.slane %v786, 1
        %v886 = vsel %vm878, %v884, %v885
        %v887 = vrot.slane %v787, 1
        %v888 = vsel %vm878, %v885, %v887
        %v889 = vrot.slane %v788, 1
        %v890 = vrot.slane %v789, 1
        %v891 = vsel %vm878, %v889, %v890
        %v892 = vrot.slane %v790, 1
        %v893 = vsel %vm878, %v890, %v892
        %v894 = vrot.slane %v791, 1
        %v895 = vrot.slane %v792, 1
        %v896 = vsel %vm878, %v894, %v895
        %v897 = vrot.slane %v793, 1
        %v898 = vsel %vm878, %v895, %v897
        %v899 = vrot.slane %v794, 1
        %v900 = vrot.slane %v795, 1
        %v901 = vsel %vm878, %v899, %v900
        %v902 = vrot.slane %v796, 1
        %v903 = vsel %vm878, %v900, %v902
        %v904 = vrot.slane %v797, 1
        %v905 = vrot.slane %v798, 1
        %v906 = vsel %vm878, %v904, %v905
        %v907 = vrot.slane %v799, 1
        %v908 = vsel %vm878, %v905, %v907
        %v909 = vrot.slane %v800, 1
        %v910 = vrot.slane %v801, 1
        %v911 = vsel %vm878, %v909, %v910
        %v912 = vrot.slane %v802, 1
        %v913 = vsel %vm878, %v910, %v912
        %v914 = vrot.slane %v803, 1
        %v915 = vrot.slane %v804, 1
        %v916 = vsel %vm878, %v914, %v915
        %v917 = vrot.slane %v805, 1
        %v918 = vsel %vm878, %v915, %v917
        %v919 = vrot.slane %v806, 1
        %v920 = vrot.slane %v807, 1
        %v921 = vsel %vm878, %v919, %v920
        %v922 = vrot.slane %v808, 1
        %v923 = vsel %vm878, %v920, %v922
        %v924 = vrot.slane %v809, 1
        %v925 = vrot.slane %v810, 1
        %v926 = vsel %vm878, %v924, %v925
        %v927 = vrot.slane %v811, 1
        %v928 = vsel %vm878, %v925, %v927
        %v929 = vrot.slane %v812, 1
        %v930 = vrot.slane %v813, 1
        %v931 = vsel %vm878, %v929, %v930
        %v932 = vrot.slane %v814, 1
        %v933 = vsel %vm878, %v930, %v932
        %v934 = vrot.slane %v815, 1
        %v935 = vrot.slane %v816, 1
        %v936 = vsel %vm878, %v934, %v935
        %v937 = vrot.slane %v817, 1
        %v938 = vsel %vm878, %v935, %v937
        %v939 = vrot.slane %v818, 1
        %v940 = vrot.slane %v819, 1
        %v941 = vsel %vm878, %v939, %v940
        %v942 = vrot.slane %v820, 1
        %v943 = vsel %vm878, %v940, %v942
        %v944 = vrot.slane %v821, 1
        %v945 = vrot.slane %v822, 1
        %v946 = vsel %vm878, %v944, %v945
        %v947 = vrot.slane %v823, 1
        %v948 = vsel %vm878, %v945, %v947
        %v949 = vrot.slane %v824, 1
        %v950 = vrot.slane %v825, 1
        %v951 = vsel %vm878, %v949, %v950
        %v952 = vrot.slane %v826, 1
        %v953 = vsel %vm878, %v950, %v952
        %v954 = vrot.slane %v827, 1
        %v955 = vrot.slane %v828, 1
        %v956 = vsel %vm878, %v954, %v955
        %v957 = vrot.slane %v829, 1
        %v958 = vsel %vm878, %v955, %v957
        %v991 = vadd.f32 %v691, %v881
        %v992 = vadd.f32 %v692, %v883
        %v993 = vadd.f32 %v693, %v886
        %v994 = vadd.f32 %v694, %v888
        %v995 = vadd.f32 %v695, %v891
        %v996 = vadd.f32 %v696, %v893
        %v997 = vadd.f32 %v697, %v896
        %v998 = vadd.f32 %v698, %v898
        %v999 = vadd.f32 %v699, %v901
        %v1000 = vadd.f32 %v700, %v903
        %v1001 = vadd.f32 %v701, %v906
        %v1002 = vadd.f32 %v702, %v908
        %v1003 = vadd.f32 %v703, %v911
        %v1004 = vadd.f32 %v704, %v913
        %v1005 = vadd.f32 %v705, %v916
        %v1006 = vadd.f32 %v706, %v918
        %v1007 = vadd.f32 %v707, %v921
        %v1008 = vadd.f32 %v708, %v923
        %v1009 = vadd.f32 %v709, %v926
        %v1010 = vadd.f32 %v710, %v928
        %v1011 = vadd.f32 %v711, %v931
        %v1012 = vadd.f32 %v712, %v933
        %v1013 = vadd.f32 %v713, %v936
        %v1014 = vadd.f32 %v714, %v938
        %v1015 = vadd.f32 %v715, %v941
        %v1016 = vadd.f32 %v716, %v943
        %v1017 = vadd.f32 %v717, %v946
        %v1018 = vadd.f32 %v718, %v948
        %v1019 = vadd.f32 %v719, %v951
        %v1020 = vadd.f32 %v720, %v953
        %v1021 = vadd.f32 %v721, %v956
        %v1022 = vadd.f32 %v722, %v958
        %v1023 = vlaneseq
        %v1024 = vshrl.u32 %v1023, 7
        %v1025 = vsub.s32 1, %v1024
        %v1026 = vrot.slane %v617, %v1025
        %v1028 = vunpack.c.l.b16 %v1026
        %v1029 = vpack.c.b16 %v1028, %v1028
        %v1031 = vmul.bf16 %v560, %v1029
        %v1032 = vmul.bf16 %v561, %v1029
        %v1033 = vmul.bf16 %v562, %v1029
        %v1034 = vmul.bf16 %v563, %v1029
        %v1035 = vmul.bf16 %v564, %v1029
        %v1036 = vmul.bf16 %v565, %v1029
        %v1037 = vmul.bf16 %v566, %v1029
        %v1038 = vmul.bf16 %v567, %v1029
        %v1039 = vmul.bf16 %v568, %v1029
        %v1040 = vmul.bf16 %v569, %v1029
        %v1041 = vmul.bf16 %v570, %v1029
        %v1042 = vmul.bf16 %v571, %v1029
        %v1043 = vmul.bf16 %v572, %v1029
        %v1044 = vmul.bf16 %v573, %v1029
        %v1045 = vmul.bf16 %v574, %v1029
        %v1046 = vmul.bf16 %v575, %v1029
        %v1047 = vmul.bf16 %v576, %v1029
        %v1048 = vmul.bf16 %v577, %v1029
        %v1049 = vmul.bf16 %v578, %v1029
        %v1050 = vmul.bf16 %v579, %v1029
        %v1051 = vmul.bf16 %v580, %v1029
        %v1052 = vmul.bf16 %v581, %v1029
        %v1053 = vmul.bf16 %v582, %v1029
        %v1054 = vmul.bf16 %v583, %v1029
        %v1055 = vmul.bf16 %v584, %v1029
        %v1056 = vmul.bf16 %v585, %v1029
        %v1057 = vmul.bf16 %v586, %v1029
        %v1058 = vmul.bf16 %v587, %v1029
        %v1059 = vmul.bf16 %v588, %v1029
        %v1060 = vmul.bf16 %v589, %v1029
        %v1061 = vmul.bf16 %v590, %v1029
        %v1062 = vmul.bf16 %v591, %v1029
        %v1063 = vmul.bf16 %v592, %v1029
        %v1064 = vmul.bf16 %v593, %v1029
        %v1065 = vmul.bf16 %v594, %v1029
        %v1066 = vmul.bf16 %v595, %v1029
        %v1067 = vmul.bf16 %v596, %v1029
        %v1068 = vmul.bf16 %v597, %v1029
        %v1069 = vmul.bf16 %v598, %v1029
        %v1070 = vmul.bf16 %v599, %v1029
        %v1071 = vmul.bf16 %v600, %v1029
        %v1072 = vmul.bf16 %v601, %v1029
        %v1073 = vmul.bf16 %v602, %v1029
        %v1074 = vmul.bf16 %v603, %v1029
        %v1075 = vmul.bf16 %v604, %v1029
        %v1076 = vmul.bf16 %v605, %v1029
        %v1077 = vmul.bf16 %v606, %v1029
        %v1078 = vmul.bf16 %v607, %v1029
        %v1079 = vunpack.c.l.bf16 %v1031
        %v1080 = vunpack.c.l.bf16 %v1032
        %v1081 = vunpack.c.l.bf16 %v1033
        %v1082 = vunpack.c.l.bf16 %v1034
        %v1083 = vunpack.c.l.bf16 %v1035
        %v1084 = vunpack.c.l.bf16 %v1036
        %v1085 = vunpack.c.l.bf16 %v1037
        %v1086 = vunpack.c.l.bf16 %v1038
        %v1087 = vunpack.c.l.bf16 %v1039
        %v1088 = vunpack.c.l.bf16 %v1040
        %v1089 = vunpack.c.l.bf16 %v1041
        %v1090 = vunpack.c.l.bf16 %v1042
        %v1091 = vunpack.c.l.bf16 %v1043
        %v1092 = vunpack.c.l.bf16 %v1044
        %v1093 = vunpack.c.l.bf16 %v1045
        %v1094 = vunpack.c.l.bf16 %v1046
        %v1095 = vunpack.c.l.bf16 %v1047
        %v1096 = vunpack.c.l.bf16 %v1048
        %v1097 = vunpack.c.l.bf16 %v1049
        %v1098 = vunpack.c.l.bf16 %v1050
        %v1099 = vunpack.c.l.bf16 %v1051
        %v1100 = vunpack.c.l.bf16 %v1052
        %v1101 = vunpack.c.l.bf16 %v1053
        %v1102 = vunpack.c.l.bf16 %v1054
        %v1103 = vunpack.c.l.bf16 %v1055
        %v1104 = vunpack.c.l.bf16 %v1056
        %v1105 = vunpack.c.l.bf16 %v1057
        %v1106 = vunpack.c.l.bf16 %v1058
        %v1107 = vunpack.c.l.bf16 %v1059
        %v1108 = vunpack.c.l.bf16 %v1060
        %v1109 = vunpack.c.l.bf16 %v1061
        %v1110 = vunpack.c.l.bf16 %v1062
        %v1111 = vunpack.c.l.bf16 %v1063
        %v1112 = vunpack.c.l.bf16 %v1064
        %v1113 = vunpack.c.l.bf16 %v1065
        %v1114 = vunpack.c.l.bf16 %v1066
        %v1115 = vunpack.c.l.bf16 %v1067
        %v1116 = vunpack.c.l.bf16 %v1068
        %v1117 = vunpack.c.l.bf16 %v1069
        %v1118 = vunpack.c.l.bf16 %v1070
        %v1119 = vunpack.c.l.bf16 %v1071
        %v1120 = vunpack.c.l.bf16 %v1072
        %v1121 = vunpack.c.l.bf16 %v1073
        %v1122 = vunpack.c.l.bf16 %v1074
        %v1123 = vunpack.c.l.bf16 %v1075
        %v1124 = vunpack.c.l.bf16 %v1076
        %v1125 = vunpack.c.l.bf16 %v1077
        %v1126 = vunpack.c.l.bf16 %v1078
        %vm1175 = vcmask 1045504
        %v1176 = vrot.slane %v1079, 2
        %v1177 = vrot.slane %v1080, 2
        %v1178 = vsel %vm1175, %v1176, %v1177
        %v1179 = vrot.slane %v1081, 2
        %v1180 = vsel %vm1175, %v1177, %v1179
        %v1181 = vrot.slane %v1082, 2
        %v1182 = vrot.slane %v1083, 2
        %v1183 = vsel %vm1175, %v1181, %v1182
        %v1184 = vrot.slane %v1084, 2
        %v1185 = vsel %vm1175, %v1182, %v1184
        %v1186 = vrot.slane %v1085, 2
        %v1187 = vrot.slane %v1086, 2
        %v1188 = vsel %vm1175, %v1186, %v1187
        %v1189 = vrot.slane %v1087, 2
        %v1190 = vsel %vm1175, %v1187, %v1189
        %v1191 = vrot.slane %v1088, 2
        %v1192 = vrot.slane %v1089, 2
        %v1193 = vsel %vm1175, %v1191, %v1192
        %v1194 = vrot.slane %v1090, 2
        %v1195 = vsel %vm1175, %v1192, %v1194
        %v1196 = vrot.slane %v1091, 2
        %v1197 = vrot.slane %v1092, 2
        %v1198 = vsel %vm1175, %v1196, %v1197
        %v1199 = vrot.slane %v1093, 2
        %v1200 = vsel %vm1175, %v1197, %v1199
        %v1201 = vrot.slane %v1094, 2
        %v1202 = vrot.slane %v1095, 2
        %v1203 = vsel %vm1175, %v1201, %v1202
        %v1204 = vrot.slane %v1096, 2
        %v1205 = vsel %vm1175, %v1202, %v1204
        %v1206 = vrot.slane %v1097, 2
        %v1207 = vrot.slane %v1098, 2
        %v1208 = vsel %vm1175, %v1206, %v1207
        %v1209 = vrot.slane %v1099, 2
        %v1210 = vsel %vm1175, %v1207, %v1209
        %v1211 = vrot.slane %v1100, 2
        %v1212 = vrot.slane %v1101, 2
        %v1213 = vsel %vm1175, %v1211, %v1212
        %v1214 = vrot.slane %v1102, 2
        %v1215 = vsel %vm1175, %v1212, %v1214
        %v1216 = vrot.slane %v1103, 2
        %v1217 = vrot.slane %v1104, 2
        %v1218 = vsel %vm1175, %v1216, %v1217
        %v1219 = vrot.slane %v1105, 2
        %v1220 = vsel %vm1175, %v1217, %v1219
        %v1221 = vrot.slane %v1106, 2
        %v1222 = vrot.slane %v1107, 2
        %v1223 = vsel %vm1175, %v1221, %v1222
        %v1224 = vrot.slane %v1108, 2
        %v1225 = vsel %vm1175, %v1222, %v1224
        %v1226 = vrot.slane %v1109, 2
        %v1227 = vrot.slane %v1110, 2
        %v1228 = vsel %vm1175, %v1226, %v1227
        %v1229 = vrot.slane %v1111, 2
        %v1230 = vsel %vm1175, %v1227, %v1229
        %v1231 = vrot.slane %v1112, 2
        %v1232 = vrot.slane %v1113, 2
        %v1233 = vsel %vm1175, %v1231, %v1232
        %v1234 = vrot.slane %v1114, 2
        %v1235 = vsel %vm1175, %v1232, %v1234
        %v1236 = vrot.slane %v1115, 2
        %v1237 = vrot.slane %v1116, 2
        %v1238 = vsel %vm1175, %v1236, %v1237
        %v1239 = vrot.slane %v1117, 2
        %v1240 = vsel %vm1175, %v1237, %v1239
        %v1241 = vrot.slane %v1118, 2
        %v1242 = vrot.slane %v1119, 2
        %v1243 = vsel %vm1175, %v1241, %v1242
        %v1244 = vrot.slane %v1120, 2
        %v1245 = vsel %vm1175, %v1242, %v1244
        %v1246 = vrot.slane %v1121, 2
        %v1247 = vrot.slane %v1122, 2
        %v1248 = vsel %vm1175, %v1246, %v1247
        %v1249 = vrot.slane %v1123, 2
        %v1250 = vsel %vm1175, %v1247, %v1249
        %v1251 = vrot.slane %v1124, 2
        %v1252 = vrot.slane %v1125, 2
        %v1253 = vsel %vm1175, %v1251, %v1252
        %v1254 = vrot.slane %v1126, 2
        %v1255 = vsel %vm1175, %v1252, %v1254
        %v1288 = vadd.f32 %v991, %v1178
        %v1289 = vadd.f32 %v992, %v1180
        %v1290 = vadd.f32 %v993, %v1183
        %v1291 = vadd.f32 %v994, %v1185
        %v1292 = vadd.f32 %v995, %v1188
        %v1293 = vadd.f32 %v996, %v1190
        %v1294 = vadd.f32 %v997, %v1193
        %v1295 = vadd.f32 %v998, %v1195
        %v1296 = vadd.f32 %v999, %v1198
        %v1297 = vadd.f32 %v1000, %v1200
        %v1298 = vadd.f32 %v1001, %v1203
        %v1299 = vadd.f32 %v1002, %v1205
        %v1300 = vadd.f32 %v1003, %v1208
        %v1301 = vadd.f32 %v1004, %v1210
        %v1302 = vadd.f32 %v1005, %v1213
        %v1303 = vadd.f32 %v1006, %v1215
        %v1304 = vadd.f32 %v1007, %v1218
        %v1305 = vadd.f32 %v1008, %v1220
        %v1306 = vadd.f32 %v1009, %v1223
        %v1307 = vadd.f32 %v1010, %v1225
        %v1308 = vadd.f32 %v1011, %v1228
        %v1309 = vadd.f32 %v1012, %v1230
        %v1310 = vadd.f32 %v1013, %v1233
        %v1311 = vadd.f32 %v1014, %v1235
        %v1312 = vadd.f32 %v1015, %v1238
        %v1313 = vadd.f32 %v1016, %v1240
        %v1314 = vadd.f32 %v1017, %v1243
        %v1315 = vadd.f32 %v1018, %v1245
        %v1316 = vadd.f32 %v1019, %v1248
        %v1317 = vadd.f32 %v1020, %v1250
        %v1318 = vadd.f32 %v1021, %v1253
        %v1319 = vadd.f32 %v1022, %v1255
        %v1320 = vlaneseq
        %v1321 = vshrl.u32 %v1320, 7
        %v1322 = vsub.s32 1, %v1321
        %v1323 = vrot.slane %v724, %v1322
        %v1325 = vunpack.c.l.b16 %v1323
        %v1326 = vpack.c.b16 %v1325, %v1325
        %v1328 = vmul.bf16 %v563, %v1326
        %v1329 = vmul.bf16 %v564, %v1326
        %v1330 = vmul.bf16 %v566, %v1326
        %v1331 = vmul.bf16 %v567, %v1326
        %v1332 = vmul.bf16 %v569, %v1326
        %v1333 = vmul.bf16 %v570, %v1326
        %v1334 = vmul.bf16 %v572, %v1326
        %v1335 = vmul.bf16 %v573, %v1326
        %v1336 = vmul.bf16 %v575, %v1326
        %v1337 = vmul.bf16 %v576, %v1326
        %v1338 = vmul.bf16 %v578, %v1326
        %v1339 = vmul.bf16 %v579, %v1326
        %v1340 = vmul.bf16 %v581, %v1326
        %v1341 = vmul.bf16 %v582, %v1326
        %v1342 = vmul.bf16 %v584, %v1326
        %v1343 = vmul.bf16 %v585, %v1326
        %v1344 = vmul.bf16 %v587, %v1326
        %v1345 = vmul.bf16 %v588, %v1326
        %v1346 = vmul.bf16 %v590, %v1326
        %v1347 = vmul.bf16 %v591, %v1326
        %v1348 = vmul.bf16 %v593, %v1326
        %v1349 = vmul.bf16 %v594, %v1326
        %v1350 = vmul.bf16 %v596, %v1326
        %v1351 = vmul.bf16 %v597, %v1326
        %v1352 = vmul.bf16 %v599, %v1326
        %v1353 = vmul.bf16 %v600, %v1326
        %v1354 = vmul.bf16 %v602, %v1326
        %v1355 = vmul.bf16 %v603, %v1326
        %v1356 = vmul.bf16 %v605, %v1326
        %v1357 = vmul.bf16 %v606, %v1326
        %v1358 = vmul.bf16 %v608, %v1326
        %v1359 = vmul.bf16 %v609, %v1326
        %v1360 = vunpack.c.l.bf16 %v1328
        %v1361 = vunpack.c.l.bf16 %v1329
        %v1362 = vunpack.c.l.bf16 %v1330
        %v1363 = vunpack.c.l.bf16 %v1331
        %v1364 = vunpack.c.l.bf16 %v1332
        %v1365 = vunpack.c.l.bf16 %v1333
        %v1366 = vunpack.c.l.bf16 %v1334
        %v1367 = vunpack.c.l.bf16 %v1335
        %v1368 = vunpack.c.l.bf16 %v1336
        %v1369 = vunpack.c.l.bf16 %v1337
        %v1370 = vunpack.c.l.bf16 %v1338
        %v1371 = vunpack.c.l.bf16 %v1339
        %v1372 = vunpack.c.l.bf16 %v1340
        %v1373 = vunpack.c.l.bf16 %v1341
        %v1374 = vunpack.c.l.bf16 %v1342
        %v1375 = vunpack.c.l.bf16 %v1343
        %v1376 = vunpack.c.l.bf16 %v1344
        %v1377 = vunpack.c.l.bf16 %v1345
        %v1378 = vunpack.c.l.bf16 %v1346
        %v1379 = vunpack.c.l.bf16 %v1347
        %v1380 = vunpack.c.l.bf16 %v1348
        %v1381 = vunpack.c.l.bf16 %v1349
        %v1382 = vunpack.c.l.bf16 %v1350
        %v1383 = vunpack.c.l.bf16 %v1351
        %v1384 = vunpack.c.l.bf16 %v1352
        %v1385 = vunpack.c.l.bf16 %v1353
        %v1386 = vunpack.c.l.bf16 %v1354
        %v1387 = vunpack.c.l.bf16 %v1355
        %v1388 = vunpack.c.l.bf16 %v1356
        %v1389 = vunpack.c.l.bf16 %v1357
        %v1390 = vunpack.c.l.bf16 %v1358
        %v1391 = vunpack.c.l.bf16 %v1359
        %v1392 = vadd.f32 %v1288, %v1360
        %v1393 = vadd.f32 %v1289, %v1361
        %v1394 = vadd.f32 %v1290, %v1362
        %v1395 = vadd.f32 %v1291, %v1363
        %v1396 = vadd.f32 %v1292, %v1364
        %v1397 = vadd.f32 %v1293, %v1365
        %v1398 = vadd.f32 %v1294, %v1366
        %v1399 = vadd.f32 %v1295, %v1367
        %v1400 = vadd.f32 %v1296, %v1368
        %v1401 = vadd.f32 %v1297, %v1369
        %v1402 = vadd.f32 %v1298, %v1370
        %v1403 = vadd.f32 %v1299, %v1371
        %v1404 = vadd.f32 %v1300, %v1372
        %v1405 = vadd.f32 %v1301, %v1373
        %v1406 = vadd.f32 %v1302, %v1374
        %v1407 = vadd.f32 %v1303, %v1375
        %v1408 = vadd.f32 %v1304, %v1376
        %v1409 = vadd.f32 %v1305, %v1377
        %v1410 = vadd.f32 %v1306, %v1378
        %v1411 = vadd.f32 %v1307, %v1379
        %v1412 = vadd.f32 %v1308, %v1380
        %v1413 = vadd.f32 %v1309, %v1381
        %v1414 = vadd.f32 %v1310, %v1382
        %v1415 = vadd.f32 %v1311, %v1383
        %v1416 = vadd.f32 %v1312, %v1384
        %v1417 = vadd.f32 %v1313, %v1385
        %v1418 = vadd.f32 %v1314, %v1386
        %v1419 = vadd.f32 %v1315, %v1387
        %v1420 = vadd.f32 %v1316, %v1388
        %v1421 = vadd.f32 %v1317, %v1389
        %v1422 = vadd.f32 %v1318, %v1390
        %v1423 = vadd.f32 %v1319, %v1391
        %v1424 = vlaneseq
        %v1425 = vshrl.u32 %v1424, 7
        %v1426 = vsub.s32 2, %v1425
        %v1427 = vrot.slane %v617, %v1426
        %v1429 = vunpack.c.l.b16 %v1427
        %v1430 = vpack.c.b16 %v1429, %v1429
        %v1432 = vmul.bf16 %v563, %v1430
        %v1433 = vmul.bf16 %v564, %v1430
        %v1434 = vmul.bf16 %v565, %v1430
        %v1435 = vmul.bf16 %v566, %v1430
        %v1436 = vmul.bf16 %v567, %v1430
        %v1437 = vmul.bf16 %v568, %v1430
        %v1438 = vmul.bf16 %v569, %v1430
        %v1439 = vmul.bf16 %v570, %v1430
        %v1440 = vmul.bf16 %v571, %v1430
        %v1441 = vmul.bf16 %v572, %v1430
        %v1442 = vmul.bf16 %v573, %v1430
        %v1443 = vmul.bf16 %v574, %v1430
        %v1444 = vmul.bf16 %v575, %v1430
        %v1445 = vmul.bf16 %v576, %v1430
        %v1446 = vmul.bf16 %v577, %v1430
        %v1447 = vmul.bf16 %v578, %v1430
        %v1448 = vmul.bf16 %v579, %v1430
        %v1449 = vmul.bf16 %v580, %v1430
        %v1450 = vmul.bf16 %v581, %v1430
        %v1451 = vmul.bf16 %v582, %v1430
        %v1452 = vmul.bf16 %v583, %v1430
        %v1453 = vmul.bf16 %v584, %v1430
        %v1454 = vmul.bf16 %v585, %v1430
        %v1455 = vmul.bf16 %v586, %v1430
        %v1456 = vmul.bf16 %v587, %v1430
        %v1457 = vmul.bf16 %v588, %v1430
        %v1458 = vmul.bf16 %v589, %v1430
        %v1459 = vmul.bf16 %v590, %v1430
        %v1460 = vmul.bf16 %v591, %v1430
        %v1461 = vmul.bf16 %v592, %v1430
        %v1462 = vmul.bf16 %v593, %v1430
        %v1463 = vmul.bf16 %v594, %v1430
        %v1464 = vmul.bf16 %v595, %v1430
        %v1465 = vmul.bf16 %v596, %v1430
        %v1466 = vmul.bf16 %v597, %v1430
        %v1467 = vmul.bf16 %v598, %v1430
        %v1468 = vmul.bf16 %v599, %v1430
        %v1469 = vmul.bf16 %v600, %v1430
        %v1470 = vmul.bf16 %v601, %v1430
        %v1471 = vmul.bf16 %v602, %v1430
        %v1472 = vmul.bf16 %v603, %v1430
        %v1473 = vmul.bf16 %v604, %v1430
        %v1474 = vmul.bf16 %v605, %v1430
        %v1475 = vmul.bf16 %v606, %v1430
        %v1476 = vmul.bf16 %v607, %v1430
        %v1477 = vmul.bf16 %v608, %v1430
        %v1478 = vmul.bf16 %v609, %v1430
        %v1479 = vmul.bf16 %v610, %v1430
        %v1480 = vunpack.c.l.bf16 %v1432
        %v1481 = vunpack.c.l.bf16 %v1433
        %v1482 = vunpack.c.l.bf16 %v1434
        %v1483 = vunpack.c.l.bf16 %v1435
        %v1484 = vunpack.c.l.bf16 %v1436
        %v1485 = vunpack.c.l.bf16 %v1437
        %v1486 = vunpack.c.l.bf16 %v1438
        %v1487 = vunpack.c.l.bf16 %v1439
        %v1488 = vunpack.c.l.bf16 %v1440
        %v1489 = vunpack.c.l.bf16 %v1441
        %v1490 = vunpack.c.l.bf16 %v1442
        %v1491 = vunpack.c.l.bf16 %v1443
        %v1492 = vunpack.c.l.bf16 %v1444
        %v1493 = vunpack.c.l.bf16 %v1445
        %v1494 = vunpack.c.l.bf16 %v1446
        %v1495 = vunpack.c.l.bf16 %v1447
        %v1496 = vunpack.c.l.bf16 %v1448
        %v1497 = vunpack.c.l.bf16 %v1449
        %v1498 = vunpack.c.l.bf16 %v1450
        %v1499 = vunpack.c.l.bf16 %v1451
        %v1500 = vunpack.c.l.bf16 %v1452
        %v1501 = vunpack.c.l.bf16 %v1453
        %v1502 = vunpack.c.l.bf16 %v1454
        %v1503 = vunpack.c.l.bf16 %v1455
        %v1504 = vunpack.c.l.bf16 %v1456
        %v1505 = vunpack.c.l.bf16 %v1457
        %v1506 = vunpack.c.l.bf16 %v1458
        %v1507 = vunpack.c.l.bf16 %v1459
        %v1508 = vunpack.c.l.bf16 %v1460
        %v1509 = vunpack.c.l.bf16 %v1461
        %v1510 = vunpack.c.l.bf16 %v1462
        %v1511 = vunpack.c.l.bf16 %v1463
        %v1512 = vunpack.c.l.bf16 %v1464
        %v1513 = vunpack.c.l.bf16 %v1465
        %v1514 = vunpack.c.l.bf16 %v1466
        %v1515 = vunpack.c.l.bf16 %v1467
        %v1516 = vunpack.c.l.bf16 %v1468
        %v1517 = vunpack.c.l.bf16 %v1469
        %v1518 = vunpack.c.l.bf16 %v1470
        %v1519 = vunpack.c.l.bf16 %v1471
        %v1520 = vunpack.c.l.bf16 %v1472
        %v1521 = vunpack.c.l.bf16 %v1473
        %v1522 = vunpack.c.l.bf16 %v1474
        %v1523 = vunpack.c.l.bf16 %v1475
        %v1524 = vunpack.c.l.bf16 %v1476
        %v1525 = vunpack.c.l.bf16 %v1477
        %v1526 = vunpack.c.l.bf16 %v1478
        %v1527 = vunpack.c.l.bf16 %v1479
        %v1576 = vrot.slane %v1480, 1
        %v1577 = vrot.slane %v1481, 1
        %v1578 = vsel %vm878, %v1576, %v1577
        %v1579 = vrot.slane %v1482, 1
        %v1580 = vsel %vm878, %v1577, %v1579
        %v1581 = vrot.slane %v1483, 1
        %v1582 = vrot.slane %v1484, 1
        %v1583 = vsel %vm878, %v1581, %v1582
        %v1584 = vrot.slane %v1485, 1
        %v1585 = vsel %vm878, %v1582, %v1584
        %v1586 = vrot.slane %v1486, 1
        %v1587 = vrot.slane %v1487, 1
        %v1588 = vsel %vm878, %v1586, %v1587
        %v1589 = vrot.slane %v1488, 1
        %v1590 = vsel %vm878, %v1587, %v1589
        %v1591 = vrot.slane %v1489, 1
        %v1592 = vrot.slane %v1490, 1
        %v1593 = vsel %vm878, %v1591, %v1592
        %v1594 = vrot.slane %v1491, 1
        %v1595 = vsel %vm878, %v1592, %v1594
        %v1596 = vrot.slane %v1492, 1
        %v1597 = vrot.slane %v1493, 1
        %v1598 = vsel %vm878, %v1596, %v1597
        %v1599 = vrot.slane %v1494, 1
        %v1600 = vsel %vm878, %v1597, %v1599
        %v1601 = vrot.slane %v1495, 1
        %v1602 = vrot.slane %v1496, 1
        %v1603 = vsel %vm878, %v1601, %v1602
        %v1604 = vrot.slane %v1497, 1
        %v1605 = vsel %vm878, %v1602, %v1604
        %v1606 = vrot.slane %v1498, 1
        %v1607 = vrot.slane %v1499, 1
        %v1608 = vsel %vm878, %v1606, %v1607
        %v1609 = vrot.slane %v1500, 1
        %v1610 = vsel %vm878, %v1607, %v1609
        %v1611 = vrot.slane %v1501, 1
        %v1612 = vrot.slane %v1502, 1
        %v1613 = vsel %vm878, %v1611, %v1612
        %v1614 = vrot.slane %v1503, 1
        %v1615 = vsel %vm878, %v1612, %v1614
        %v1616 = vrot.slane %v1504, 1
        %v1617 = vrot.slane %v1505, 1
        %v1618 = vsel %vm878, %v1616, %v1617
        %v1619 = vrot.slane %v1506, 1
        %v1620 = vsel %vm878, %v1617, %v1619
        %v1621 = vrot.slane %v1507, 1
        %v1622 = vrot.slane %v1508, 1
        %v1623 = vsel %vm878, %v1621, %v1622
        %v1624 = vrot.slane %v1509, 1
        %v1625 = vsel %vm878, %v1622, %v1624
        %v1626 = vrot.slane %v1510, 1
        %v1627 = vrot.slane %v1511, 1
        %v1628 = vsel %vm878, %v1626, %v1627
        %v1629 = vrot.slane %v1512, 1
        %v1630 = vsel %vm878, %v1627, %v1629
        %v1631 = vrot.slane %v1513, 1
        %v1632 = vrot.slane %v1514, 1
        %v1633 = vsel %vm878, %v1631, %v1632
        %v1634 = vrot.slane %v1515, 1
        %v1635 = vsel %vm878, %v1632, %v1634
        %v1636 = vrot.slane %v1516, 1
        %v1637 = vrot.slane %v1517, 1
        %v1638 = vsel %vm878, %v1636, %v1637
        %v1639 = vrot.slane %v1518, 1
        %v1640 = vsel %vm878, %v1637, %v1639
        %v1641 = vrot.slane %v1519, 1
        %v1642 = vrot.slane %v1520, 1
        %v1643 = vsel %vm878, %v1641, %v1642
        %v1644 = vrot.slane %v1521, 1
        %v1645 = vsel %vm878, %v1642, %v1644
        %v1646 = vrot.slane %v1522, 1
        %v1647 = vrot.slane %v1523, 1
        %v1648 = vsel %vm878, %v1646, %v1647
        %v1649 = vrot.slane %v1524, 1
        %v1650 = vsel %vm878, %v1647, %v1649
        %v1651 = vrot.slane %v1525, 1
        %v1652 = vrot.slane %v1526, 1
        %v1653 = vsel %vm878, %v1651, %v1652
        %v1654 = vrot.slane %v1527, 1
        %v1655 = vsel %vm878, %v1652, %v1654
        %v1688 = vadd.f32 %v1392, %v1578
        %v1689 = vadd.f32 %v1393, %v1580
        %v1690 = vadd.f32 %v1394, %v1583
        %v1691 = vadd.f32 %v1395, %v1585
        %v1692 = vadd.f32 %v1396, %v1588
        %v1693 = vadd.f32 %v1397, %v1590
        %v1694 = vadd.f32 %v1398, %v1593
        %v1695 = vadd.f32 %v1399, %v1595
        %v1696 = vadd.f32 %v1400, %v1598
        %v1697 = vadd.f32 %v1401, %v1600
        %v1698 = vadd.f32 %v1402, %v1603
        %v1699 = vadd.f32 %v1403, %v1605
        %v1700 = vadd.f32 %v1404, %v1608
        %v1701 = vadd.f32 %v1405, %v1610
        %v1702 = vadd.f32 %v1406, %v1613
        %v1703 = vadd.f32 %v1407, %v1615
        %v1704 = vadd.f32 %v1408, %v1618
        %v1705 = vadd.f32 %v1409, %v1620
        %v1706 = vadd.f32 %v1410, %v1623
        %v1707 = vadd.f32 %v1411, %v1625
        %v1708 = vadd.f32 %v1412, %v1628
        %v1709 = vadd.f32 %v1413, %v1630
        %v1710 = vadd.f32 %v1414, %v1633
        %v1711 = vadd.f32 %v1415, %v1635
        %v1712 = vadd.f32 %v1416, %v1638
        %v1713 = vadd.f32 %v1417, %v1640
        %v1714 = vadd.f32 %v1418, %v1643
        %v1715 = vadd.f32 %v1419, %v1645
        %v1716 = vadd.f32 %v1420, %v1648
        %v1717 = vadd.f32 %v1421, %v1650
        %v1718 = vadd.f32 %v1422, %v1653
        %v1719 = vadd.f32 %v1423, %v1655
        %v1720 = vlaneseq
        %v1721 = vshrl.u32 %v1720, 7
        %v1722 = vsub.s32 2, %v1721
        %v1723 = vrot.slane %v724, %v1722
        %v1725 = vunpack.c.l.b16 %v1723
        %v1726 = vpack.c.b16 %v1725, %v1725
        %v1728 = vmul.bf16 %v563, %v1726
        %v1729 = vmul.bf16 %v564, %v1726
        %v1730 = vmul.bf16 %v565, %v1726
        %v1731 = vmul.bf16 %v566, %v1726
        %v1732 = vmul.bf16 %v567, %v1726
        %v1733 = vmul.bf16 %v568, %v1726
        %v1734 = vmul.bf16 %v569, %v1726
        %v1735 = vmul.bf16 %v570, %v1726
        %v1736 = vmul.bf16 %v571, %v1726
        %v1737 = vmul.bf16 %v572, %v1726
        %v1738 = vmul.bf16 %v573, %v1726
        %v1739 = vmul.bf16 %v574, %v1726
        %v1740 = vmul.bf16 %v575, %v1726
        %v1741 = vmul.bf16 %v576, %v1726
        %v1742 = vmul.bf16 %v577, %v1726
        %v1743 = vmul.bf16 %v578, %v1726
        %v1744 = vmul.bf16 %v579, %v1726
        %v1745 = vmul.bf16 %v580, %v1726
        %v1746 = vmul.bf16 %v581, %v1726
        %v1747 = vmul.bf16 %v582, %v1726
        %v1748 = vmul.bf16 %v583, %v1726
        %v1749 = vmul.bf16 %v584, %v1726
        %v1750 = vmul.bf16 %v585, %v1726
        %v1751 = vmul.bf16 %v586, %v1726
        %v1752 = vmul.bf16 %v587, %v1726
        %v1753 = vmul.bf16 %v588, %v1726
        %v1754 = vmul.bf16 %v589, %v1726
        %v1755 = vmul.bf16 %v590, %v1726
        %v1756 = vmul.bf16 %v591, %v1726
        %v1757 = vmul.bf16 %v592, %v1726
        %v1758 = vmul.bf16 %v593, %v1726
        %v1759 = vmul.bf16 %v594, %v1726
        %v1760 = vmul.bf16 %v595, %v1726
        %v1761 = vmul.bf16 %v596, %v1726
        %v1762 = vmul.bf16 %v597, %v1726
        %v1763 = vmul.bf16 %v598, %v1726
        %v1764 = vmul.bf16 %v599, %v1726
        %v1765 = vmul.bf16 %v600, %v1726
        %v1766 = vmul.bf16 %v601, %v1726
        %v1767 = vmul.bf16 %v602, %v1726
        %v1768 = vmul.bf16 %v603, %v1726
        %v1769 = vmul.bf16 %v604, %v1726
        %v1770 = vmul.bf16 %v605, %v1726
        %v1771 = vmul.bf16 %v606, %v1726
        %v1772 = vmul.bf16 %v607, %v1726
        %v1773 = vmul.bf16 %v608, %v1726
        %v1774 = vmul.bf16 %v609, %v1726
        %v1775 = vmul.bf16 %v610, %v1726
        %v1776 = vunpack.c.l.bf16 %v1728
        %v1777 = vunpack.c.l.bf16 %v1729
        %v1778 = vunpack.c.l.bf16 %v1730
        %v1779 = vunpack.c.l.bf16 %v1731
        %v1780 = vunpack.c.l.bf16 %v1732
        %v1781 = vunpack.c.l.bf16 %v1733
        %v1782 = vunpack.c.l.bf16 %v1734
        %v1783 = vunpack.c.l.bf16 %v1735
        %v1784 = vunpack.c.l.bf16 %v1736
        %v1785 = vunpack.c.l.bf16 %v1737
        %v1786 = vunpack.c.l.bf16 %v1738
        %v1787 = vunpack.c.l.bf16 %v1739
        %v1788 = vunpack.c.l.bf16 %v1740
        %v1789 = vunpack.c.l.bf16 %v1741
        %v1790 = vunpack.c.l.bf16 %v1742
        %v1791 = vunpack.c.l.bf16 %v1743
        %v1792 = vunpack.c.l.bf16 %v1744
        %v1793 = vunpack.c.l.bf16 %v1745
        %v1794 = vunpack.c.l.bf16 %v1746
        %v1795 = vunpack.c.l.bf16 %v1747
        %v1796 = vunpack.c.l.bf16 %v1748
        %v1797 = vunpack.c.l.bf16 %v1749
        %v1798 = vunpack.c.l.bf16 %v1750
        %v1799 = vunpack.c.l.bf16 %v1751
        %v1800 = vunpack.c.l.bf16 %v1752
        %v1801 = vunpack.c.l.bf16 %v1753
        %v1802 = vunpack.c.l.bf16 %v1754
        %v1803 = vunpack.c.l.bf16 %v1755
        %v1804 = vunpack.c.l.bf16 %v1756
        %v1805 = vunpack.c.l.bf16 %v1757
        %v1806 = vunpack.c.l.bf16 %v1758
        %v1807 = vunpack.c.l.bf16 %v1759
        %v1808 = vunpack.c.l.bf16 %v1760
        %v1809 = vunpack.c.l.bf16 %v1761
        %v1810 = vunpack.c.l.bf16 %v1762
        %v1811 = vunpack.c.l.bf16 %v1763
        %v1812 = vunpack.c.l.bf16 %v1764
        %v1813 = vunpack.c.l.bf16 %v1765
        %v1814 = vunpack.c.l.bf16 %v1766
        %v1815 = vunpack.c.l.bf16 %v1767
        %v1816 = vunpack.c.l.bf16 %v1768
        %v1817 = vunpack.c.l.bf16 %v1769
        %v1818 = vunpack.c.l.bf16 %v1770
        %v1819 = vunpack.c.l.bf16 %v1771
        %v1820 = vunpack.c.l.bf16 %v1772
        %v1821 = vunpack.c.l.bf16 %v1773
        %v1822 = vunpack.c.l.bf16 %v1774
        %v1823 = vunpack.c.l.bf16 %v1775
        %v1872 = vrot.slane %v1776, 2
        %v1873 = vrot.slane %v1777, 2
        %v1874 = vsel %vm1175, %v1872, %v1873
        %v1875 = vrot.slane %v1778, 2
        %v1876 = vsel %vm1175, %v1873, %v1875
        %v1877 = vrot.slane %v1779, 2
        %v1878 = vrot.slane %v1780, 2
        %v1879 = vsel %vm1175, %v1877, %v1878
        %v1880 = vrot.slane %v1781, 2
        %v1881 = vsel %vm1175, %v1878, %v1880
        %v1882 = vrot.slane %v1782, 2
        %v1883 = vrot.slane %v1783, 2
        %v1884 = vsel %vm1175, %v1882, %v1883
        %v1885 = vrot.slane %v1784, 2
        %v1886 = vsel %vm1175, %v1883, %v1885
        %v1887 = vrot.slane %v1785, 2
        %v1888 = vrot.slane %v1786, 2
        %v1889 = vsel %vm1175, %v1887, %v1888
        %v1890 = vrot.slane %v1787, 2
        %v1891 = vsel %vm1175, %v1888, %v1890
        %v1892 = vrot.slane %v1788, 2
        %v1893 = vrot.slane %v1789, 2
        %v1894 = vsel %vm1175, %v1892, %v1893
        %v1895 = vrot.slane %v1790, 2
        %v1896 = vsel %vm1175, %v1893, %v1895
        %v1897 = vrot.slane %v1791, 2
        %v1898 = vrot.slane %v1792, 2
        %v1899 = vsel %vm1175, %v1897, %v1898
        %v1900 = vrot.slane %v1793, 2
        %v1901 = vsel %vm1175, %v1898, %v1900
        %v1902 = vrot.slane %v1794, 2
        %v1903 = vrot.slane %v1795, 2
        %v1904 = vsel %vm1175, %v1902, %v1903
        %v1905 = vrot.slane %v1796, 2
        %v1906 = vsel %vm1175, %v1903, %v1905
        %v1907 = vrot.slane %v1797, 2
        %v1908 = vrot.slane %v1798, 2
        %v1909 = vsel %vm1175, %v1907, %v1908
        %v1910 = vrot.slane %v1799, 2
        %v1911 = vsel %vm1175, %v1908, %v1910
        %v1912 = vrot.slane %v1800, 2
        %v1913 = vrot.slane %v1801, 2
        %v1914 = vsel %vm1175, %v1912, %v1913
        %v1915 = vrot.slane %v1802, 2
        %v1916 = vsel %vm1175, %v1913, %v1915
        %v1917 = vrot.slane %v1803, 2
        %v1918 = vrot.slane %v1804, 2
        %v1919 = vsel %vm1175, %v1917, %v1918
        %v1920 = vrot.slane %v1805, 2
        %v1921 = vsel %vm1175, %v1918, %v1920
        %v1922 = vrot.slane %v1806, 2
        %v1923 = vrot.slane %v1807, 2
        %v1924 = vsel %vm1175, %v1922, %v1923
        %v1925 = vrot.slane %v1808, 2
        %v1926 = vsel %vm1175, %v1923, %v1925
        %v1927 = vrot.slane %v1809, 2
        %v1928 = vrot.slane %v1810, 2
        %v1929 = vsel %vm1175, %v1927, %v1928
        %v1930 = vrot.slane %v1811, 2
        %v1931 = vsel %vm1175, %v1928, %v1930
        %v1932 = vrot.slane %v1812, 2
        %v1933 = vrot.slane %v1813, 2
        %v1934 = vsel %vm1175, %v1932, %v1933
        %v1935 = vrot.slane %v1814, 2
        %v1936 = vsel %vm1175, %v1933, %v1935
        %v1937 = vrot.slane %v1815, 2
        %v1938 = vrot.slane %v1816, 2
        %v1939 = vsel %vm1175, %v1937, %v1938
        %v1940 = vrot.slane %v1817, 2
        %v1941 = vsel %vm1175, %v1938, %v1940
        %v1942 = vrot.slane %v1818, 2
        %v1943 = vrot.slane %v1819, 2
        %v1944 = vsel %vm1175, %v1942, %v1943
        %v1945 = vrot.slane %v1820, 2
        %v1946 = vsel %vm1175, %v1943, %v1945
        %v1947 = vrot.slane %v1821, 2
        %v1948 = vrot.slane %v1822, 2
        %v1949 = vsel %vm1175, %v1947, %v1948
        %v1950 = vrot.slane %v1823, 2
        %v1951 = vsel %vm1175, %v1948, %v1950
        %v1984 = vadd.f32 %v1688, %v1874
        %v1985 = vadd.f32 %v1689, %v1876
        %v1986 = vadd.f32 %v1690, %v1879
        %v1987 = vadd.f32 %v1691, %v1881
        %v1988 = vadd.f32 %v1692, %v1884
        %v1989 = vadd.f32 %v1693, %v1886
        %v1990 = vadd.f32 %v1694, %v1889
        %v1991 = vadd.f32 %v1695, %v1891
        %v1992 = vadd.f32 %v1696, %v1894
        %v1993 = vadd.f32 %v1697, %v1896
        %v1994 = vadd.f32 %v1698, %v1899
        %v1995 = vadd.f32 %v1699, %v1901
        %v1996 = vadd.f32 %v1700, %v1904
        %v1997 = vadd.f32 %v1701, %v1906
        %v1998 = vadd.f32 %v1702, %v1909
        %v1999 = vadd.f32 %v1703, %v1911
        %v2000 = vadd.f32 %v1704, %v1914
        %v2001 = vadd.f32 %v1705, %v1916
        %v2002 = vadd.f32 %v1706, %v1919
        %v2003 = vadd.f32 %v1707, %v1921
        %v2004 = vadd.f32 %v1708, %v1924
        %v2005 = vadd.f32 %v1709, %v1926
        %v2006 = vadd.f32 %v1710, %v1929
        %v2007 = vadd.f32 %v1711, %v1931
        %v2008 = vadd.f32 %v1712, %v1934
        %v2009 = vadd.f32 %v1713, %v1936
        %v2010 = vadd.f32 %v1714, %v1939
        %v2011 = vadd.f32 %v1715, %v1941
        %v2012 = vadd.f32 %v1716, %v1944
        %v2013 = vadd.f32 %v1717, %v1946
        %v2014 = vadd.f32 %v1718, %v1949
        %v2015 = vadd.f32 %v1719, %v1951
        %v2016 = vlaneseq
        %v2017 = vshrl.u32 %v2016, 7
        %v2018 = vsub.s32 3, %v2017
        %v2019 = vrot.slane %v617, %v2018
        %v2021 = vunpack.c.l.b16 %v2019
        %v2022 = vpack.c.b16 %v2021, %v2021
        %v2024 = vmul.bf16 %v566, %v2022
        %v2025 = vmul.bf16 %v567, %v2022
        %v2026 = vmul.bf16 %v569, %v2022
        %v2027 = vmul.bf16 %v570, %v2022
        %v2028 = vmul.bf16 %v572, %v2022
        %v2029 = vmul.bf16 %v573, %v2022
        %v2030 = vmul.bf16 %v575, %v2022
        %v2031 = vmul.bf16 %v576, %v2022
        %v2032 = vmul.bf16 %v578, %v2022
        %v2033 = vmul.bf16 %v579, %v2022
        %v2034 = vmul.bf16 %v581, %v2022
        %v2035 = vmul.bf16 %v582, %v2022
        %v2036 = vmul.bf16 %v584, %v2022
        %v2037 = vmul.bf16 %v585, %v2022
        %v2038 = vmul.bf16 %v587, %v2022
        %v2039 = vmul.bf16 %v588, %v2022
        %v2040 = vmul.bf16 %v590, %v2022
        %v2041 = vmul.bf16 %v591, %v2022
        %v2042 = vmul.bf16 %v593, %v2022
        %v2043 = vmul.bf16 %v594, %v2022
        %v2044 = vmul.bf16 %v596, %v2022
        %v2045 = vmul.bf16 %v597, %v2022
        %v2046 = vmul.bf16 %v599, %v2022
        %v2047 = vmul.bf16 %v600, %v2022
        %v2048 = vmul.bf16 %v602, %v2022
        %v2049 = vmul.bf16 %v603, %v2022
        %v2050 = vmul.bf16 %v605, %v2022
        %v2051 = vmul.bf16 %v606, %v2022
        %v2052 = vmul.bf16 %v608, %v2022
        %v2053 = vmul.bf16 %v609, %v2022
        %v2054 = vmul.bf16 %v611, %v2022
        %v2055 = vmul.bf16 %v612, %v2022
        %v2056 = vunpack.c.l.bf16 %v2024
        %v2057 = vunpack.c.l.bf16 %v2025
        %v2058 = vunpack.c.l.bf16 %v2026
        %v2059 = vunpack.c.l.bf16 %v2027
        %v2060 = vunpack.c.l.bf16 %v2028
        %v2061 = vunpack.c.l.bf16 %v2029
        %v2062 = vunpack.c.l.bf16 %v2030
        %v2063 = vunpack.c.l.bf16 %v2031
        %v2064 = vunpack.c.l.bf16 %v2032
        %v2065 = vunpack.c.l.bf16 %v2033
        %v2066 = vunpack.c.l.bf16 %v2034
        %v2067 = vunpack.c.l.bf16 %v2035
        %v2068 = vunpack.c.l.bf16 %v2036
        %v2069 = vunpack.c.l.bf16 %v2037
        %v2070 = vunpack.c.l.bf16 %v2038
        %v2071 = vunpack.c.l.bf16 %v2039
        %v2072 = vunpack.c.l.bf16 %v2040
        %v2073 = vunpack.c.l.bf16 %v2041
        %v2074 = vunpack.c.l.bf16 %v2042
        %v2075 = vunpack.c.l.bf16 %v2043
        %v2076 = vunpack.c.l.bf16 %v2044
        %v2077 = vunpack.c.l.bf16 %v2045
        %v2078 = vunpack.c.l.bf16 %v2046
        %v2079 = vunpack.c.l.bf16 %v2047
        %v2080 = vunpack.c.l.bf16 %v2048
        %v2081 = vunpack.c.l.bf16 %v2049
        %v2082 = vunpack.c.l.bf16 %v2050
        %v2083 = vunpack.c.l.bf16 %v2051
        %v2084 = vunpack.c.l.bf16 %v2052
        %v2085 = vunpack.c.l.bf16 %v2053
        %v2086 = vunpack.c.l.bf16 %v2054
        %v2087 = vunpack.c.l.bf16 %v2055
        %v2088 = vadd.f32 %v1984, %v2056
        %v2089 = vadd.f32 %v1985, %v2057
        %v2090 = vadd.f32 %v1986, %v2058
        %v2091 = vadd.f32 %v1987, %v2059
        %v2092 = vadd.f32 %v1988, %v2060
        %v2093 = vadd.f32 %v1989, %v2061
        %v2094 = vadd.f32 %v1990, %v2062
        %v2095 = vadd.f32 %v1991, %v2063
        %v2096 = vadd.f32 %v1992, %v2064
        %v2097 = vadd.f32 %v1993, %v2065
        %v2098 = vadd.f32 %v1994, %v2066
        %v2099 = vadd.f32 %v1995, %v2067
        %v2100 = vadd.f32 %v1996, %v2068
        %v2101 = vadd.f32 %v1997, %v2069
        %v2102 = vadd.f32 %v1998, %v2070
        %v2103 = vadd.f32 %v1999, %v2071
        %v2104 = vadd.f32 %v2000, %v2072
        %v2105 = vadd.f32 %v2001, %v2073
        %v2106 = vadd.f32 %v2002, %v2074
        %v2107 = vadd.f32 %v2003, %v2075
        %v2108 = vadd.f32 %v2004, %v2076
        %v2109 = vadd.f32 %v2005, %v2077
        %v2110 = vadd.f32 %v2006, %v2078
        %v2111 = vadd.f32 %v2007, %v2079
        %v2112 = vadd.f32 %v2008, %v2080
        %v2113 = vadd.f32 %v2009, %v2081
        %v2114 = vadd.f32 %v2010, %v2082
        %v2115 = vadd.f32 %v2011, %v2083
        %v2116 = vadd.f32 %v2012, %v2084
        %v2117 = vadd.f32 %v2013, %v2085
        %v2118 = vadd.f32 %v2014, %v2086
        %v2119 = vadd.f32 %v2015, %v2087
        %v2120 = vlaneseq
        %v2121 = vshrl.u32 %v2120, 7
        %v2122 = vsub.s32 3, %v2121
        %v2123 = vrot.slane %v724, %v2122
        %v2125 = vunpack.c.l.b16 %v2123
        %v2126 = vpack.c.b16 %v2125, %v2125
        %v2128 = vmul.bf16 %v566, %v2126
        %v2129 = vmul.bf16 %v567, %v2126
        %v2130 = vmul.bf16 %v568, %v2126
        %v2131 = vmul.bf16 %v569, %v2126
        %v2132 = vmul.bf16 %v570, %v2126
        %v2133 = vmul.bf16 %v571, %v2126
        %v2134 = vmul.bf16 %v572, %v2126
        %v2135 = vmul.bf16 %v573, %v2126
        %v2136 = vmul.bf16 %v574, %v2126
        %v2137 = vmul.bf16 %v575, %v2126
        %v2138 = vmul.bf16 %v576, %v2126
        %v2139 = vmul.bf16 %v577, %v2126
        %v2140 = vmul.bf16 %v578, %v2126
        %v2141 = vmul.bf16 %v579, %v2126
        %v2142 = vmul.bf16 %v580, %v2126
        %v2143 = vmul.bf16 %v581, %v2126
        %v2144 = vmul.bf16 %v582, %v2126
        %v2145 = vmul.bf16 %v583, %v2126
        %v2146 = vmul.bf16 %v584, %v2126
        %v2147 = vmul.bf16 %v585, %v2126
        %v2148 = vmul.bf16 %v586, %v2126
        %v2149 = vmul.bf16 %v587, %v2126
        %v2150 = vmul.bf16 %v588, %v2126
        %v2151 = vmul.bf16 %v589, %v2126
        %v2152 = vmul.bf16 %v590, %v2126
        %v2153 = vmul.bf16 %v591, %v2126
        %v2154 = vmul.bf16 %v592, %v2126
        %v2155 = vmul.bf16 %v593, %v2126
        %v2156 = vmul.bf16 %v594, %v2126
        %v2157 = vmul.bf16 %v595, %v2126
        %v2158 = vmul.bf16 %v596, %v2126
        %v2159 = vmul.bf16 %v597, %v2126
        %v2160 = vmul.bf16 %v598, %v2126
        %v2161 = vmul.bf16 %v599, %v2126
        %v2162 = vmul.bf16 %v600, %v2126
        %v2163 = vmul.bf16 %v601, %v2126
        %v2164 = vmul.bf16 %v602, %v2126
        %v2165 = vmul.bf16 %v603, %v2126
        %v2166 = vmul.bf16 %v604, %v2126
        %v2167 = vmul.bf16 %v605, %v2126
        %v2168 = vmul.bf16 %v606, %v2126
        %v2169 = vmul.bf16 %v607, %v2126
        %v2170 = vmul.bf16 %v608, %v2126
        %v2171 = vmul.bf16 %v609, %v2126
        %v2172 = vmul.bf16 %v610, %v2126
        %v2173 = vmul.bf16 %v611, %v2126
        %v2174 = vmul.bf16 %v612, %v2126
        %v2175 = vmul.bf16 %v613, %v2126
        %v2176 = vunpack.c.l.bf16 %v2128
        %v2177 = vunpack.c.l.bf16 %v2129
        %v2178 = vunpack.c.l.bf16 %v2130
        %v2179 = vunpack.c.l.bf16 %v2131
        %v2180 = vunpack.c.l.bf16 %v2132
        %v2181 = vunpack.c.l.bf16 %v2133
        %v2182 = vunpack.c.l.bf16 %v2134
        %v2183 = vunpack.c.l.bf16 %v2135
        %v2184 = vunpack.c.l.bf16 %v2136
        %v2185 = vunpack.c.l.bf16 %v2137
        %v2186 = vunpack.c.l.bf16 %v2138
        %v2187 = vunpack.c.l.bf16 %v2139
        %v2188 = vunpack.c.l.bf16 %v2140
        %v2189 = vunpack.c.l.bf16 %v2141
        %v2190 = vunpack.c.l.bf16 %v2142
        %v2191 = vunpack.c.l.bf16 %v2143
        %v2192 = vunpack.c.l.bf16 %v2144
        %v2193 = vunpack.c.l.bf16 %v2145
        %v2194 = vunpack.c.l.bf16 %v2146
        %v2195 = vunpack.c.l.bf16 %v2147
        %v2196 = vunpack.c.l.bf16 %v2148
        %v2197 = vunpack.c.l.bf16 %v2149
        %v2198 = vunpack.c.l.bf16 %v2150
        %v2199 = vunpack.c.l.bf16 %v2151
        %v2200 = vunpack.c.l.bf16 %v2152
        %v2201 = vunpack.c.l.bf16 %v2153
        %v2202 = vunpack.c.l.bf16 %v2154
        %v2203 = vunpack.c.l.bf16 %v2155
        %v2204 = vunpack.c.l.bf16 %v2156
        %v2205 = vunpack.c.l.bf16 %v2157
        %v2206 = vunpack.c.l.bf16 %v2158
        %v2207 = vunpack.c.l.bf16 %v2159
        %v2208 = vunpack.c.l.bf16 %v2160
        %v2209 = vunpack.c.l.bf16 %v2161
        %v2210 = vunpack.c.l.bf16 %v2162
        %v2211 = vunpack.c.l.bf16 %v2163
        %v2212 = vunpack.c.l.bf16 %v2164
        %v2213 = vunpack.c.l.bf16 %v2165
        %v2214 = vunpack.c.l.bf16 %v2166
        %v2215 = vunpack.c.l.bf16 %v2167
        %v2216 = vunpack.c.l.bf16 %v2168
        %v2217 = vunpack.c.l.bf16 %v2169
        %v2218 = vunpack.c.l.bf16 %v2170
        %v2219 = vunpack.c.l.bf16 %v2171
        %v2220 = vunpack.c.l.bf16 %v2172
        %v2221 = vunpack.c.l.bf16 %v2173
        %v2222 = vunpack.c.l.bf16 %v2174
        %v2223 = vunpack.c.l.bf16 %v2175
        %v2272 = vrot.slane %v2176, 1
        %v2273 = vrot.slane %v2177, 1
        %v2274 = vsel %vm878, %v2272, %v2273
        %v2275 = vrot.slane %v2178, 1
        %v2276 = vsel %vm878, %v2273, %v2275
        %v2277 = vrot.slane %v2179, 1
        %v2278 = vrot.slane %v2180, 1
        %v2279 = vsel %vm878, %v2277, %v2278
        %v2280 = vrot.slane %v2181, 1
        %v2281 = vsel %vm878, %v2278, %v2280
        %v2282 = vrot.slane %v2182, 1
        %v2283 = vrot.slane %v2183, 1
        %v2284 = vsel %vm878, %v2282, %v2283
        %v2285 = vrot.slane %v2184, 1
        %v2286 = vsel %vm878, %v2283, %v2285
        %v2287 = vrot.slane %v2185, 1
        %v2288 = vrot.slane %v2186, 1
        %v2289 = vsel %vm878, %v2287, %v2288
        %v2290 = vrot.slane %v2187, 1
        %v2291 = vsel %vm878, %v2288, %v2290
        %v2292 = vrot.slane %v2188, 1
        %v2293 = vrot.slane %v2189, 1
        %v2294 = vsel %vm878, %v2292, %v2293
        %v2295 = vrot.slane %v2190, 1
        %v2296 = vsel %vm878, %v2293, %v2295
        %v2297 = vrot.slane %v2191, 1
        %v2298 = vrot.slane %v2192, 1
        %v2299 = vsel %vm878, %v2297, %v2298
        %v2300 = vrot.slane %v2193, 1
        %v2301 = vsel %vm878, %v2298, %v2300
        %v2302 = vrot.slane %v2194, 1
        %v2303 = vrot.slane %v2195, 1
        %v2304 = vsel %vm878, %v2302, %v2303
        %v2305 = vrot.slane %v2196, 1
        %v2306 = vsel %vm878, %v2303, %v2305
        %v2307 = vrot.slane %v2197, 1
        %v2308 = vrot.slane %v2198, 1
        %v2309 = vsel %vm878, %v2307, %v2308
        %v2310 = vrot.slane %v2199, 1
        %v2311 = vsel %vm878, %v2308, %v2310
        %v2312 = vrot.slane %v2200, 1
        %v2313 = vrot.slane %v2201, 1
        %v2314 = vsel %vm878, %v2312, %v2313
        %v2315 = vrot.slane %v2202, 1
        %v2316 = vsel %vm878, %v2313, %v2315
        %v2317 = vrot.slane %v2203, 1
        %v2318 = vrot.slane %v2204, 1
        %v2319 = vsel %vm878, %v2317, %v2318
        %v2320 = vrot.slane %v2205, 1
        %v2321 = vsel %vm878, %v2318, %v2320
        %v2322 = vrot.slane %v2206, 1
        %v2323 = vrot.slane %v2207, 1
        %v2324 = vsel %vm878, %v2322, %v2323
        %v2325 = vrot.slane %v2208, 1
        %v2326 = vsel %vm878, %v2323, %v2325
        %v2327 = vrot.slane %v2209, 1
        %v2328 = vrot.slane %v2210, 1
        %v2329 = vsel %vm878, %v2327, %v2328
        %v2330 = vrot.slane %v2211, 1
        %v2331 = vsel %vm878, %v2328, %v2330
        %v2332 = vrot.slane %v2212, 1
        %v2333 = vrot.slane %v2213, 1
        %v2334 = vsel %vm878, %v2332, %v2333
        %v2335 = vrot.slane %v2214, 1
        %v2336 = vsel %vm878, %v2333, %v2335
        %v2337 = vrot.slane %v2215, 1
        %v2338 = vrot.slane %v2216, 1
        %v2339 = vsel %vm878, %v2337, %v2338
        %v2340 = vrot.slane %v2217, 1
        %v2341 = vsel %vm878, %v2338, %v2340
        %v2342 = vrot.slane %v2218, 1
        %v2343 = vrot.slane %v2219, 1
        %v2344 = vsel %vm878, %v2342, %v2343
        %v2345 = vrot.slane %v2220, 1
        %v2346 = vsel %vm878, %v2343, %v2345
        %v2347 = vrot.slane %v2221, 1
        %v2348 = vrot.slane %v2222, 1
        %v2349 = vsel %vm878, %v2347, %v2348
        %v2350 = vrot.slane %v2223, 1
        %v2351 = vsel %vm878, %v2348, %v2350
        %v2384 = vadd.f32 %v2088, %v2274
        %v2385 = vadd.f32 %v2089, %v2276
        %v2386 = vadd.f32 %v2090, %v2279
        %v2387 = vadd.f32 %v2091, %v2281
        %v2388 = vadd.f32 %v2092, %v2284
        %v2389 = vadd.f32 %v2093, %v2286
        %v2390 = vadd.f32 %v2094, %v2289
        %v2391 = vadd.f32 %v2095, %v2291
        %v2392 = vadd.f32 %v2096, %v2294
        %v2393 = vadd.f32 %v2097, %v2296
        %v2394 = vadd.f32 %v2098, %v2299
        %v2395 = vadd.f32 %v2099, %v2301
        %v2396 = vadd.f32 %v2100, %v2304
        %v2397 = vadd.f32 %v2101, %v2306
        %v2398 = vadd.f32 %v2102, %v2309
        %v2399 = vadd.f32 %v2103, %v2311
        %v2400 = vadd.f32 %v2104, %v2314
        %v2401 = vadd.f32 %v2105, %v2316
        %v2402 = vadd.f32 %v2106, %v2319
        %v2403 = vadd.f32 %v2107, %v2321
        %v2404 = vadd.f32 %v2108, %v2324
        %v2405 = vadd.f32 %v2109, %v2326
        %v2406 = vadd.f32 %v2110, %v2329
        %v2407 = vadd.f32 %v2111, %v2331
        %v2408 = vadd.f32 %v2112, %v2334
        %v2409 = vadd.f32 %v2113, %v2336
        %v2410 = vadd.f32 %v2114, %v2339
        %v2411 = vadd.f32 %v2115, %v2341
        %v2412 = vadd.f32 %v2116, %v2344
        %v2413 = vadd.f32 %v2117, %v2346
        %v2414 = vadd.f32 %v2118, %v2349
        %v2415 = vadd.f32 %v2119, %v2351
        %v2417 = vpack.i.b16 %v615, %v615
        %v2419 = vlaneseq
        %v2420 = vshrl.u32 %v2419, 7
        %v2421 = vsub.s32 0, %v2420
        %v2422 = vrot.slane %v2417, %v2421
        %v2424 = vunpack.c.l.b16 %v2422
        %v2425 = vpack.c.b16 %v2424, %v2424
        %v2427 = vmul.bf16 %v566, %v2425
        %v2428 = vmul.bf16 %v567, %v2425
        %v2429 = vmul.bf16 %v568, %v2425
        %v2430 = vmul.bf16 %v569, %v2425
        %v2431 = vmul.bf16 %v570, %v2425
        %v2432 = vmul.bf16 %v571, %v2425
        %v2433 = vmul.bf16 %v572, %v2425
        %v2434 = vmul.bf16 %v573, %v2425
        %v2435 = vmul.bf16 %v574, %v2425
        %v2436 = vmul.bf16 %v575, %v2425
        %v2437 = vmul.bf16 %v576, %v2425
        %v2438 = vmul.bf16 %v577, %v2425
        %v2439 = vmul.bf16 %v578, %v2425
        %v2440 = vmul.bf16 %v579, %v2425
        %v2441 = vmul.bf16 %v580, %v2425
        %v2442 = vmul.bf16 %v581, %v2425
        %v2443 = vmul.bf16 %v582, %v2425
        %v2444 = vmul.bf16 %v583, %v2425
        %v2445 = vmul.bf16 %v584, %v2425
        %v2446 = vmul.bf16 %v585, %v2425
        %v2447 = vmul.bf16 %v586, %v2425
        %v2448 = vmul.bf16 %v587, %v2425
        %v2449 = vmul.bf16 %v588, %v2425
        %v2450 = vmul.bf16 %v589, %v2425
        %v2451 = vmul.bf16 %v590, %v2425
        %v2452 = vmul.bf16 %v591, %v2425
        %v2453 = vmul.bf16 %v592, %v2425
        %v2454 = vmul.bf16 %v593, %v2425
        %v2455 = vmul.bf16 %v594, %v2425
        %v2456 = vmul.bf16 %v595, %v2425
        %v2457 = vmul.bf16 %v596, %v2425
        %v2458 = vmul.bf16 %v597, %v2425
        %v2459 = vmul.bf16 %v598, %v2425
        %v2460 = vmul.bf16 %v599, %v2425
        %v2461 = vmul.bf16 %v600, %v2425
        %v2462 = vmul.bf16 %v601, %v2425
        %v2463 = vmul.bf16 %v602, %v2425
        %v2464 = vmul.bf16 %v603, %v2425
        %v2465 = vmul.bf16 %v604, %v2425
        %v2466 = vmul.bf16 %v605, %v2425
        %v2467 = vmul.bf16 %v606, %v2425
        %v2468 = vmul.bf16 %v607, %v2425
        %v2469 = vmul.bf16 %v608, %v2425
        %v2470 = vmul.bf16 %v609, %v2425
        %v2471 = vmul.bf16 %v610, %v2425
        %v2472 = vmul.bf16 %v611, %v2425
        %v2473 = vmul.bf16 %v612, %v2425
        %v2474 = vmul.bf16 %v613, %v2425
        %v2475 = vunpack.c.l.bf16 %v2427
        %v2476 = vunpack.c.l.bf16 %v2428
        %v2477 = vunpack.c.l.bf16 %v2429
        %v2478 = vunpack.c.l.bf16 %v2430
        %v2479 = vunpack.c.l.bf16 %v2431
        %v2480 = vunpack.c.l.bf16 %v2432
        %v2481 = vunpack.c.l.bf16 %v2433
        %v2482 = vunpack.c.l.bf16 %v2434
        %v2483 = vunpack.c.l.bf16 %v2435
        %v2484 = vunpack.c.l.bf16 %v2436
        %v2485 = vunpack.c.l.bf16 %v2437
        %v2486 = vunpack.c.l.bf16 %v2438
        %v2487 = vunpack.c.l.bf16 %v2439
        %v2488 = vunpack.c.l.bf16 %v2440
        %v2489 = vunpack.c.l.bf16 %v2441
        %v2490 = vunpack.c.l.bf16 %v2442
        %v2491 = vunpack.c.l.bf16 %v2443
        %v2492 = vunpack.c.l.bf16 %v2444
        %v2493 = vunpack.c.l.bf16 %v2445
        %v2494 = vunpack.c.l.bf16 %v2446
        %v2495 = vunpack.c.l.bf16 %v2447
        %v2496 = vunpack.c.l.bf16 %v2448
        %v2497 = vunpack.c.l.bf16 %v2449
        %v2498 = vunpack.c.l.bf16 %v2450
        %v2499 = vunpack.c.l.bf16 %v2451
        %v2500 = vunpack.c.l.bf16 %v2452
        %v2501 = vunpack.c.l.bf16 %v2453
        %v2502 = vunpack.c.l.bf16 %v2454
        %v2503 = vunpack.c.l.bf16 %v2455
        %v2504 = vunpack.c.l.bf16 %v2456
        %v2505 = vunpack.c.l.bf16 %v2457
        %v2506 = vunpack.c.l.bf16 %v2458
        %v2507 = vunpack.c.l.bf16 %v2459
        %v2508 = vunpack.c.l.bf16 %v2460
        %v2509 = vunpack.c.l.bf16 %v2461
        %v2510 = vunpack.c.l.bf16 %v2462
        %v2511 = vunpack.c.l.bf16 %v2463
        %v2512 = vunpack.c.l.bf16 %v2464
        %v2513 = vunpack.c.l.bf16 %v2465
        %v2514 = vunpack.c.l.bf16 %v2466
        %v2515 = vunpack.c.l.bf16 %v2467
        %v2516 = vunpack.c.l.bf16 %v2468
        %v2517 = vunpack.c.l.bf16 %v2469
        %v2518 = vunpack.c.l.bf16 %v2470
        %v2519 = vunpack.c.l.bf16 %v2471
        %v2520 = vunpack.c.l.bf16 %v2472
        %v2521 = vunpack.c.l.bf16 %v2473
        %v2522 = vunpack.c.l.bf16 %v2474
        %v2571 = vrot.slane %v2475, 2
        %v2572 = vrot.slane %v2476, 2
        %v2573 = vsel %vm1175, %v2571, %v2572
        %v2574 = vrot.slane %v2477, 2
        %v2575 = vsel %vm1175, %v2572, %v2574
        %v2576 = vrot.slane %v2478, 2
        %v2577 = vrot.slane %v2479, 2
        %v2578 = vsel %vm1175, %v2576, %v2577
        %v2579 = vrot.slane %v2480, 2
        %v2580 = vsel %vm1175, %v2577, %v2579
        %v2581 = vrot.slane %v2481, 2
        %v2582 = vrot.slane %v2482, 2
        %v2583 = vsel %vm1175, %v2581, %v2582
        %v2584 = vrot.slane %v2483, 2
        %v2585 = vsel %vm1175, %v2582, %v2584
        %v2586 = vrot.slane %v2484, 2
        %v2587 = vrot.slane %v2485, 2
        %v2588 = vsel %vm1175, %v2586, %v2587
        %v2589 = vrot.slane %v2486, 2
        %v2590 = vsel %vm1175, %v2587, %v2589
        %v2591 = vrot.slane %v2487, 2
        %v2592 = vrot.slane %v2488, 2
        %v2593 = vsel %vm1175, %v2591, %v2592
        %v2594 = vrot.slane %v2489, 2
        %v2595 = vsel %vm1175, %v2592, %v2594
        %v2596 = vrot.slane %v2490, 2
        %v2597 = vrot.slane %v2491, 2
        %v2598 = vsel %vm1175, %v2596, %v2597
        %v2599 = vrot.slane %v2492, 2
        %v2600 = vsel %vm1175, %v2597, %v2599
        %v2601 = vrot.slane %v2493, 2
        %v2602 = vrot.slane %v2494, 2
        %v2603 = vsel %vm1175, %v2601, %v2602
        %v2604 = vrot.slane %v2495, 2
        %v2605 = vsel %vm1175, %v2602, %v2604
        %v2606 = vrot.slane %v2496, 2
        %v2607 = vrot.slane %v2497, 2
        %v2608 = vsel %vm1175, %v2606, %v2607
        %v2609 = vrot.slane %v2498, 2
        %v2610 = vsel %vm1175, %v2607, %v2609
        %v2611 = vrot.slane %v2499, 2
        %v2612 = vrot.slane %v2500, 2
        %v2613 = vsel %vm1175, %v2611, %v2612
        %v2614 = vrot.slane %v2501, 2
        %v2615 = vsel %vm1175, %v2612, %v2614
        %v2616 = vrot.slane %v2502, 2
        %v2617 = vrot.slane %v2503, 2
        %v2618 = vsel %vm1175, %v2616, %v2617
        %v2619 = vrot.slane %v2504, 2
        %v2620 = vsel %vm1175, %v2617, %v2619
        %v2621 = vrot.slane %v2505, 2
        %v2622 = vrot.slane %v2506, 2
        %v2623 = vsel %vm1175, %v2621, %v2622
        %v2624 = vrot.slane %v2507, 2
        %v2625 = vsel %vm1175, %v2622, %v2624
        %v2626 = vrot.slane %v2508, 2
        %v2627 = vrot.slane %v2509, 2
        %v2628 = vsel %vm1175, %v2626, %v2627
        %v2629 = vrot.slane %v2510, 2
        %v2630 = vsel %vm1175, %v2627, %v2629
        %v2631 = vrot.slane %v2511, 2
        %v2632 = vrot.slane %v2512, 2
        %v2633 = vsel %vm1175, %v2631, %v2632
        %v2634 = vrot.slane %v2513, 2
        %v2635 = vsel %vm1175, %v2632, %v2634
        %v2636 = vrot.slane %v2514, 2
        %v2637 = vrot.slane %v2515, 2
        %v2638 = vsel %vm1175, %v2636, %v2637
        %v2639 = vrot.slane %v2516, 2
        %v2640 = vsel %vm1175, %v2637, %v2639
        %v2641 = vrot.slane %v2517, 2
        %v2642 = vrot.slane %v2518, 2
        %v2643 = vsel %vm1175, %v2641, %v2642
        %v2644 = vrot.slane %v2519, 2
        %v2645 = vsel %vm1175, %v2642, %v2644
        %v2646 = vrot.slane %v2520, 2
        %v2647 = vrot.slane %v2521, 2
        %v2648 = vsel %vm1175, %v2646, %v2647
        %v2649 = vrot.slane %v2522, 2
        %v2650 = vsel %vm1175, %v2647, %v2649
        %v2683 = vadd.f32 %v2384, %v2573
        %v2684 = vadd.f32 %v2385, %v2575
        %v2685 = vadd.f32 %v2386, %v2578
        %v2686 = vadd.f32 %v2387, %v2580
        %v2687 = vadd.f32 %v2388, %v2583
        %v2688 = vadd.f32 %v2389, %v2585
        %v2689 = vadd.f32 %v2390, %v2588
        %v2690 = vadd.f32 %v2391, %v2590
        %v2691 = vadd.f32 %v2392, %v2593
        %v2692 = vadd.f32 %v2393, %v2595
        %v2693 = vadd.f32 %v2394, %v2598
        %v2694 = vadd.f32 %v2395, %v2600
        %v2695 = vadd.f32 %v2396, %v2603
        %v2696 = vadd.f32 %v2397, %v2605
        %v2697 = vadd.f32 %v2398, %v2608
        %v2698 = vadd.f32 %v2399, %v2610
        %v2699 = vadd.f32 %v2400, %v2613
        %v2700 = vadd.f32 %v2401, %v2615
        %v2701 = vadd.f32 %v2402, %v2618
        %v2702 = vadd.f32 %v2403, %v2620
        %v2703 = vadd.f32 %v2404, %v2623
        %v2704 = vadd.f32 %v2405, %v2625
        %v2705 = vadd.f32 %v2406, %v2628
        %v2706 = vadd.f32 %v2407, %v2630
        %v2707 = vadd.f32 %v2408, %v2633
        %v2708 = vadd.f32 %v2409, %v2635
        %v2709 = vadd.f32 %v2410, %v2638
        %v2710 = vadd.f32 %v2411, %v2640
        %v2711 = vadd.f32 %v2412, %v2643
        %v2712 = vadd.f32 %v2413, %v2645
        %v2713 = vadd.f32 %v2414, %v2648
        %v2714 = vadd.f32 %v2415, %v2650
        %v2715 = vld [vmem:[%s556] sm:$0x1]
        %v2717 = vlaneseq
        %v2718 = vshrl.u32 %v2717, 7
        %v2719 = vsub.s32 0, %v2718
        %v2720 = vrot.slane %v2715, %v2719
        %v2722 = vmul.f32 %v2683, %v2720
        %v2723 = vmul.f32 %v2684, %v2720
        %v2724 = vmul.f32 %v2685, %v2720
        %v2725 = vmul.f32 %v2686, %v2720
        %v2726 = vmul.f32 %v2687, %v2720
        %v2727 = vmul.f32 %v2688, %v2720
        %v2728 = vmul.f32 %v2689, %v2720
        %v2729 = vmul.f32 %v2690, %v2720
        %v2730 = vmul.f32 %v2691, %v2720
        %v2731 = vmul.f32 %v2692, %v2720
        %v2732 = vmul.f32 %v2693, %v2720
        %v2733 = vmul.f32 %v2694, %v2720
        %v2734 = vmul.f32 %v2695, %v2720
        %v2735 = vmul.f32 %v2696, %v2720
        %v2736 = vmul.f32 %v2697, %v2720
        %v2737 = vmul.f32 %v2698, %v2720
        %v2738 = vmul.f32 %v2699, %v2720
        %v2739 = vmul.f32 %v2700, %v2720
        %v2740 = vmul.f32 %v2701, %v2720
        %v2741 = vmul.f32 %v2702, %v2720
        %v2742 = vmul.f32 %v2703, %v2720
        %v2743 = vmul.f32 %v2704, %v2720
        %v2744 = vmul.f32 %v2705, %v2720
        %v2745 = vmul.f32 %v2706, %v2720
        %v2746 = vmul.f32 %v2707, %v2720
        %v2747 = vmul.f32 %v2708, %v2720
        %v2748 = vmul.f32 %v2709, %v2720
        %v2749 = vmul.f32 %v2710, %v2720
        %v2750 = vmul.f32 %v2711, %v2720
        %v2751 = vmul.f32 %v2712, %v2720
        %v2752 = vmul.f32 %v2713, %v2720
        %v2753 = vmul.f32 %v2714, %v2720
        %v2754 = vld [vmem:[%s559] sm:$0x1]
        %v2756 = vlaneseq
        %v2757 = vshrl.u32 %v2756, 7
        %v2758 = vsub.s32 0, %v2757
        %v2759 = vrot.slane %v2754, %v2758
        %v2761 = vadd.f32 %v2722, %v2759
        %v2762 = vadd.f32 %v2723, %v2759
        %v2763 = vadd.f32 %v2724, %v2759
        %v2764 = vadd.f32 %v2725, %v2759
        %v2765 = vadd.f32 %v2726, %v2759
        %v2766 = vadd.f32 %v2727, %v2759
        %v2767 = vadd.f32 %v2728, %v2759
        %v2768 = vadd.f32 %v2729, %v2759
        %v2769 = vadd.f32 %v2730, %v2759
        %v2770 = vadd.f32 %v2731, %v2759
        %v2771 = vadd.f32 %v2732, %v2759
        %v2772 = vadd.f32 %v2733, %v2759
        %v2773 = vadd.f32 %v2734, %v2759
        %v2774 = vadd.f32 %v2735, %v2759
        %v2775 = vadd.f32 %v2736, %v2759
        %v2776 = vadd.f32 %v2737, %v2759
        %v2777 = vadd.f32 %v2738, %v2759
        %v2778 = vadd.f32 %v2739, %v2759
        %v2779 = vadd.f32 %v2740, %v2759
        %v2780 = vadd.f32 %v2741, %v2759
        %v2781 = vadd.f32 %v2742, %v2759
        %v2782 = vadd.f32 %v2743, %v2759
        %v2783 = vadd.f32 %v2744, %v2759
        %v2784 = vadd.f32 %v2745, %v2759
        %v2785 = vadd.f32 %v2746, %v2759
        %v2786 = vadd.f32 %v2747, %v2759
        %v2787 = vadd.f32 %v2748, %v2759
        %v2788 = vadd.f32 %v2749, %v2759
        %v2789 = vadd.f32 %v2750, %v2759
        %v2790 = vadd.f32 %v2751, %v2759
        %v2791 = vadd.f32 %v2752, %v2759
        %v2792 = vadd.f32 %v2753, %v2759
        %v2793 = vmax.f32 %v2761, 0.0
        %v2794 = vmax.f32 %v2762, 0.0
        %v2795 = vmax.f32 %v2763, 0.0
        %v2796 = vmax.f32 %v2764, 0.0
        %v2797 = vmax.f32 %v2765, 0.0
        %v2798 = vmax.f32 %v2766, 0.0
        %v2799 = vmax.f32 %v2767, 0.0
        %v2800 = vmax.f32 %v2768, 0.0
        %v2801 = vmax.f32 %v2769, 0.0
        %v2802 = vmax.f32 %v2770, 0.0
        %v2803 = vmax.f32 %v2771, 0.0
        %v2804 = vmax.f32 %v2772, 0.0
        %v2805 = vmax.f32 %v2773, 0.0
        %v2806 = vmax.f32 %v2774, 0.0
        %v2807 = vmax.f32 %v2775, 0.0
        %v2808 = vmax.f32 %v2776, 0.0
        %v2809 = vmax.f32 %v2777, 0.0
        %v2810 = vmax.f32 %v2778, 0.0
        %v2811 = vmax.f32 %v2779, 0.0
        %v2812 = vmax.f32 %v2780, 0.0
        %v2813 = vmax.f32 %v2781, 0.0
        %v2814 = vmax.f32 %v2782, 0.0
        %v2815 = vmax.f32 %v2783, 0.0
        %v2816 = vmax.f32 %v2784, 0.0
        %v2817 = vmax.f32 %v2785, 0.0
        %v2818 = vmax.f32 %v2786, 0.0
        %v2819 = vmax.f32 %v2787, 0.0
        %v2820 = vmax.f32 %v2788, 0.0
        %v2821 = vmax.f32 %v2789, 0.0
        %v2822 = vmax.f32 %v2790, 0.0
        %v2823 = vmax.f32 %v2791, 0.0
        %v2824 = vmax.f32 %v2792, 0.0
        %v2825 = vmin.f32 %v2793, 6.0
        %v2826 = vmin.f32 %v2794, 6.0
        %v2827 = vmin.f32 %v2795, 6.0
        %v2828 = vmin.f32 %v2796, 6.0
        %v2829 = vmin.f32 %v2797, 6.0
        %v2830 = vmin.f32 %v2798, 6.0
        %v2831 = vmin.f32 %v2799, 6.0
        %v2832 = vmin.f32 %v2800, 6.0
        %v2833 = vmin.f32 %v2801, 6.0
        %v2834 = vmin.f32 %v2802, 6.0
        %v2835 = vmin.f32 %v2803, 6.0
        %v2836 = vmin.f32 %v2804, 6.0
        %v2837 = vmin.f32 %v2805, 6.0
        %v2838 = vmin.f32 %v2806, 6.0
        %v2839 = vmin.f32 %v2807, 6.0
        %v2840 = vmin.f32 %v2808, 6.0
        %v2841 = vmin.f32 %v2809, 6.0
        %v2842 = vmin.f32 %v2810, 6.0
        %v2843 = vmin.f32 %v2811, 6.0
        %v2844 = vmin.f32 %v2812, 6.0
        %v2845 = vmin.f32 %v2813, 6.0
        %v2846 = vmin.f32 %v2814, 6.0
        %v2847 = vmin.f32 %v2815, 6.0
        %v2848 = vmin.f32 %v2816, 6.0
        %v2849 = vmin.f32 %v2817, 6.0
        %v2850 = vmin.f32 %v2818, 6.0
        %v2851 = vmin.f32 %v2819, 6.0
        %v2852 = vmin.f32 %v2820, 6.0
        %v2853 = vmin.f32 %v2821, 6.0
        %v2854 = vmin.f32 %v2822, 6.0
        %v2855 = vmin.f32 %v2823, 6.0
        %v2856 = vmin.f32 %v2824, 6.0
        %v2857 = vpack.c.bf16 %v2826, %v2825
        %v2858 = vpack.c.bf16 %v2828, %v2827
        %v2859 = vpack.c.bf16 %v2830, %v2829
        %v2860 = vpack.c.bf16 %v2832, %v2831
        %v2861 = vpack.c.bf16 %v2834, %v2833
        %v2862 = vpack.c.bf16 %v2836, %v2835
        %v2863 = vpack.c.bf16 %v2838, %v2837
        %v2864 = vpack.c.bf16 %v2840, %v2839
        %v2865 = vpack.c.bf16 %v2842, %v2841
        %v2866 = vpack.c.bf16 %v2844, %v2843
        %v2867 = vpack.c.bf16 %v2846, %v2845
        %v2868 = vpack.c.bf16 %v2848, %v2847
        %v2869 = vpack.c.bf16 %v2850, %v2849
        %v2870 = vpack.c.bf16 %v2852, %v2851
        %v2871 = vpack.c.bf16 %v2854, %v2853
        %v2872 = vpack.c.bf16 %v2856, %v2855
        %v2889 = vunpack.c.l.b16 %v2857
        %v2890 = vunpack.c.h.b16 %v2857
        %v2891 = vunpack.c.l.b16 %v2858
        %v2892 = vunpack.c.h.b16 %v2858
        %v2893 = vunpack.c.l.b16 %v2859
        %v2894 = vunpack.c.h.b16 %v2859
        %v2895 = vunpack.c.l.b16 %v2860
        %v2896 = vunpack.c.h.b16 %v2860
        %v2897 = vunpack.c.l.b16 %v2861
        %v2898 = vunpack.c.h.b16 %v2861
        %v2899 = vunpack.c.l.b16 %v2862
        %v2900 = vunpack.c.h.b16 %v2862
        %v2901 = vunpack.c.l.b16 %v2863
        %v2902 = vunpack.c.h.b16 %v2863
        %v2903 = vunpack.c.l.b16 %v2864
        %v2904 = vunpack.c.h.b16 %v2864
        %v2905 = vunpack.c.l.b16 %v2865
        %v2906 = vunpack.c.h.b16 %v2865
        %v2907 = vunpack.c.l.b16 %v2866
        %v2908 = vunpack.c.h.b16 %v2866
        %v2909 = vunpack.c.l.b16 %v2867
        %v2910 = vunpack.c.h.b16 %v2867
        %v2911 = vunpack.c.l.b16 %v2868
        %v2912 = vunpack.c.h.b16 %v2868
        %v2913 = vunpack.c.l.b16 %v2869
        %v2914 = vunpack.c.h.b16 %v2869
        %v2915 = vunpack.c.l.b16 %v2870
        %v2916 = vunpack.c.h.b16 %v2870
        %v2917 = vunpack.c.l.b16 %v2871
        %v2918 = vunpack.c.h.b16 %v2871
        %v2919 = vunpack.c.l.b16 %v2872
        %v2920 = vunpack.c.h.b16 %v2872
        %v2921 = vpack.c.b16 %v2889, %v2889
        %v2922 = vpack.c.b16 %v2890, %v2890
        %v2923 = vpack.c.b16 %v2891, %v2891
        %v2924 = vpack.c.b16 %v2892, %v2892
        %v2925 = vpack.c.b16 %v2893, %v2893
        %v2926 = vpack.c.b16 %v2894, %v2894
        %v2927 = vpack.c.b16 %v2895, %v2895
        %v2928 = vpack.c.b16 %v2896, %v2896
        %v2929 = vpack.c.b16 %v2897, %v2897
        %v2930 = vpack.c.b16 %v2898, %v2898
        %v2931 = vpack.c.b16 %v2899, %v2899
        %v2932 = vpack.c.b16 %v2900, %v2900
        %v2933 = vpack.c.b16 %v2901, %v2901
        %v2934 = vpack.c.b16 %v2902, %v2902
        %v2935 = vpack.c.b16 %v2903, %v2903
        %v2936 = vpack.c.b16 %v2904, %v2904
        %v2937 = vpack.c.b16 %v2905, %v2905
        %v2938 = vpack.c.b16 %v2906, %v2906
        %v2939 = vpack.c.b16 %v2907, %v2907
        %v2940 = vpack.c.b16 %v2908, %v2908
        %v2941 = vpack.c.b16 %v2909, %v2909
        %v2942 = vpack.c.b16 %v2910, %v2910
        %v2943 = vpack.c.b16 %v2911, %v2911
        %v2944 = vpack.c.b16 %v2912, %v2912
        %v2945 = vpack.c.b16 %v2913, %v2913
        %v2946 = vpack.c.b16 %v2914, %v2914
        %v2947 = vpack.c.b16 %v2915, %v2915
        %v2948 = vpack.c.b16 %v2916, %v2916
        %v2949 = vpack.c.b16 %v2917, %v2917
        %v2950 = vpack.c.b16 %v2918, %v2918
        %v2951 = vpack.c.b16 %v2919, %v2919
        %v2952 = vpack.c.b16 %v2920, %v2920
        %2985 = vst [vmem:[%s553] sm:$0xf] %v2921
        %2986 = vst [vmem:[%s553 + $0x4] sm:$0xf] %v2922
        %2987 = vst [vmem:[%s553 + $0x8] sm:$0xf] %v2923
        %2988 = vst [vmem:[%s553 + $0xc] sm:$0xf] %v2924
        %2989 = vst [vmem:[%s553 + $0x10] sm:$0xf] %v2925
        %2990 = vst [vmem:[%s553 + $0x14] sm:$0xf] %v2926
        %2991 = vst [vmem:[%s553 + $0x18] sm:$0xf] %v2927
        %2992 = vst [vmem:[%s553 + $0x1c] sm:$0xf] %v2928
        %2993 = vst [vmem:[%s553 + $0x20] sm:$0xf] %v2929
        %2994 = vst [vmem:[%s553 + $0x24] sm:$0xf] %v2930
        %2995 = vst [vmem:[%s553 + $0x28] sm:$0xf] %v2931
        %2996 = vst [vmem:[%s553 + $0x2c] sm:$0xf] %v2932
        %2997 = vst [vmem:[%s553 + $0x30] sm:$0xf] %v2933
        %2998 = vst [vmem:[%s553 + $0x34] sm:$0xf] %v2934
        %2999 = vst [vmem:[%s553 + $0x38] sm:$0xf] %v2935
        %3000 = vst [vmem:[%s553 + $0x3c] sm:$0xf] %v2936
        %3001 = vst [vmem:[%s553 + $0x40] sm:$0xf] %v2937
        %3002 = vst [vmem:[%s553 + $0x44] sm:$0xf] %v2938
        %3003 = vst [vmem:[%s553 + $0x48] sm:$0xf] %v2939
        %3004 = vst [vmem:[%s553 + $0x4c] sm:$0xf] %v2940
        %3005 = vst [vmem:[%s553 + $0x50] sm:$0xf] %v2941
        %3006 = vst [vmem:[%s553 + $0x54] sm:$0xf] %v2942
        %3007 = vst [vmem:[%s553 + $0x58] sm:$0xf] %v2943
        %3008 = vst [vmem:[%s553 + $0x5c] sm:$0xf] %v2944
        %3009 = vst [vmem:[%s553 + $0x60] sm:$0xf] %v2945
        %3010 = vst [vmem:[%s553 + $0x64] sm:$0xf] %v2946
        %3011 = vst [vmem:[%s553 + $0x68] sm:$0xf] %v2947
        %3012 = vst [vmem:[%s553 + $0x6c] sm:$0xf] %v2948
        %3013 = vst [vmem:[%s553 + $0x70] sm:$0xf] %v2949
        %3014 = vst [vmem:[%s553 + $0x74] sm:$0xf] %v2950
        %3015 = vst [vmem:[%s553 + $0x78] sm:$0xf] %v2951
        %3016 = vst [vmem:[%s553 + $0x7c] sm:$0xf] %v2952
        %s3017 = sand.u32 %s143, 1
        %s3018 = sand.u32 %s143, 1
        %s3019 = smul.addr %s3018, 128
        %s3020 = scalar_lea.vmem [#allocation4], %s3019
        // Predicated region
        $region119: #{_lambda_.4} parent=109 // pred_check
          %p3021 = pneg %p153
        $region120: #{_lambda_.4} parent=109 // pred_check_branch
          %3023 = sbr.rel (%p3021) target = $region122
        $region121: #{_lambda_.4} parent=109 // pred_region
          %s3024 = smul.addr %s19, 64
          %s3025 = sadd.s32 %s20, %s3024
          %s3026 = smul.addr %s3025, 4
          %s3027 = scalar_lea.vmem %s4, %s3026
          // Predicated region
          $region123: #{_lambda_.4} parent=121 // pred_check
            _
          $region124: #{_lambda_.4} parent=121 // pred_check_branch
            %3029 = sbr.rel (0) target = $region126
          $region125: #{_lambda_.4} parent=121 // pred_region
            // Predicated region
            $region127: #{_lambda_.4} parent=125 // pred_check
              _
            $region128: #{_lambda_.4} parent=125 // pred_check_branch
              %3031 = sbr.rel target = $region130
            $region129: #{_lambda_.4} parent=125 // pred_region
              // Predicated region
              $region142: #{_lambda_.4} parent=129 // pred_check
                _
              $region143: #{_lambda_.4} parent=129 // pred_check_branch
                %3109 = sbr.rel (0) target = $region145
              $region144: #{_lambda_.4} parent=129 // pred_region
                loop: start=0, step=1, limit=1
                $region146: #{_lambda_.4} parent=144 // loop_pre_header
                  _
                $region147: #{_lambda_.4} parent=144 // loop_header
                  %s3111 = sphi 0, %s3115
                  %p3112 = scmp.ge.s32.totalorder %s3111, 1
                  %s3116 = sphi %s3020, %s3020
                  %s3117 = sphi %s3027, %s3027
                $region148: #{_lambda_.4} parent=144 // loop_header_branch
                  %3114 = sbr.rel (%p3112) target = $region152
                $region149: #{_lambda_.4} parent=144 // loop_body
                  _
                $region150: #{_lambda_.4} parent=144 // loop_footer
                  %s3115 = sadd.s32 1, %s3111
                $region151: #{_lambda_.4} parent=144 // loop_footer_branch
                  %3110 = sbr.rel target = $region147
                $region152: #{_lambda_.4} parent=144 // loop_exit
                  _
                %s3119 = ssub.s32 16, 1
                loop: start=0, step=1, limit=1
                $region153: #{_lambda_.4} parent=144 // loop_pre_header
                  _
                $region154: #{_lambda_.4} parent=144 // loop_header
                  %s3121 = sphi 0, %s3125
                  %p3122 = scmp.ge.s32.totalorder %s3121, 1
                  %s3126 = sphi %s3020, %s3020
                  %s3127 = sphi %s3027, %s3027
                $region155: #{_lambda_.4} parent=144 // loop_header_branch
                  %3124 = sbr.rel (%p3122) target = $region159
                $region156: #{_lambda_.4} parent=144 // loop_body
                  %v3128 = vld [vmem:[%s3126] sm:%s3119]
                  %3129 = vst [vmem:[%s3127] sm:%s3119] %v3128
                  %v3130 = vld [vmem:[%s3126 + $0x4] sm:%s3119]
                  %3131 = vst [vmem:[%s3127 + $0x8] sm:%s3119] %v3130
                  %v3132 = vld [vmem:[%s3126 + $0x8] sm:%s3119]
                  %3133 = vst [vmem:[%s3127 + $0x10] sm:%s3119] %v3132
                  %v3134 = vld [vmem:[%s3126 + $0xc] sm:%s3119]
                  %3135 = vst [vmem:[%s3127 + $0x18] sm:%s3119] %v3134
                  %v3136 = vld [vmem:[%s3126 + $0x10] sm:%s3119]
                  %3137 = vst [vmem:[%s3127 + $0x20] sm:%s3119] %v3136
                  %v3138 = vld [vmem:[%s3126 + $0x14] sm:%s3119]
                  %3139 = vst [vmem:[%s3127 + $0x28] sm:%s3119] %v3138
                  %v3140 = vld [vmem:[%s3126 + $0x18] sm:%s3119]
                  %3141 = vst [vmem:[%s3127 + $0x30] sm:%s3119] %v3140
                  %v3142 = vld [vmem:[%s3126 + $0x1c] sm:%s3119]
                  %3143 = vst [vmem:[%s3127 + $0x38] sm:%s3119] %v3142
                  %v3144 = vld [vmem:[%s3126 + $0x20] sm:%s3119]
                  %3145 = vst [vmem:[%s3127 + $0x40] sm:%s3119] %v3144
                  %v3146 = vld [vmem:[%s3126 + $0x24] sm:%s3119]
                  %3147 = vst [vmem:[%s3127 + $0x48] sm:%s3119] %v3146
                  %v3148 = vld [vmem:[%s3126 + $0x28] sm:%s3119]
                  %3149 = vst [vmem:[%s3127 + $0x50] sm:%s3119] %v3148
                  %v3150 = vld [vmem:[%s3126 + $0x2c] sm:%s3119]
                  %3151 = vst [vmem:[%s3127 + $0x58] sm:%s3119] %v3150
                  %v3152 = vld [vmem:[%s3126 + $0x30] sm:%s3119]
                  %3153 = vst [vmem:[%s3127 + $0x60] sm:%s3119] %v3152
                  %v3154 = vld [vmem:[%s3126 + $0x34] sm:%s3119]
                  %3155 = vst [vmem:[%s3127 + $0x68] sm:%s3119] %v3154
                  %v3156 = vld [vmem:[%s3126 + $0x38] sm:%s3119]
                  %3157 = vst [vmem:[%s3127 + $0x70] sm:%s3119] %v3156
                  %v3158 = vld [vmem:[%s3126 + $0x3c] sm:%s3119]
                  %3159 = vst [vmem:[%s3127 + $0x78] sm:%s3119] %v3158
                  %v3160 = vld [vmem:[%s3126 + $0x40] sm:%s3119]
                  %3161 = vst [vmem:[%s3127 + $0x80] sm:%s3119] %v3160
                  %v3162 = vld [vmem:[%s3126 + $0x44] sm:%s3119]
                  %3163 = vst [vmem:[%s3127 + $0x88] sm:%s3119] %v3162
                  %v3164 = vld [vmem:[%s3126 + $0x48] sm:%s3119]
                  %3165 = vst [vmem:[%s3127 + $0x90] sm:%s3119] %v3164
                  %v3166 = vld [vmem:[%s3126 + $0x4c] sm:%s3119]
                  %3167 = vst [vmem:[%s3127 + $0x98] sm:%s3119] %v3166
                  %v3168 = vld [vmem:[%s3126 + $0x50] sm:%s3119]
                  %3169 = vst [vmem:[%s3127 + $0xa0] sm:%s3119] %v3168
                  %v3170 = vld [vmem:[%s3126 + $0x54] sm:%s3119]
                  %3171 = vst [vmem:[%s3127 + $0xa8] sm:%s3119] %v3170
                  %v3172 = vld [vmem:[%s3126 + $0x58] sm:%s3119]
                  %3173 = vst [vmem:[%s3127 + $0xb0] sm:%s3119] %v3172
                  %v3174 = vld [vmem:[%s3126 + $0x5c] sm:%s3119]
                  %3175 = vst [vmem:[%s3127 + $0xb8] sm:%s3119] %v3174
                  %v3176 = vld [vmem:[%s3126 + $0x60] sm:%s3119]
                  %3177 = vst [vmem:[%s3127 + $0xc0] sm:%s3119] %v3176
                  %v3178 = vld [vmem:[%s3126 + $0x64] sm:%s3119]
                  %3179 = vst [vmem:[%s3127 + $0xc8] sm:%s3119] %v3178
                  %v3180 = vld [vmem:[%s3126 + $0x68] sm:%s3119]
                  %3181 = vst [vmem:[%s3127 + $0xd0] sm:%s3119] %v3180
                  %v3182 = vld [vmem:[%s3126 + $0x6c] sm:%s3119]
                  %3183 = vst [vmem:[%s3127 + $0xd8] sm:%s3119] %v3182
                  %v3184 = vld [vmem:[%s3126 + $0x70] sm:%s3119]
                  %3185 = vst [vmem:[%s3127 + $0xe0] sm:%s3119] %v3184
                  %v3186 = vld [vmem:[%s3126 + $0x74] sm:%s3119]
                  %3187 = vst [vmem:[%s3127 + $0xe8] sm:%s3119] %v3186
                  %v3188 = vld [vmem:[%s3126 + $0x78] sm:%s3119]
                  %3189 = vst [vmem:[%s3127 + $0xf0] sm:%s3119] %v3188
                  %v3190 = vld [vmem:[%s3126 + $0x7c] sm:%s3119]
                  %3191 = vst [vmem:[%s3127 + $0xf8] sm:%s3119] %v3190
                $region157: #{_lambda_.4} parent=144 // loop_footer
                  %s3125 = sadd.s32 1, %s3121
                $region158: #{_lambda_.4} parent=144 // loop_footer_branch
                  %3120 = sbr.rel target = $region154
                $region159: #{_lambda_.4} parent=144 // loop_exit
                  _
              $region145: #{_lambda_.4} parent=129 // pred_fallthru
                _
            $region130: #{_lambda_.4} parent=125 // pred_fallthru
              _
            // Predicated region
            $region131: #{_lambda_.4} parent=125 // pred_check
              _
            $region132: #{_lambda_.4} parent=125 // pred_check_branch
              %3033 = sbr.rel (0) target = $region134
            $region133: #{_lambda_.4} parent=125 // pred_region
              %s3035 = ssub.s32 16, 1
              loop: start=0, step=1, limit=1
              $region135: #{_lambda_.4} parent=133 // loop_pre_header
                _
              $region136: #{_lambda_.4} parent=133 // loop_header
                %s3037 = sphi 0, %s3041
                %p3038 = scmp.ge.s32.totalorder %s3037, 1
                %s3042 = sphi %s3020, %s3020
                %s3043 = sphi %s3027, %s3027
              $region137: #{_lambda_.4} parent=133 // loop_header_branch
                %3040 = sbr.rel (%p3038) target = $region141
              $region138: #{_lambda_.4} parent=133 // loop_body
                %v3044 = vld [vmem:[%s3042] sm:%s3035]
                %3045 = vst [vmem:[%s3043] sm:%s3035] %v3044
                %v3046 = vld [vmem:[%s3042 + $0x4] sm:%s3035]
                %3047 = vst [vmem:[%s3043 + $0x8] sm:%s3035] %v3046
                %v3048 = vld [vmem:[%s3042 + $0x8] sm:%s3035]
                %3049 = vst [vmem:[%s3043 + $0x10] sm:%s3035] %v3048
                %v3050 = vld [vmem:[%s3042 + $0xc] sm:%s3035]
                %3051 = vst [vmem:[%s3043 + $0x18] sm:%s3035] %v3050
                %v3052 = vld [vmem:[%s3042 + $0x10] sm:%s3035]
                %3053 = vst [vmem:[%s3043 + $0x20] sm:%s3035] %v3052
                %v3054 = vld [vmem:[%s3042 + $0x14] sm:%s3035]
                %3055 = vst [vmem:[%s3043 + $0x28] sm:%s3035] %v3054
                %v3056 = vld [vmem:[%s3042 + $0x18] sm:%s3035]
                %3057 = vst [vmem:[%s3043 + $0x30] sm:%s3035] %v3056
                %v3058 = vld [vmem:[%s3042 + $0x1c] sm:%s3035]
                %3059 = vst [vmem:[%s3043 + $0x38] sm:%s3035] %v3058
                %v3060 = vld [vmem:[%s3042 + $0x20] sm:%s3035]
                %3061 = vst [vmem:[%s3043 + $0x40] sm:%s3035] %v3060
                %v3062 = vld [vmem:[%s3042 + $0x24] sm:%s3035]
                %3063 = vst [vmem:[%s3043 + $0x48] sm:%s3035] %v3062
                %v3064 = vld [vmem:[%s3042 + $0x28] sm:%s3035]
                %3065 = vst [vmem:[%s3043 + $0x50] sm:%s3035] %v3064
                %v3066 = vld [vmem:[%s3042 + $0x2c] sm:%s3035]
                %3067 = vst [vmem:[%s3043 + $0x58] sm:%s3035] %v3066
                %v3068 = vld [vmem:[%s3042 + $0x30] sm:%s3035]
                %3069 = vst [vmem:[%s3043 + $0x60] sm:%s3035] %v3068
                %v3070 = vld [vmem:[%s3042 + $0x34] sm:%s3035]
                %3071 = vst [vmem:[%s3043 + $0x68] sm:%s3035] %v3070
                %v3072 = vld [vmem:[%s3042 + $0x38] sm:%s3035]
                %3073 = vst [vmem:[%s3043 + $0x70] sm:%s3035] %v3072
                %v3074 = vld [vmem:[%s3042 + $0x3c] sm:%s3035]
                %3075 = vst [vmem:[%s3043 + $0x78] sm:%s3035] %v3074
                %v3076 = vld [vmem:[%s3042 + $0x40] sm:%s3035]
                %3077 = vst [vmem:[%s3043 + $0x80] sm:%s3035] %v3076
                %v3078 = vld [vmem:[%s3042 + $0x44] sm:%s3035]
                %3079 = vst [vmem:[%s3043 + $0x88] sm:%s3035] %v3078
                %v3080 = vld [vmem:[%s3042 + $0x48] sm:%s3035]
                %3081 = vst [vmem:[%s3043 + $0x90] sm:%s3035] %v3080
                %v3082 = vld [vmem:[%s3042 + $0x4c] sm:%s3035]
                %3083 = vst [vmem:[%s3043 + $0x98] sm:%s3035] %v3082
                %v3084 = vld [vmem:[%s3042 + $0x50] sm:%s3035]
                %3085 = vst [vmem:[%s3043 + $0xa0] sm:%s3035] %v3084
                %v3086 = vld [vmem:[%s3042 + $0x54] sm:%s3035]
                %3087 = vst [vmem:[%s3043 + $0xa8] sm:%s3035] %v3086
                %v3088 = vld [vmem:[%s3042 + $0x58] sm:%s3035]
                %3089 = vst [vmem:[%s3043 + $0xb0] sm:%s3035] %v3088
                %v3090 = vld [vmem:[%s3042 + $0x5c] sm:%s3035]
                %3091 = vst [vmem:[%s3043 + $0xb8] sm:%s3035] %v3090
                %v3092 = vld [vmem:[%s3042 + $0x60] sm:%s3035]
                %3093 = vst [vmem:[%s3043 + $0xc0] sm:%s3035] %v3092
                %v3094 = vld [vmem:[%s3042 + $0x64] sm:%s3035]
                %3095 = vst [vmem:[%s3043 + $0xc8] sm:%s3035] %v3094
                %v3096 = vld [vmem:[%s3042 + $0x68] sm:%s3035]
                %3097 = vst [vmem:[%s3043 + $0xd0] sm:%s3035] %v3096
                %v3098 = vld [vmem:[%s3042 + $0x6c] sm:%s3035]
                %3099 = vst [vmem:[%s3043 + $0xd8] sm:%s3035] %v3098
                %v3100 = vld [vmem:[%s3042 + $0x70] sm:%s3035]
                %3101 = vst [vmem:[%s3043 + $0xe0] sm:%s3035] %v3100
                %v3102 = vld [vmem:[%s3042 + $0x74] sm:%s3035]
                %3103 = vst [vmem:[%s3043 + $0xe8] sm:%s3035] %v3102
                %v3104 = vld [vmem:[%s3042 + $0x78] sm:%s3035]
                %3105 = vst [vmem:[%s3043 + $0xf0] sm:%s3035] %v3104
                %v3106 = vld [vmem:[%s3042 + $0x7c] sm:%s3035]
                %3107 = vst [vmem:[%s3043 + $0xf8] sm:%s3035] %v3106
              $region139: #{_lambda_.4} parent=133 // loop_footer
                %s3041 = sadd.s32 1, %s3037
              $region140: #{_lambda_.4} parent=133 // loop_footer_branch
                %3036 = sbr.rel target = $region136
              $region141: #{_lambda_.4} parent=133 // loop_exit
                _
            $region134: #{_lambda_.4} parent=125 // pred_fallthru
              _
          $region126: #{_lambda_.4} parent=121 // pred_fallthru
            _
          %3192 = vnop
        $region122: #{_lambda_.4} parent=109 // pred_fallthru
          _
      $region110: #{_lambda_.4} parent=5 // pred_fallthru
        _
      %p3193 = scmp.le.s32.totalorder 2, %s10
      // Predicated region
      $region160: #{_lambda_.4} parent=5 // pred_check
        %p3194 = pneg %p3193
      $region161: #{_lambda_.4} parent=5 // pred_check_branch
        %3196 = sbr.rel (%p3194) target = $region163
      $region162: #{_lambda_.4} parent=5 // pred_region
        %s3197 = ssub.s32 %s10, 2
        // Predicated region
        $region164: #{_lambda_.4} parent=162 // pred_check
          %p3198 = pneg %p159
        $region165: #{_lambda_.4} parent=162 // pred_check_branch
          %3200 = sbr.rel (%p3198) target = $region167
        $region166: #{_lambda_.4} parent=162 // pred_region
          %s3201 = sand.u32 %s144, 1
          %s3202 = sand.u32 %s144, 1
          %s3203 = smul.addr %s3202, 128
          %s3204 = scalar_lea.vmem [#allocation4], %s3203
        $region167: #{_lambda_.4} parent=162 // pred_fallthru
          _
      $region163: #{_lambda_.4} parent=5 // pred_fallthru
        _
    $region6: #{_lambda_.4} parent=1 // loop_footer
      %s14 = sadd.s32 1, %s10
    $region7: #{_lambda_.4} parent=1 // loop_footer_branch
      %9 = sbr.rel target = $region3
    $region8: #{_lambda_.4} parent=1 // loop_exit
      _

</llo_original>
